<compile_context>
chip_gen: v7x
topology: tpu7x:2x2x1
jax: 0.10.0
libtpu: 0.0.40
codegen_flags: <defaults>
</compile_context>

<pallas_src>
import functools

import jax
import jax.numpy as jnp
import numpy as np
from jax import lax
from jax.experimental import pallas as pl
from jax.experimental.pallas import tpu as pltpu

EPS = 1e-5

# 3x3 conv tap offsets, tap index t = (dy+1)*3 + (dx+1)
_TAPS = [(dy, dx) for dy in (-1, 0, 1) for dx in (-1, 0, 1)]


# ------------------------------------------------------------------ fused kernel
def _db_head_kernel(xp_ref, xm_ref, xn_ref,
                    w1_ref, s1_ref, t1_ref,
                    w2_ref, s2_ref, t2_ref,
                    w3_ref, b3_ref,
                    o_ref, win_ref,
                    *, H, Wp, th, halo):
    # xp/xm/xn : (1, tile_rows, Cin)  previous / current / next row-tile (clamped at edges)
    # w1_ref   : (9, Cin, Cmid)       conv1 weight per tap
    # s1/t1    : (1, Cmid)            folded BN1 scale / shift (conv1 bias folded in)
    # w2_ref   : (Cmid, 4*Cmid)       deconv1 weight, columns (2a+b)*Cmid + cout
    # s2/t2    : (1, 4*Cmid)          folded BN2 scale / shift (bias folded), tiled over (a,b)
    # w3_ref   : (4*Cmid, 16)         block-diag deconv2 weight, columns (2a+p)*4 + (2b+q)
    # b3_ref   : (1, 16)              deconv2 bias broadcast to the 16 fine pixels
    # o_ref    : (1, tile_rows, 16)   16 = the 4x4 fine output pixels of each coarse pixel
    # win_ref  : VMEM (tile_rows + 2*halo, Cin) halo-extended input window
    i = pl.program_id(1)
    tile_rows = th * Wp
    Cmid = w1_ref.shape[2]

    # ---- assemble halo-extended window in VMEM (aligned static stores only) --------
    win_ref[pl.ds(0, halo), :] = xp_ref[0, pl.ds(tile_rows - halo, halo), :]
    win_ref[pl.ds(halo, tile_rows), :] = xm_ref[0]
    win_ref[pl.ds(halo + tile_rows, halo), :] = xn_ref[0, pl.ds(0, halo), :]

    # ---- stage 1: 3x3 conv (9 MXU taps) + folded BN1/bias1 + ReLU -------------------
    # Horizontal zero padding is free (each image row carries one zero pad column);
    # only the top / bottom image rows need masking of the dy=-1 / dy=+1 taps.
    g = i * tile_rows + lax.broadcasted_iota(jnp.int32, (tile_rows, 1), 0)
    m_top = (g >= Wp).astype(jnp.float32)               # pixel row h >= 1
    m_bot = (g < (H - 1) * Wp).astype(jnp.float32)      # pixel row h <= H-2

    acc_mid = jnp.zeros((tile_rows, Cmid), jnp.float32)
    acc_top = jnp.zeros((tile_rows, Cmid), jnp.float32)
    acc_bot = jnp.zeros((tile_rows, Cmid), jnp.float32)
    for t, (dy, dx) in enumerate(_TAPS):
        xt = win_ref[pl.ds(halo + dy * Wp + dx, tile_rows), :]
        c = jnp.dot(xt, w1_ref[t], preferred_element_type=jnp.float32)
        if dy == -1:
            acc_top = acc_top + c
        elif dy == 1:
            acc_bot = acc_bot + c
        else:
            acc_mid = acc_mid + c
    acc = acc_mid + m_top * acc_top + m_bot * acc_bot
    y1 = jnp.maximum(acc * s1_ref[...] + t1_ref[...], 0.0)          # (rows, Cmid)

    # ---- stage 2: deconv 2x2 s2 + folded BN2/bias2 + ReLU (unshuffled layout) -------
    y2 = jnp.dot(y1, w2_ref[...], preferred_element_type=jnp.float32)
    y2 = jnp.maximum(y2 * s2_ref[...] + t2_ref[...], 0.0)           # (rows, 4*Cmid)

    # ---- stage 3: deconv 2x2 s2 -> 1 channel + sigmoid (block-diag weight) ----------
    z = jnp.dot(y2, w3_ref[...], preferred_element_type=jnp.float32) + b3_ref[...]
    o_ref[0] = 1.0 / (1.0 + jnp.exp(-z))                            # sigmoid, (rows, 16)


# ------------------------------------------------------------------ param folding
def _fold_bn(gamma, beta, mean, var, bias):
    scale = gamma / jnp.sqrt(var + EPS)
    shift = beta - mean * scale + bias * scale      # conv bias folded into BN shift
    return scale, shift


def _prepare_params(p):
    Cmid, Cin = p["w1"].shape[0], p["w1"].shape[1]
    # conv1: (Cmid, Cin, 3, 3) -> (ky, kx, cin, cmid) -> (9, Cin, Cmid)
    w1 = jnp.transpose(p["w1"], (2, 3, 1, 0)).reshape(9, Cin, Cmid).astype(jnp.float32)
    s1, t1 = _fold_bn(p["bn1_gamma"], p["bn1_beta"], p["bn1_mean"], p["bn1_var"], p["b1"])
    # deconv1: (Cmid_in, Cmid_out, 2, 2) -> (cin, a, b, cout) -> (Cmid, 4*Cmid)
    w2 = jnp.transpose(p["w2"], (0, 2, 3, 1)).reshape(Cmid, 4 * Cmid).astype(jnp.float32)
    s2, t2 = _fold_bn(p["bn2_gamma"], p["bn2_beta"], p["bn2_mean"], p["bn2_var"], p["b2"])
    s2 = jnp.tile(s2, 4)
    t2 = jnp.tile(t2, 4)
    # deconv2 folded with the stage-2 pixel shuffle: block-diagonal (4*Cmid, 16) weight
    # so column (2a+p)*4 + (2b+q) of the result is the final pixel (4y+2a+p, 4x+2b+q).
    w3 = jnp.transpose(p["w3"], (0, 2, 3, 1)).reshape(Cmid, 4)       # [cin, p*2+q]
    w3big = jnp.zeros((4 * Cmid, 16), jnp.float32)
    for a in range(2):
        for b in range(2):
            blk = (2 * a + b) * Cmid
            for pp in range(2):
                for qq in range(2):
                    col = (2 * a + pp) * 4 + (2 * b + qq)
                    w3big = w3big.at[blk:blk + Cmid, col].set(w3[:, 2 * pp + qq])
    b3 = jnp.full((1, 16), p["b3"][0], jnp.float32)
    return dict(w1=w1, s1=s1[None, :], t1=t1[None, :],
                w2=w2, s2=s2[None, :], t2=t2[None, :], w3=w3big, b3=b3)


# ------------------------------------------------------------------ forward wrapper
def db_head_forward(x_nchw, params, *, tile_h=8, vmem_limit_bytes=32 * 1024 * 1024):
    """Forward pass of Head.  Input/output are NCHW, like the PyTorch module."""
    q = _prepare_params(params)
    x = jnp.transpose(x_nchw, (0, 2, 3, 1)).astype(jnp.float32)      # NCHW -> NHWC
    N, H, W, Cin = x.shape
    Cmid = params["w1"].shape[0]

    tile_h = min(tile_h, H)
    Wp = W + 1                                   # one zero pad column per image row
    tile_rows = tile_h * Wp
    assert H % tile_h == 0 and tile_h >= 2, (H, tile_h)
    assert tile_rows % 8 == 0, (tile_h, Wp)
    n_tiles = H // tile_h
    halo = ((Wp + 1 + 7) // 8) * 8               # >= Wp+1 rows, multiple of 8
    assert halo <= tile_rows, (halo, tile_rows)

    # Flattened-pixel layout with a zero column after each image row -> horizontal
    # conv zero-padding is free inside the kernel (pad fuses into the NCHW transpose).
    xpad = jnp.pad(x, ((0, 0), (0, 0), (0, 1), (0, 0)))
    x2 = xpad.reshape(N, H * Wp, Cin)

    kernel = functools.partial(_db_head_kernel, H=H, Wp=Wp, th=tile_h, halo=halo)

    out = pl.pallas_call(
        kernel,
        out_shape=jax.ShapeDtypeStruct((N, H * Wp, 16), jnp.float32),
        grid_spec=pltpu.PrefetchScalarGridSpec(
            num_scalar_prefetch=0,
            grid=(N, n_tiles),
            in_specs=[
                pl.BlockSpec((1, tile_rows, Cin),
                             lambda n, i: (n, jnp.maximum(i - 1, 0), 0)),
                pl.BlockSpec((1, tile_rows, Cin), lambda n, i: (n, i, 0)),
                pl.BlockSpec((1, tile_rows, Cin),
                             lambda n, i: (n, jnp.minimum(i + 1, n_tiles - 1), 0)),
                pl.BlockSpec((9, Cin, Cmid), lambda n, i: (0, 0, 0)),
                pl.BlockSpec((1, Cmid), lambda n, i: (0, 0)),
                pl.BlockSpec((1, Cmid), lambda n, i: (0, 0)),
                pl.BlockSpec((Cmid, 4 * Cmid), lambda n, i: (0, 0)),
                pl.BlockSpec((1, 4 * Cmid), lambda n, i: (0, 0)),
                pl.BlockSpec((1, 4 * Cmid), lambda n, i: (0, 0)),
                pl.BlockSpec((4 * Cmid, 16), lambda n, i: (0, 0)),
                pl.BlockSpec((1, 16), lambda n, i: (0, 0)),
            ],
            out_specs=pl.BlockSpec((1, tile_rows, 16), lambda n, i: (n, i, 0)),
            scratch_shapes=[pltpu.VMEM((tile_rows + 2 * halo, Cin), jnp.float32)],
        ),
        compiler_params=pltpu.CompilerParams(
            dimension_semantics=("parallel", "parallel"),
            vmem_limit_bytes=vmem_limit_bytes,
        ),
    )(x2, x2, x2, q["w1"], q["s1"], q["t1"], q["w2"], q["s2"], q["t2"], q["w3"], q["b3"])

    # Final 4x depth-to-space: column (2a+p)*4+(2b+q) of coarse pixel (y, x) is the
    # output pixel (4y+2a+p, 4x+2b+q).  Pure layout pass on the tiny 1-channel result.
    # TODO(synk): fold this interleave into the kernel store (needs a sublane->lane
    # relayout of the (rows, 16) tile); left to XLA to keep the kernel lowering robust.
    out = out.reshape(N, H, Wp, 4, 4)[:, :, :W]                     # drop pad column
    out = jnp.transpose(out, (0, 1, 3, 2, 4)).reshape(N, 4 * H, 4 * W)
    return out[:, None, :, :]                                       # NCHW (N, 1, 4H, 4W)


# ------------------------------------------------------------------ reference
def db_head_reference(x_nchw, p):
    dn = ("NCHW", "OIHW", "NCHW")

    def bn(y, g, b, m, v):
        return (y - m[None, :, None, None]) / jnp.sqrt(v + EPS)[None, :, None, None] \
               * g[None, :, None, None] + b[None, :, None, None]

    y = lax.conv_general_dilated(x_nchw, p["w1"], (1, 1), [(1, 1), (1, 1)],
                                 dimension_numbers=dn)
    y = y + p["b1"][None, :, None, None]
    y = jnp.maximum(bn(y, p["bn1_gamma"], p["bn1_beta"], p["bn1_mean"], p["bn1_var"]), 0.0)

    # conv_transpose(k=2,s=2) == lhs-dilated conv with spatially-flipped, transposed weight
    w2c = jnp.transpose(p["w2"][:, :, ::-1, ::-1], (1, 0, 2, 3))
    y = lax.conv_general_dilated(y, w2c, (1, 1), [(1, 1), (1, 1)],
                                 lhs_dilation=(2, 2), dimension_numbers=dn)
    y = y + p["b2"][None, :, None, None]
    y = jnp.maximum(bn(y, p["bn2_gamma"], p["bn2_beta"], p["bn2_mean"], p["bn2_var"]), 0.0)

    w3c = jnp.transpose(p["w3"][:, :, ::-1, ::-1], (1, 0, 2, 3))
    y = lax.conv_general_dilated(y, w3c, (1, 1), [(1, 1), (1, 1)],
                                 lhs_dilation=(2, 2), dimension_numbers=dn)
    y = y + p["b3"][None, :, None, None]
    return jax.nn.sigmoid(y)


# ------------------------------------------------------------------ params
def init_params(key, in_channels):
    cmid = in_channels // 4
    k = jax.random.split(key, 8)
    fan_out1 = cmid * 3 * 3
    w1 = jax.random.normal(k[0], (cmid, in_channels, 3, 3), jnp.float32) * np.sqrt(2.0 / fan_out1)
    b1 = jnp.zeros((cmid,), jnp.float32)                             # nn.init.zeros_
    w2 = jax.random.normal(k[1], (cmid, cmid, 2, 2), jnp.float32) * 0.2
    b2 = jax.random.uniform(k[2], (cmid,), jnp.float32, -0.1, 0.1)
    w3 = jax.random.normal(k[3], (cmid, 1, 2, 2), jnp.float32) * 0.2
    b3 = jax.random.uniform(k[4], (1,), jnp.float32, -0.1, 0.1)
    return dict(
        w1=w1, b1=b1, w2=w2, b2=b2, w3=w3, b3=b3,
        bn1_gamma=jnp.ones((cmid,), jnp.float32), bn1_beta=jnp.zeros((cmid,), jnp.float32),
        bn1_mean=jnp.zeros((cmid,), jnp.float32), bn1_var=jnp.ones((cmid,), jnp.float32),
        bn2_gamma=jnp.ones((cmid,), jnp.float32), bn2_beta=jnp.zeros((cmid,), jnp.float32),
        bn2_mean=jnp.zeros((cmid,), jnp.float32), bn2_var=jnp.ones((cmid,), jnp.float32),
    )
    # TODO(synk): BatchNorm is evaluated in inference mode (running stats); training-mode
    # batch statistics are not reproduced.


# ------------------------------------------------------------------ main
if __name__ == "__main__":
    key = jax.random.PRNGKey(0)
    N, C, H, W = 2, 16, 16, 16                     # in_channels=16 -> mid=4
    kx, kp = jax.random.split(key)
    x = jax.random.normal(kx, (N, C, H, W), jnp.float32)
    params = init_params(kp, C)

    fwd = jax.jit(db_head_forward)
    out = jax.block_until_ready(fwd(x, params))
    ref = jax.block_until_ready(db_head_reference(x, params))

    assert out.shape == (N, 1, 4 * H, 4 * W), out.shape
    np.testing.assert_allclose(np.asarray(out), np.asarray(ref), rtol=2e-4, atol=2e-4)
    print("KERNEL_OK")
</pallas_src>

<mosaic_0001>
module attributes {stable_mosaic.version = 11 : i64} {
  func.func @_db_head_kernel(%arg0: i32, %arg1: i32, %arg2: memref<1x136x16xf32, #tpu.memory_space<vmem>>, %arg3: memref<1x136x16xf32, #tpu.memory_space<vmem>>, %arg4: memref<1x136x16xf32, #tpu.memory_space<vmem>>, %arg5: memref<9x16x4xf32, #tpu.memory_space<vmem>>, %arg6: memref<1x4xf32, #tpu.memory_space<vmem>>, %arg7: memref<1x4xf32, #tpu.memory_space<vmem>>, %arg8: memref<4x16xf32, #tpu.memory_space<vmem>>, %arg9: memref<1x16xf32, #tpu.memory_space<vmem>>, %arg10: memref<1x16xf32, #tpu.memory_space<vmem>>, %arg11: memref<16x16xf32, #tpu.memory_space<vmem>>, %arg12: memref<1x16xf32, #tpu.memory_space<vmem>>, %arg13: memref<1x136x16xf32, #tpu.memory_space<vmem>>, %arg14: memref<184x16xf32, #tpu.memory_space<vmem>>) attributes {dimension_semantics = [#tpu.dimension_semantics<parallel>, #tpu.dimension_semantics<parallel>], iteration_bounds = array<i64: 2, 2>, scalar_prefetch = 0 : i64, scratch_operands = 1 : i64, tpu.core_type = #tpu.core_type<tc>, window_params = [{transform_indices = @transform_0, window_bounds = array<i64: 1, 136, 16>}, {transform_indices = @transform_1, window_bounds = array<i64: 1, 136, 16>}, {transform_indices = @transform_2, window_bounds = array<i64: 1, 136, 16>}, {pipeline_mode = #tpu.pipeline_mode<synchronous>, transform_indices = @transform_3, window_bounds = array<i64: 9, 16, 4>}, {pipeline_mode = #tpu.pipeline_mode<synchronous>, transform_indices = @transform_4, window_bounds = array<i64: 1, 4>}, {pipeline_mode = #tpu.pipeline_mode<synchronous>, transform_indices = @transform_5, window_bounds = array<i64: 1, 4>}, {pipeline_mode = #tpu.pipeline_mode<synchronous>, transform_indices = @transform_6, window_bounds = array<i64: 4, 16>}, {pipeline_mode = #tpu.pipeline_mode<synchronous>, transform_indices = @transform_7, window_bounds = array<i64: 1, 16>}, {pipeline_mode = #tpu.pipeline_mode<synchronous>, transform_indices = @transform_8, window_bounds = array<i64: 1, 16>}, {pipeline_mode = #tpu.pipeline_mode<synchronous>, transform_indices = @transform_9, window_bounds = array<i64: 16, 16>}, {pipeline_mode = #tpu.pipeline_mode<synchronous>, transform_indices = @transform_10, window_bounds = array<i64: 1, 16>}, {transform_indices = @transform_11, window_bounds = array<i64: 1, 136, 16>}]} {
    %c0 = arith.constant 0 : index
    %c112 = arith.constant 112 : index
    %c0_0 = arith.constant 0 : index
    %0 = vector.load %arg2[%c0, %c112, %c0_0] : memref<1x136x16xf32, #tpu.memory_space<vmem>>, vector<1x24x16xf32>
    %1 = vector.shape_cast %0 : vector<1x24x16xf32> to vector<24x16xf32>
    %c0_1 = arith.constant 0 : index
    %c0_2 = arith.constant 0 : index
    %2 = vector.load %arg14[%c0_1, %c0_2] : memref<184x16xf32, #tpu.memory_space<vmem>>, vector<24x16xf32>
    tpu.vector_store %arg14[%c0_1, %c0_2], %1 {strides = array<i32>} : memref<184x16xf32, #tpu.memory_space<vmem>>, vector<24x16xf32>,
    %c0_3 = arith.constant 0 : index
    %c0_4 = arith.constant 0 : index
    %c0_5 = arith.constant 0 : index
    %3 = vector.load %arg3[%c0_3, %c0_4, %c0_5] : memref<1x136x16xf32, #tpu.memory_space<vmem>>, vector<1x136x16xf32>
    %4 = vector.shape_cast %3 : vector<1x136x16xf32> to vector<136x16xf32>
    %c24 = arith.constant 24 : index
    %c0_6 = arith.constant 0 : index
    %5 = vector.load %arg14[%c24, %c0_6] : memref<184x16xf32, #tpu.memory_space<vmem>>, vector<136x16xf32>
    tpu.vector_store %arg14[%c24, %c0_6], %4 {strides = array<i32>} : memref<184x16xf32, #tpu.memory_space<vmem>>, vector<136x16xf32>,
    %c0_7 = arith.constant 0 : index
    %c0_8 = arith.constant 0 : index
    %c0_9 = arith.constant 0 : index
    %6 = vector.load %arg4[%c0_7, %c0_8, %c0_9] : memref<1x136x16xf32, #tpu.memory_space<vmem>>, vector<1x24x16xf32>
    %7 = vector.shape_cast %6 : vector<1x24x16xf32> to vector<24x16xf32>
    %c160 = arith.constant 160 : index
    %c0_10 = arith.constant 0 : index
    %8 = vector.load %arg14[%c160, %c0_10] : memref<184x16xf32, #tpu.memory_space<vmem>>, vector<24x16xf32>
    tpu.vector_store %arg14[%c160, %c0_10], %7 {strides = array<i32>} : memref<184x16xf32, #tpu.memory_space<vmem>>, vector<24x16xf32>,
    %c136_i32 = arith.constant 136 : i32
    %9 = arith.muli %arg1, %c136_i32 : i32
    %10 = tpu.iota {dimensions = array<i32: 0>} : vector<136x1xi32>
    %11 = vector.broadcast %9 : i32 to vector<136x1xi32>
    %12 = arith.addi %11, %10 : vector<136x1xi32>
    %c17_i32 = arith.constant 17 : i32
    %13 = vector.broadcast %c17_i32 : i32 to vector<136x1xi32>
    %14 = arith.cmpi sge, %12, %13 : vector<136x1xi32>
    %15 = arith.extui %14 : vector<136x1xi1> to vector<136x1xi32>
    %16 = arith.sitofp %15 : vector<136x1xi32> to vector<136x1xf32>
    %c255_i32 = arith.constant 255 : i32
    %17 = vector.broadcast %c255_i32 : i32 to vector<136x1xi32>
    %18 = arith.cmpi slt, %12, %17 : vector<136x1xi32>
    %19 = arith.extui %18 : vector<136x1xi1> to vector<136x1xi32>
    %20 = arith.sitofp %19 : vector<136x1xi32> to vector<136x1xf32>
    %cst = arith.constant 0.000000e+00 : f32
    %21 = vector.broadcast %cst : f32 to vector<136x4xf32>
    %cst_11 = arith.constant 0.000000e+00 : f32
    %22 = vector.broadcast %cst_11 : f32 to vector<136x4xf32>
    %cst_12 = arith.constant 0.000000e+00 : f32
    %23 = vector.broadcast %cst_12 : f32 to vector<136x4xf32>
    %c6 = arith.constant 6 : index
    %c0_13 = arith.constant 0 : index
    %24 = vector.load %arg14[%c6, %c0_13] : memref<184x16xf32, #tpu.memory_space<vmem>>, vector<136x16xf32>
    %c0_14 = arith.constant 0 : index
    %c0_15 = arith.constant 0 : index
    %c0_16 = arith.constant 0 : index
    %25 = vector.load %arg5[%c0_14, %c0_15, %c0_16] : memref<9x16x4xf32, #tpu.memory_space<vmem>>, vector<1x16x4xf32>
    %26 = vector.shape_cast %25 : vector<1x16x4xf32> to vector<16x4xf32>
    %cst_17 = arith.constant dense<0.000000e+00> : vector<136x4xf32>
    %27 = tpu.matmul %24, %26, %cst_17 {dimension_numbers = #tpu.dot_dimension_numbers<[1], [0], [0], [1], [0, 0, 1, 1], [], []>} : vector<136x16xf32>, vector<16x4xf32>, vector<136x4xf32> -> vector<136x4xf32>
    %28 = arith.addf %22, %27 : vector<136x4xf32>
    %c7 = arith.constant 7 : index
    %c0_18 = arith.constant 0 : index
    %29 = vector.load %arg14[%c7, %c0_18] : memref<184x16xf32, #tpu.memory_space<vmem>>, vector<136x16xf32>
    %c1 = arith.constant 1 : index
    %c0_19 = arith.constant 0 : index
    %c0_20 = arith.constant 0 : index
    %30 = vector.load %arg5[%c1, %c0_19, %c0_20] : memref<9x16x4xf32, #tpu.memory_space<vmem>>, vector<1x16x4xf32>
    %31 = vector.shape_cast %30 : vector<1x16x4xf32> to vector<16x4xf32>
    %cst_21 = arith.constant dense<0.000000e+00> : vector<136x4xf32>
    %32 = tpu.matmul %29, %31, %cst_21 {dimension_numbers = #tpu.dot_dimension_numbers<[1], [0], [0], [1], [0, 0, 1, 1], [], []>} : vector<136x16xf32>, vector<16x4xf32>, vector<136x4xf32> -> vector<136x4xf32>
    %33 = arith.addf %28, %32 : vector<136x4xf32>
    %c8 = arith.constant 8 : index
    %c0_22 = arith.constant 0 : index
    %34 = vector.load %arg14[%c8, %c0_22] : memref<184x16xf32, #tpu.memory_space<vmem>>, vector<136x16xf32>
    %c2 = arith.constant 2 : index
    %c0_23 = arith.constant 0 : index
    %c0_24 = arith.constant 0 : index
    %35 = vector.load %arg5[%c2, %c0_23, %c0_24] : memref<9x16x4xf32, #tpu.memory_space<vmem>>, vector<1x16x4xf32>
    %36 = vector.shape_cast %35 : vector<1x16x4xf32> to vector<16x4xf32>
    %cst_25 = arith.constant dense<0.000000e+00> : vector<136x4xf32>
    %37 = tpu.matmul %34, %36, %cst_25 {dimension_numbers = #tpu.dot_dimension_numbers<[1], [0], [0], [1], [0, 0, 1, 1], [], []>} : vector<136x16xf32>, vector<16x4xf32>, vector<136x4xf32> -> vector<136x4xf32>
    %38 = arith.addf %33, %37 : vector<136x4xf32>
    %c23 = arith.constant 23 : index
    %c0_26 = arith.constant 0 : index
    %39 = vector.load %arg14[%c23, %c0_26] : memref<184x16xf32, #tpu.memory_space<vmem>>, vector<136x16xf32>
    %c3 = arith.constant 3 : index
    %c0_27 = arith.constant 0 : index
    %c0_28 = arith.constant 0 : index
    %40 = vector.load %arg5[%c3, %c0_27, %c0_28] : memref<9x16x4xf32, #tpu.memory_space<vmem>>, vector<1x16x4xf32>
    %41 = vector.shape_cast %40 : vector<1x16x4xf32> to vector<16x4xf32>
    %cst_29 = arith.constant dense<0.000000e+00> : vector<136x4xf32>
    %42 = tpu.matmul %39, %41, %cst_29 {dimension_numbers = #tpu.dot_dimension_numbers<[1], [0], [0], [1], [0, 0, 1, 1], [], []>} : vector<136x16xf32>, vector<16x4xf32>, vector<136x4xf32> -> vector<136x4xf32>
    %43 = arith.addf %21, %42 : vector<136x4xf32>
    %c24_30 = arith.constant 24 : index
    %c0_31 = arith.constant 0 : index
    %44 = vector.load %arg14[%c24_30, %c0_31] : memref<184x16xf32, #tpu.memory_space<vmem>>, vector<136x16xf32>
    %c4 = arith.constant 4 : index
    %c0_32 = arith.constant 0 : index
    %c0_33 = arith.constant 0 : index
    %45 = vector.load %arg5[%c4, %c0_32, %c0_33] : memref<9x16x4xf32, #tpu.memory_space<vmem>>, vector<1x16x4xf32>
    %46 = vector.shape_cast %45 : vector<1x16x4xf32> to vector<16x4xf32>
    %cst_34 = arith.constant dense<0.000000e+00> : vector<136x4xf32>
    %47 = tpu.matmul %44, %46, %cst_34 {dimension_numbers = #tpu.dot_dimension_numbers<[1], [0], [0], [1], [0, 0, 1, 1], [], []>} : vector<136x16xf32>, vector<16x4xf32>, vector<136x4xf32> -> vector<136x4xf32>
    %48 = arith.addf %43, %47 : vector<136x4xf32>
    %c25 = arith.constant 25 : index
    %c0_35 = arith.constant 0 : index
    %49 = vector.load %arg14[%c25, %c0_35] : memref<184x16xf32, #tpu.memory_space<vmem>>, vector<136x16xf32>
    %c5 = arith.constant 5 : index
    %c0_36 = arith.constant 0 : index
    %c0_37 = arith.constant 0 : index
    %50 = vector.load %arg5[%c5, %c0_36, %c0_37] : memref<9x16x4xf32, #tpu.memory_space<vmem>>, vector<1x16x4xf32>
    %51 = vector.shape_cast %50 : vector<1x16x4xf32> to vector<16x4xf32>
    %cst_38 = arith.constant dense<0.000000e+00> : vector<136x4xf32>
    %52 = tpu.matmul %49, %51, %cst_38 {dimension_numbers = #tpu.dot_dimension_numbers<[1], [0], [0], [1], [0, 0, 1, 1], [], []>} : vector<136x16xf32>, vector<16x4xf32>, vector<136x4xf32> -> vector<136x4xf32>
    %53 = arith.addf %48, %52 : vector<136x4xf32>
    %c40 = arith.constant 40 : index
    %c0_39 = arith.constant 0 : index
    %54 = vector.load %arg14[%c40, %c0_39] : memref<184x16xf32, #tpu.memory_space<vmem>>, vector<136x16xf32>
    %c6_40 = arith.constant 6 : index
    %c0_41 = arith.constant 0 : index
    %c0_42 = arith.constant 0 : index
    %55 = vector.load %arg5[%c6_40, %c0_41, %c0_42] : memref<9x16x4xf32, #tpu.memory_space<vmem>>, vector<1x16x4xf32>
    %56 = vector.shape_cast %55 : vector<1x16x4xf32> to vector<16x4xf32>
    %cst_43 = arith.constant dense<0.000000e+00> : vector<136x4xf32>
    %57 = tpu.matmul %54, %56, %cst_43 {dimension_numbers = #tpu.dot_dimension_numbers<[1], [0], [0], [1], [0, 0, 1, 1], [], []>} : vector<136x16xf32>, vector<16x4xf32>, vector<136x4xf32> -> vector<136x4xf32>
    %58 = arith.addf %23, %57 : vector<136x4xf32>
    %c41 = arith.constant 41 : index
    %c0_44 = arith.constant 0 : index
    %59 = vector.load %arg14[%c41, %c0_44] : memref<184x16xf32, #tpu.memory_space<vmem>>, vector<136x16xf32>
    %c7_45 = arith.constant 7 : index
    %c0_46 = arith.constant 0 : index
    %c0_47 = arith.constant 0 : index
    %60 = vector.load %arg5[%c7_45, %c0_46, %c0_47] : memref<9x16x4xf32, #tpu.memory_space<vmem>>, vector<1x16x4xf32>
    %61 = vector.shape_cast %60 : vector<1x16x4xf32> to vector<16x4xf32>
    %cst_48 = arith.constant dense<0.000000e+00> : vector<136x4xf32>
    %62 = tpu.matmul %59, %61, %cst_48 {dimension_numbers = #tpu.dot_dimension_numbers<[1], [0], [0], [1], [0, 0, 1, 1], [], []>} : vector<136x16xf32>, vector<16x4xf32>, vector<136x4xf32> -> vector<136x4xf32>
    %63 = arith.addf %58, %62 : vector<136x4xf32>
    %c42 = arith.constant 42 : index
    %c0_49 = arith.constant 0 : index
    %64 = vector.load %arg14[%c42, %c0_49] : memref<184x16xf32, #tpu.memory_space<vmem>>, vector<136x16xf32>
    %c8_50 = arith.constant 8 : index
    %c0_51 = arith.constant 0 : index
    %c0_52 = arith.constant 0 : index
    %65 = vector.load %arg5[%c8_50, %c0_51, %c0_52] : memref<9x16x4xf32, #tpu.memory_space<vmem>>, vector<1x16x4xf32>
    %66 = vector.shape_cast %65 : vector<1x16x4xf32> to vector<16x4xf32>
    %cst_53 = arith.constant dense<0.000000e+00> : vector<136x4xf32>
    %67 = tpu.matmul %64, %66, %cst_53 {dimension_numbers = #tpu.dot_dimension_numbers<[1], [0], [0], [1], [0, 0, 1, 1], [], []>} : vector<136x16xf32>, vector<16x4xf32>, vector<136x4xf32> -> vector<136x4xf32>
    %68 = arith.addf %63, %67 : vector<136x4xf32>
    %69 = vector.broadcast %16 : vector<136x1xf32> to vector<136x4xf32>
    %70 = arith.mulf %69, %38 : vector<136x4xf32>
    %71 = arith.addf %53, %70 : vector<136x4xf32>
    %72 = vector.broadcast %20 : vector<136x1xf32> to vector<136x4xf32>
    %73 = arith.mulf %72, %68 : vector<136x4xf32>
    %74 = arith.addf %71, %73 : vector<136x4xf32>
    %c0_54 = arith.constant 0 : index
    %c0_55 = arith.constant 0 : index
    %75 = vector.load %arg6[%c0_54, %c0_55] : memref<1x4xf32, #tpu.memory_space<vmem>>, vector<1x4xf32>
    %76 = vector.broadcast %75 : vector<1x4xf32> to vector<136x4xf32>
    %77 = arith.mulf %74, %76 : vector<136x4xf32>
    %c0_56 = arith.constant 0 : index
    %c0_57 = arith.constant 0 : index
    %78 = vector.load %arg7[%c0_56, %c0_57] : memref<1x4xf32, #tpu.memory_space<vmem>>, vector<1x4xf32>
    %79 = vector.broadcast %78 : vector<1x4xf32> to vector<136x4xf32>
    %80 = arith.addf %77, %79 : vector<136x4xf32>
    %cst_58 = arith.constant 0.000000e+00 : f32
    %81 = vector.broadcast %cst_58 : f32 to vector<136x4xf32>
    %82 = arith.maximumf %80, %81 : vector<136x4xf32>
    %c0_59 = arith.constant 0 : index
    %c0_60 = arith.constant 0 : index
    %83 = vector.load %arg8[%c0_59, %c0_60] : memref<4x16xf32, #tpu.memory_space<vmem>>, vector<4x16xf32>
    %cst_61 = arith.constant dense<0.000000e+00> : vector<136x16xf32>
    %84 = tpu.matmul %82, %83, %cst_61 {dimension_numbers = #tpu.dot_dimension_numbers<[1], [0], [0], [1], [0, 0, 1, 1], [], []>} : vector<136x4xf32>, vector<4x16xf32>, vector<136x16xf32> -> vector<136x16xf32>
    %c0_62 = arith.constant 0 : index
    %c0_63 = arith.constant 0 : index
    %85 = vector.load %arg9[%c0_62, %c0_63] : memref<1x16xf32, #tpu.memory_space<vmem>>, vector<1x16xf32>
    %86 = vector.broadcast %85 : vector<1x16xf32> to vector<136x16xf32>
    %87 = arith.mulf %84, %86 : vector<136x16xf32>
    %c0_64 = arith.constant 0 : index
    %c0_65 = arith.constant 0 : index
    %88 = vector.load %arg10[%c0_64, %c0_65] : memref<1x16xf32, #tpu.memory_space<vmem>>, vector<1x16xf32>
    %89 = vector.broadcast %88 : vector<1x16xf32> to vector<136x16xf32>
    %90 = arith.addf %87, %89 : vector<136x16xf32>
    %cst_66 = arith.constant 0.000000e+00 : f32
    %91 = vector.broadcast %cst_66 : f32 to vector<136x16xf32>
    %92 = arith.maximumf %90, %91 : vector<136x16xf32>
    %c0_67 = arith.constant 0 : index
    %c0_68 = arith.constant 0 : index
    %93 = vector.load %arg11[%c0_67, %c0_68] : memref<16x16xf32, #tpu.memory_space<vmem>>, vector<16x16xf32>
    %cst_69 = arith.constant dense<0.000000e+00> : vector<136x16xf32>
    %94 = tpu.matmul %92, %93, %cst_69 {dimension_numbers = #tpu.dot_dimension_numbers<[1], [0], [0], [1], [0, 0, 1, 1], [], []>} : vector<136x16xf32>, vector<16x16xf32>, vector<136x16xf32> -> vector<136x16xf32>
    %c0_70 = arith.constant 0 : index
    %c0_71 = arith.constant 0 : index
    %95 = vector.load %arg12[%c0_70, %c0_71] : memref<1x16xf32, #tpu.memory_space<vmem>>, vector<1x16xf32>
    %96 = vector.broadcast %95 : vector<1x16xf32> to vector<136x16xf32>
    %97 = arith.addf %94, %96 : vector<136x16xf32>
    %cst_72 = arith.constant 0.000000e+00 : f32
    %98 = vector.broadcast %cst_72 : f32 to vector<136x16xf32>
    %99 = arith.subf %98, %97 : vector<136x16xf32>
    %100 = math.exp %99 : vector<136x16xf32>
    %cst_73 = arith.constant 1.000000e+00 : f32
    %101 = vector.broadcast %cst_73 : f32 to vector<136x16xf32>
    %102 = arith.addf %101, %100 : vector<136x16xf32>
    %cst_74 = arith.constant 1.000000e+00 : f32
    %103 = vector.broadcast %cst_74 : f32 to vector<136x16xf32>
    %104 = arith.divf %103, %102 : vector<136x16xf32>
    %c0_75 = arith.constant 0 : index
    %c0_76 = arith.constant 0 : index
    %c0_77 = arith.constant 0 : index
    %105 = vector.load %arg13[%c0_75, %c0_76, %c0_77] : memref<1x136x16xf32, #tpu.memory_space<vmem>>, vector<1x136x16xf32>
    %106 = vector.shape_cast %105 : vector<1x136x16xf32> to vector<136x16xf32>
    %107 = vector.shape_cast %104 : vector<136x16xf32> to vector<1x136x16xf32>
    tpu.vector_store %arg13[%c0_75, %c0_76, %c0_77], %107 {strides = array<i32>} : memref<1x136x16xf32, #tpu.memory_space<vmem>>, vector<1x136x16xf32>,
    return
  }
  func.func @transform_0(%arg0: i32, %arg1: i32) -> (i32, i32, i32) {
    %c1_i32 = arith.constant 1 : i32
    %0 = arith.subi %arg1, %c1_i32 : i32
    %c0_i32 = arith.constant 0 : i32
    %1 = arith.maxsi %0, %c0_i32 : i32
    %c0_i32_0 = arith.constant 0 : i32
    %c0_i32_1 = arith.constant 0 : i32
    return %arg0, %1, %c0_i32_0 : i32, i32, i32
  }
  func.func @transform_1(%arg0: i32, %arg1: i32) -> (i32, i32, i32) {
    %c0_i32 = arith.constant 0 : i32
    %c0_i32_0 = arith.constant 0 : i32
    return %arg0, %arg1, %c0_i32 : i32, i32, i32
  }
  func.func @transform_2(%arg0: i32, %arg1: i32) -> (i32, i32, i32) {
    %c1_i32 = arith.constant 1 : i32
    %0 = arith.addi %arg1, %c1_i32 : i32
    %c1_i32_0 = arith.constant 1 : i32
    %1 = arith.minsi %0, %c1_i32_0 : i32
    %c0_i32 = arith.constant 0 : i32
    %c0_i32_1 = arith.constant 0 : i32
    return %arg0, %1, %c0_i32 : i32, i32, i32
  }
  func.func @transform_3(%arg0: i32, %arg1: i32) -> (i32, i32, i32) {
    %c0_i32 = arith.constant 0 : i32
    %c0_i32_0 = arith.constant 0 : i32
    %c0_i32_1 = arith.constant 0 : i32
    %c0_i32_2 = arith.constant 0 : i32
    return %c0_i32, %c0_i32_0, %c0_i32_1 : i32, i32, i32
  }
  func.func @transform_4(%arg0: i32, %arg1: i32) -> (i32, i32) {
    %c0_i32 = arith.constant 0 : i32
    %c0_i32_0 = arith.constant 0 : i32
    %c0_i32_1 = arith.constant 0 : i32
    return %c0_i32, %c0_i32_0 : i32, i32
  }
  func.func @transform_5(%arg0: i32, %arg1: i32) -> (i32, i32) {
    %c0_i32 = arith.constant 0 : i32
    %c0_i32_0 = arith.constant 0 : i32
    %c0_i32_1 = arith.constant 0 : i32
    return %c0_i32, %c0_i32_0 : i32, i32
  }
  func.func @transform_6(%arg0: i32, %arg1: i32) -> (i32, i32) {
    %c0_i32 = arith.constant 0 : i32
    %c0_i32_0 = arith.constant 0 : i32
    %c0_i32_1 = arith.constant 0 : i32
    return %c0_i32, %c0_i32_0 : i32, i32
  }
  func.func @transform_7(%arg0: i32, %arg1: i32) -> (i32, i32) {
    %c0_i32 = arith.constant 0 : i32
    %c0_i32_0 = arith.constant 0 : i32
    %c0_i32_1 = arith.constant 0 : i32
    return %c0_i32, %c0_i32_0 : i32, i32
  }
  func.func @transform_8(%arg0: i32, %arg1: i32) -> (i32, i32) {
    %c0_i32 = arith.constant 0 : i32
    %c0_i32_0 = arith.constant 0 : i32
    %c0_i32_1 = arith.constant 0 : i32
    return %c0_i32, %c0_i32_0 : i32, i32
  }
  func.func @transform_9(%arg0: i32, %arg1: i32) -> (i32, i32) {
    %c0_i32 = arith.constant 0 : i32
    %c0_i32_0 = arith.constant 0 : i32
    %c0_i32_1 = arith.constant 0 : i32
    return %c0_i32, %c0_i32_0 : i32, i32
  }
  func.func @transform_10(%arg0: i32, %arg1: i32) -> (i32, i32) {
    %c0_i32 = arith.constant 0 : i32
    %c0_i32_0 = arith.constant 0 : i32
    %c0_i32_1 = arith.constant 0 : i32
    return %c0_i32, %c0_i32_0 : i32, i32
  }
  func.func @transform_11(%arg0: i32, %arg1: i32) -> (i32, i32, i32) {
    %c0_i32 = arith.constant 0 : i32
    %c0_i32_0 = arith.constant 0 : i32
    return %arg0, %arg1, %c0_i32 : i32, i32, i32
  }
}

</mosaic_0001>

<llo_original>
// kernel: tile.17
$region0: #{tile.17}
  #allocation0 [shape = 's32[1]{0}', space=sflag, size = 0x4, scoped, tag = 'scoped memory for tile.17']
  %s0 = inlined_call_operand.vmem [shape: f32[4], index: 0, kind: input, shape index: {}]
  %s1 = inlined_call_operand.vmem [shape: f32[4,4], index: 1, kind: output, shape index: {}]
  // Predicated region
  $region2: #{tile.17} parent=0 // pred_check
    _
  $region3: #{tile.17} parent=0 // pred_check_branch
    %3 = sbr.rel (0) target = $region5
  $region4: #{tile.17} parent=0 // pred_region
    _
  $region5: #{tile.17} parent=0 // pred_fallthru
    _
  %v4 = vld [vmem:[%s0] ss:$0 sm:$0xff]
  %5 = vst [vmem:[%s1] sm:$0xf] %v4

// kernel: tile.19
$region0: #{tile.19}
  %s0 = inlined_call_operand.vmem [shape: f32[4,4], index: 0, kind: input, shape index: {}]
  %s1 = inlined_call_operand.vmem [shape: f32[1,16], index: 1, kind: output, shape index: {}]
  $region1: #{tile.19} parent=0
    #allocation0 [shape = 'u8[4096]{0}', space=vmem, size = 0x1000, scoped, tag = 'scoped mem for output reshape']
    #allocation1 [shape = 'u8[4096]{0}', space=vmem, size = 0x1000, scoped, tag = 'scoped mem for input reshape']
    %s3 = sshllo.u32 0, 4
    %v4 = vld [vmem:[%s0] sm:%s3]
    %5 = vst [vmem:[#allocation1] sm:%s3] %v4
    %v6 = vld [vmem:[#allocation1] sm:$0x1]
    %vm7 = vcmask 31744
    %8 = vst.msk [vmem:[#allocation0] sm:$0x1] %vm7, %v6
    %s9 = scalar_lea.vmem [#allocation1], 3
    %v10 = vld [vmem:[%s9] sm:$0x1]
    %11 = vrot.lane.b32.xlu0 %v10, 12
    %v12 = vpop.permute.xlu0 %11
    %vm13 = vcmask 130144
    %14 = vst.msk [vmem:[#allocation0] sm:$0x1] %vm13, %v12
    %s15 = scalar_lea.vmem [#allocation1], 2
    %v16 = vld [vmem:[%s15] sm:$0x1]
    %17 = vrot.lane.b32.xlu0 %v16, 8
    %v18 = vpop.permute.xlu0 %17
    %vm19 = vcmask 97344
    %20 = vst.msk [vmem:[#allocation0] sm:$0x1] %vm19, %v18
    %s21 = scalar_lea.vmem [#allocation1], 1
    %v22 = vld [vmem:[%s21] sm:$0x1]
    %23 = vrot.lane.b32.xlu0 %v22, 4
    %v24 = vpop.permute.xlu0 %23
    %vm25 = vcmask 64544
    %26 = vst.msk [vmem:[#allocation0] sm:$0x1] %vm25, %v24
    %s28 = sshllo.u32 0, 1
    %v30 = vld [vmem:[#allocation0] sm:%s28]
    %s31 = sshllo.u32 0, 1
    %32 = vst [vmem:[%s1] sm:%s31] %v30

// kernel: db_head_forward.1
$region0: #{db_head_forward.1}
  #allocation0 [shape = 'u32[]', space=smem, size = 0x4, offset = 0x4, fixed_abs, tag = 'smem constant byte address 0x4 - core index']
  #allocation1 [shape = 'u32[144,128]{1,0:T(1,128)}', space=vmem, size = 0x12000, scoped, tag = 'internal scratch']
  #allocation2 [shape = 'f32[184,16]{1,0:T(8,128)}', space=vmem, size = 0x17000, scoped, tag = 'scratch operand']
  %s0 = inlined_call_operand.vmem [shape: f32[2,272,16], index: 0, kind: input, shape index: {}, may-alias: {0,1,2}]
  %s1 = inlined_call_operand.vmem [shape: f32[2,272,16], index: 1, kind: input, shape index: {}, may-alias: {0,1,2}]
  %s2 = inlined_call_operand.vmem [shape: f32[2,272,16], index: 2, kind: input, shape index: {}, may-alias: {0,1,2}]
  %s3 = inlined_call_operand.vmem [shape: f32[9,16,4], index: 3, kind: input, shape index: {}]
  %s4 = inlined_call_operand.vmem [shape: f32[1,4], index: 4, kind: input, shape index: {}]
  %s5 = inlined_call_operand.vmem [shape: f32[1,4], index: 5, kind: input, shape index: {}]
  %s6 = inlined_call_operand.vmem [shape: f32[4,16], index: 6, kind: input, shape index: {}]
  %s7 = inlined_call_operand.vmem [shape: f32[1,16], index: 7, kind: input, shape index: {}]
  %s8 = inlined_call_operand.vmem [shape: f32[1,16], index: 8, kind: input, shape index: {}]
  %s9 = inlined_call_operand.vmem [shape: f32[16,16], index: 9, kind: input, shape index: {}]
  %s10 = inlined_call_operand.vmem [shape: f32[1,16], index: 10, kind: input, shape index: {}]
  %s11 = inlined_call_operand.vmem [shape: f32[2,272,16], index: 11, kind: output, shape index: {}]
  %s12 = sld [smem:[#allocation0]]
  $region77: #{db_head_forward.1} parent=0
    _
  %s14 = ssub.s32 1, %s12
  %s15 = scalar_select 0, %s14, %s12
  loop: start=0, step=1, limit=6
  $region2: #{db_head_forward.1} parent=0 // loop_pre_header
    _
  $region3: #{db_head_forward.1} parent=0 // loop_header
    %s17 = sphi 0, %s21
    %p18 = scmp.ge.s32.totalorder %s17, 6
    %s24 = sphi 0, %s36
    %s25 = sphi 0, %s32
    %s26 = sphi 0, %s24
    %s27 = sphi 0, %s25
    %s28 = sphi 0, %s26
    %s29 = sphi 0, %s27
    %s47 = sphi 0, %s49
    %s50 = sphi 0, %s47
    %s51 = sphi 0, %s50
    %s67 = sphi 0, %s51
    %s75 = sphi 0, %s77
    %s78 = sphi 0, %s75
    %s79 = sphi 0, %s78
    %s95 = sphi 0, %s79
    %s109 = sphi 0, %s111
    %s112 = sphi 0, %s109
    %s113 = sphi 0, %s112
    %s129 = sphi 0, %s113
    %s133 = sphi 0, %s133
    %s135 = sphi 0, %s133
    %s136 = sphi 0, %s135
    %s150 = sphi 0, %s136
    %s154 = sphi 0, %s154
    %s156 = sphi 0, %s154
    %s157 = sphi 0, %s156
    %s171 = sphi 0, %s157
    %s175 = sphi 0, %s175
    %s177 = sphi 0, %s175
    %s178 = sphi 0, %s177
    %s192 = sphi 0, %s178
    %s196 = sphi 0, %s196
    %s198 = sphi 0, %s196
    %s199 = sphi 0, %s198
    %s213 = sphi 0, %s199
    %s217 = sphi 0, %s217
    %s219 = sphi 0, %s217
    %s220 = sphi 0, %s219
    %s234 = sphi 0, %s220
    %s238 = sphi 0, %s238
    %s240 = sphi 0, %s238
    %s241 = sphi 0, %s240
    %s255 = sphi 0, %s241
    %s259 = sphi 0, %s259
    %s261 = sphi 0, %s259
    %s262 = sphi 0, %s261
    %s276 = sphi 0, %s262
    %s280 = sphi 0, %s280
    %s282 = sphi 0, %s280
    %s283 = sphi 0, %s282
    %s297 = sphi 0, %s283
    %s305 = sphi 0, %s307
    %s308 = sphi 0, %s305
    %s309 = sphi 0, %s308
    %s325 = sphi 0, %s309
  $region4: #{db_head_forward.1} parent=0 // loop_header_branch
    %20 = sbr.rel (%p18) target = $region8
  $region5: #{db_head_forward.1} parent=0 // loop_body
    %s22 = ssub.s32 %s17, 1
    %s23 = ssub.s32 %s17, 2
    %s30 = sadd.s32 1, %s25
    %p31 = scmp.ge.s32.totalorder %s30, 2
    %s32 = scalar_select %p31, 0, %s30
    %s33 = sadd.s32 1, %s24
    %s34 = scalar_select %p31, %s33, %s24
    %p35 = scmp.ge.s32.totalorder %s34, 2
    %s36 = scalar_select %p35, 0, %s34
    %s37 = ssub.s32 %s25, 1
    %p38 = scmp.gt.s32.totalorder %s37, 0
    %s39 = scalar_select %p38, %s37, 0
    %s40 = ssub.s32 %s32, 1
    %p41 = scmp.gt.s32.totalorder %s40, 0
    %s42 = scalar_select %p41, %s40, 0
    %s43 = ssub.s32 %s24, %s36
    %s44 = ssub.s32 %s39, %s42
    %s45 = sor.u32 %s43, %s44
    %p46 = scmp.eq.s32.totalorder %s45, 0
    %s48 = sadd.s32 %s47, 1
    %s49 = scalar_select %p46, %s47, %s48
    %p52 = pneg %p46
    %p53 = scmp.eq.s32.totalorder %s17, 3
    %p54 = por %p52, %p53
    %p55 = scmp.ne.s32.totalorder %s47, %s50
    %p56 = scmp.eq.s32.totalorder %s17, 0
    %p57 = por %p55, %p56
    %p58 = scmp.ne.s32.totalorder %s47, %s50
    %p59 = scmp.eq.s32.totalorder %s22, 3
    %p60 = por %p58, %p59
    %p61 = scmp.ne.s32.totalorder %s50, %s51
    %p62 = scmp.eq.s32.totalorder %s22, 0
    %p63 = por %p61, %p62
    %p64 = scmp.ne.s32.totalorder %s50, %s51
    %p65 = scmp.eq.s32.totalorder %s23, 3
    %p66 = por %p64, %p65
    %p68 = scmp.ne.s32.totalorder %s51, %s67
    %p69 = scmp.eq.s32.totalorder %s23, 0
    %p70 = por %p68, %p69
    %s71 = ssub.s32 %s24, %s36
    %s72 = ssub.s32 %s25, %s32
    %s73 = sor.u32 %s71, %s72
    %p74 = scmp.eq.s32.totalorder %s73, 0
    %s76 = sadd.s32 %s75, 1
    %s77 = scalar_select %p74, %s75, %s76
    %p80 = pneg %p74
    %p81 = scmp.eq.s32.totalorder %s17, 3
    %p82 = por %p80, %p81
    %p83 = scmp.ne.s32.totalorder %s75, %s78
    %p84 = scmp.eq.s32.totalorder %s17, 0
    %p85 = por %p83, %p84
    %p86 = scmp.ne.s32.totalorder %s75, %s78
    %p87 = scmp.eq.s32.totalorder %s22, 3
    %p88 = por %p86, %p87
    %p89 = scmp.ne.s32.totalorder %s78, %s79
    %p90 = scmp.eq.s32.totalorder %s22, 0
    %p91 = por %p89, %p90
    %p92 = scmp.ne.s32.totalorder %s78, %s79
    %p93 = scmp.eq.s32.totalorder %s23, 3
    %p94 = por %p92, %p93
    %p96 = scmp.ne.s32.totalorder %s79, %s95
    %p97 = scmp.eq.s32.totalorder %s23, 0
    %p98 = por %p96, %p97
    %s99 = sadd.s32 %s25, 1
    %p100 = scmp.lt.s32.totalorder %s99, 1
    %s101 = scalar_select %p100, %s99, 1
    %s102 = sadd.s32 %s32, 1
    %p103 = scmp.lt.s32.totalorder %s102, 1
    %s104 = scalar_select %p103, %s102, 1
    %s105 = ssub.s32 %s24, %s36
    %s106 = ssub.s32 %s101, %s104
    %s107 = sor.u32 %s105, %s106
    %p108 = scmp.eq.s32.totalorder %s107, 0
    %s110 = sadd.s32 %s109, 1
    %s111 = scalar_select %p108, %s109, %s110
    %p114 = pneg %p108
    %p115 = scmp.eq.s32.totalorder %s17, 3
    %p116 = por %p114, %p115
    %p117 = scmp.ne.s32.totalorder %s109, %s112
    %p118 = scmp.eq.s32.totalorder %s17, 0
    %p119 = por %p117, %p118
    %p120 = scmp.ne.s32.totalorder %s109, %s112
    %p121 = scmp.eq.s32.totalorder %s22, 3
    %p122 = por %p120, %p121
    %p123 = scmp.ne.s32.totalorder %s112, %s113
    %p124 = scmp.eq.s32.totalorder %s22, 0
    %p125 = por %p123, %p124
    %p126 = scmp.ne.s32.totalorder %s112, %s113
    %p127 = scmp.eq.s32.totalorder %s23, 3
    %p128 = por %p126, %p127
    %p130 = scmp.ne.s32.totalorder %s113, %s129
    %p131 = scmp.eq.s32.totalorder %s23, 0
    %p132 = por %p130, %p131
    %s134 = sadd.s32 %s133, 1
    %p137 = scmp.eq.s32.totalorder %s17, 3
    %p138 = scmp.ne.s32.totalorder %s133, %s135
    %p139 = scmp.eq.s32.totalorder %s17, 0
    %p140 = por %p138, %p139
    %p141 = scmp.ne.s32.totalorder %s133, %s135
    %p142 = scmp.eq.s32.totalorder %s22, 3
    %p143 = por %p141, %p142
    %p144 = scmp.ne.s32.totalorder %s135, %s136
    %p145 = scmp.eq.s32.totalorder %s22, 0
    %p146 = por %p144, %p145
    %p147 = scmp.ne.s32.totalorder %s135, %s136
    %p148 = scmp.eq.s32.totalorder %s23, 3
    %p149 = por %p147, %p148
    %p151 = scmp.ne.s32.totalorder %s136, %s150
    %p152 = scmp.eq.s32.totalorder %s23, 0
    %p153 = por %p151, %p152
    %s155 = sadd.s32 %s154, 1
    %p158 = scmp.eq.s32.totalorder %s17, 3
    %p159 = scmp.ne.s32.totalorder %s154, %s156
    %p160 = scmp.eq.s32.totalorder %s17, 0
    %p161 = por %p159, %p160
    %p162 = scmp.ne.s32.totalorder %s154, %s156
    %p163 = scmp.eq.s32.totalorder %s22, 3
    %p164 = por %p162, %p163
    %p165 = scmp.ne.s32.totalorder %s156, %s157
    %p166 = scmp.eq.s32.totalorder %s22, 0
    %p167 = por %p165, %p166
    %p168 = scmp.ne.s32.totalorder %s156, %s157
    %p169 = scmp.eq.s32.totalorder %s23, 3
    %p170 = por %p168, %p169
    %p172 = scmp.ne.s32.totalorder %s157, %s171
    %p173 = scmp.eq.s32.totalorder %s23, 0
    %p174 = por %p172, %p173
    %s176 = sadd.s32 %s175, 1
    %p179 = scmp.eq.s32.totalorder %s17, 3
    %p180 = scmp.ne.s32.totalorder %s175, %s177
    %p181 = scmp.eq.s32.totalorder %s17, 0
    %p182 = por %p180, %p181
    %p183 = scmp.ne.s32.totalorder %s175, %s177
    %p184 = scmp.eq.s32.totalorder %s22, 3
    %p185 = por %p183, %p184
    %p186 = scmp.ne.s32.totalorder %s177, %s178
    %p187 = scmp.eq.s32.totalorder %s22, 0
    %p188 = por %p186, %p187
    %p189 = scmp.ne.s32.totalorder %s177, %s178
    %p190 = scmp.eq.s32.totalorder %s23, 3
    %p191 = por %p189, %p190
    %p193 = scmp.ne.s32.totalorder %s178, %s192
    %p194 = scmp.eq.s32.totalorder %s23, 0
    %p195 = por %p193, %p194
    %s197 = sadd.s32 %s196, 1
    %p200 = scmp.eq.s32.totalorder %s17, 3
    %p201 = scmp.ne.s32.totalorder %s196, %s198
    %p202 = scmp.eq.s32.totalorder %s17, 0
    %p203 = por %p201, %p202
    %p204 = scmp.ne.s32.totalorder %s196, %s198
    %p205 = scmp.eq.s32.totalorder %s22, 3
    %p206 = por %p204, %p205
    %p207 = scmp.ne.s32.totalorder %s198, %s199
    %p208 = scmp.eq.s32.totalorder %s22, 0
    %p209 = por %p207, %p208
    %p210 = scmp.ne.s32.totalorder %s198, %s199
    %p211 = scmp.eq.s32.totalorder %s23, 3
    %p212 = por %p210, %p211
    %p214 = scmp.ne.s32.totalorder %s199, %s213
    %p215 = scmp.eq.s32.totalorder %s23, 0
    %p216 = por %p214, %p215
    %s218 = sadd.s32 %s217, 1
    %p221 = scmp.eq.s32.totalorder %s17, 3
    %p222 = scmp.ne.s32.totalorder %s217, %s219
    %p223 = scmp.eq.s32.totalorder %s17, 0
    %p224 = por %p222, %p223
    %p225 = scmp.ne.s32.totalorder %s217, %s219
    %p226 = scmp.eq.s32.totalorder %s22, 3
    %p227 = por %p225, %p226
    %p228 = scmp.ne.s32.totalorder %s219, %s220
    %p229 = scmp.eq.s32.totalorder %s22, 0
    %p230 = por %p228, %p229
    %p231 = scmp.ne.s32.totalorder %s219, %s220
    %p232 = scmp.eq.s32.totalorder %s23, 3
    %p233 = por %p231, %p232
    %p235 = scmp.ne.s32.totalorder %s220, %s234
    %p236 = scmp.eq.s32.totalorder %s23, 0
    %p237 = por %p235, %p236
    %s239 = sadd.s32 %s238, 1
    %p242 = scmp.eq.s32.totalorder %s17, 3
    %p243 = scmp.ne.s32.totalorder %s238, %s240
    %p244 = scmp.eq.s32.totalorder %s17, 0
    %p245 = por %p243, %p244
    %p246 = scmp.ne.s32.totalorder %s238, %s240
    %p247 = scmp.eq.s32.totalorder %s22, 3
    %p248 = por %p246, %p247
    %p249 = scmp.ne.s32.totalorder %s240, %s241
    %p250 = scmp.eq.s32.totalorder %s22, 0
    %p251 = por %p249, %p250
    %p252 = scmp.ne.s32.totalorder %s240, %s241
    %p253 = scmp.eq.s32.totalorder %s23, 3
    %p254 = por %p252, %p253
    %p256 = scmp.ne.s32.totalorder %s241, %s255
    %p257 = scmp.eq.s32.totalorder %s23, 0
    %p258 = por %p256, %p257
    %s260 = sadd.s32 %s259, 1
    %p263 = scmp.eq.s32.totalorder %s17, 3
    %p264 = scmp.ne.s32.totalorder %s259, %s261
    %p265 = scmp.eq.s32.totalorder %s17, 0
    %p266 = por %p264, %p265
    %p267 = scmp.ne.s32.totalorder %s259, %s261
    %p268 = scmp.eq.s32.totalorder %s22, 3
    %p269 = por %p267, %p268
    %p270 = scmp.ne.s32.totalorder %s261, %s262
    %p271 = scmp.eq.s32.totalorder %s22, 0
    %p272 = por %p270, %p271
    %p273 = scmp.ne.s32.totalorder %s261, %s262
    %p274 = scmp.eq.s32.totalorder %s23, 3
    %p275 = por %p273, %p274
    %p277 = scmp.ne.s32.totalorder %s262, %s276
    %p278 = scmp.eq.s32.totalorder %s23, 0
    %p279 = por %p277, %p278
    %s281 = sadd.s32 %s280, 1
    %p284 = scmp.eq.s32.totalorder %s17, 3
    %p285 = scmp.ne.s32.totalorder %s280, %s282
    %p286 = scmp.eq.s32.totalorder %s17, 0
    %p287 = por %p285, %p286
    %p288 = scmp.ne.s32.totalorder %s280, %s282
    %p289 = scmp.eq.s32.totalorder %s22, 3
    %p290 = por %p288, %p289
    %p291 = scmp.ne.s32.totalorder %s282, %s283
    %p292 = scmp.eq.s32.totalorder %s22, 0
    %p293 = por %p291, %p292
    %p294 = scmp.ne.s32.totalorder %s282, %s283
    %p295 = scmp.eq.s32.totalorder %s23, 3
    %p296 = por %p294, %p295
    %p298 = scmp.ne.s32.totalorder %s283, %s297
    %p299 = scmp.eq.s32.totalorder %s23, 0
    %p300 = por %p298, %p299
    %s301 = ssub.s32 %s24, %s36
    %s302 = ssub.s32 %s25, %s32
    %s303 = sor.u32 %s301, %s302
    %p304 = scmp.eq.s32.totalorder %s303, 0
    %s306 = sadd.s32 %s305, 1
    %s307 = scalar_select %p304, %s305, %s306
    %p310 = pneg %p304
    %p311 = scmp.eq.s32.totalorder %s17, 3
    %p312 = por %p310, %p311
    %p313 = scmp.ne.s32.totalorder %s305, %s308
    %p314 = scmp.eq.s32.totalorder %s17, 0
    %p315 = por %p313, %p314
    %p316 = scmp.ne.s32.totalorder %s305, %s308
    %p317 = scmp.eq.s32.totalorder %s22, 3
    %p318 = por %p316, %p317
    %p319 = scmp.ne.s32.totalorder %s308, %s309
    %p320 = scmp.eq.s32.totalorder %s22, 0
    %p321 = por %p319, %p320
    %p322 = scmp.ne.s32.totalorder %s308, %s309
    %p323 = scmp.eq.s32.totalorder %s23, 3
    %p324 = por %p322, %p323
    %p326 = scmp.ne.s32.totalorder %s309, %s325
    %p327 = scmp.eq.s32.totalorder %s23, 0
    %p328 = por %p326, %p327
    %p329 = scmp.le.s32.totalorder 1, %s17
    %p330 = scmp.lt.s32.totalorder %s17, 5
    %p331 = pnand %p329, %p330
    %p332 = pneg %p331
    // Predicated region
    $region9: #{db_head_forward.1} parent=5 // pred_check
      _
    $region10: #{db_head_forward.1} parent=5 // pred_check_branch
      %334 = sbr.rel (%p331) target = $region12
    $region11: #{db_head_forward.1} parent=5 // pred_region
      %s335 = ssub.s32 %s17, 1
      // Predicated region
      $region13: #{db_head_forward.1} parent=11 // pred_check
        %p336 = pneg %p146
      $region14: #{db_head_forward.1} parent=11 // pred_check_branch
        %338 = sbr.rel (%p336) target = $region16
      $region15: #{db_head_forward.1} parent=11 // pred_region
        _
      $region16: #{db_head_forward.1} parent=11 // pred_fallthru
        _
      // Predicated region
      $region17: #{db_head_forward.1} parent=11 // pred_check
        %p339 = pneg %p167
      $region18: #{db_head_forward.1} parent=11 // pred_check_branch
        %341 = sbr.rel (%p339) target = $region20
      $region19: #{db_head_forward.1} parent=11 // pred_region
        _
      $region20: #{db_head_forward.1} parent=11 // pred_fallthru
        _
      // Predicated region
      $region21: #{db_head_forward.1} parent=11 // pred_check
        %p342 = pneg %p188
      $region22: #{db_head_forward.1} parent=11 // pred_check_branch
        %344 = sbr.rel (%p342) target = $region24
      $region23: #{db_head_forward.1} parent=11 // pred_region
        _
      $region24: #{db_head_forward.1} parent=11 // pred_fallthru
        _
      // Predicated region
      $region25: #{db_head_forward.1} parent=11 // pred_check
        %p345 = pneg %p209
      $region26: #{db_head_forward.1} parent=11 // pred_check_branch
        %347 = sbr.rel (%p345) target = $region28
      $region27: #{db_head_forward.1} parent=11 // pred_region
        _
      $region28: #{db_head_forward.1} parent=11 // pred_fallthru
        _
      // Predicated region
      $region29: #{db_head_forward.1} parent=11 // pred_check
        %p348 = pneg %p230
      $region30: #{db_head_forward.1} parent=11 // pred_check_branch
        %350 = sbr.rel (%p348) target = $region32
      $region31: #{db_head_forward.1} parent=11 // pred_region
        _
      $region32: #{db_head_forward.1} parent=11 // pred_fallthru
        _
      // Predicated region
      $region33: #{db_head_forward.1} parent=11 // pred_check
        %p351 = pneg %p251
      $region34: #{db_head_forward.1} parent=11 // pred_check_branch
        %353 = sbr.rel (%p351) target = $region36
      $region35: #{db_head_forward.1} parent=11 // pred_region
        _
      $region36: #{db_head_forward.1} parent=11 // pred_fallthru
        _
      // Predicated region
      $region37: #{db_head_forward.1} parent=11 // pred_check
        %p354 = pneg %p272
      $region38: #{db_head_forward.1} parent=11 // pred_check_branch
        %356 = sbr.rel (%p354) target = $region40
      $region39: #{db_head_forward.1} parent=11 // pred_region
        _
      $region40: #{db_head_forward.1} parent=11 // pred_fallthru
        _
      // Predicated region
      $region41: #{db_head_forward.1} parent=11 // pred_check
        %p357 = pneg %p293
      $region42: #{db_head_forward.1} parent=11 // pred_check_branch
        %359 = sbr.rel (%p357) target = $region44
      $region43: #{db_head_forward.1} parent=11 // pred_region
        _
      $region44: #{db_head_forward.1} parent=11 // pred_fallthru
        _
    $region12: #{db_head_forward.1} parent=5 // pred_fallthru
      _
    %p360 = scmp.lt.s32.totalorder %s17, 4
    // Predicated region
    $region45: #{db_head_forward.1} parent=5 // pred_check
      %p361 = pneg %p360
    $region46: #{db_head_forward.1} parent=5 // pred_check_branch
      %363 = sbr.rel (%p361) target = $region48
    $region47: #{db_head_forward.1} parent=5 // pred_region
      // Predicated region
      $region49: #{db_head_forward.1} parent=47 // pred_check
        %p364 = pneg %p57
      $region50: #{db_head_forward.1} parent=47 // pred_check_branch
        %366 = sbr.rel (%p364) target = $region52
      $region51: #{db_head_forward.1} parent=47 // pred_region
        %s367 = ssub.s32 %s25, 1
        %p368 = scmp.gt.s32.totalorder %s367, 0
        %s369 = scalar_select %p368, %s367, 0
        %s370 = smul.u32 17, %s369
        %p371 = scmp.lt.s32.totalorder %s24, 1
        %s372 = scalar_select %p371, %s24, 1
        %p373 = scmp.lt.s32.totalorder %s370, 33
        %s374 = scalar_select %p373, %s370, 33
        %s375 = smul.addr %s372, 34
        %s376 = sadd.s32 %s374, %s375
        %s377 = smul.addr %s376, 8
        %s378 = scalar_lea.vmem %s0, %s377
        %s379 = ssub.s32 %s25, 1
        %p380 = scmp.gt.s32.totalorder %s379, 0
        %s381 = scalar_select %p380, %s379, 0
        %s382 = smul.u32 17, %s381
      $region52: #{db_head_forward.1} parent=47 // pred_fallthru
        _
      // Predicated region
      $region53: #{db_head_forward.1} parent=47 // pred_check
        %p383 = pneg %p85
      $region54: #{db_head_forward.1} parent=47 // pred_check_branch
        %385 = sbr.rel (%p383) target = $region56
      $region55: #{db_head_forward.1} parent=47 // pred_region
        %s386 = smul.u32 17, %s25
        %p387 = scmp.lt.s32.totalorder %s24, 1
        %s388 = scalar_select %p387, %s24, 1
        %p389 = scmp.lt.s32.totalorder %s386, 33
        %s390 = scalar_select %p389, %s386, 33
        %s391 = smul.addr %s388, 34
        %s392 = sadd.s32 %s390, %s391
        %s393 = smul.addr %s392, 8
        %s394 = scalar_lea.vmem %s1, %s393
        %s395 = smul.u32 17, %s25
      $region56: #{db_head_forward.1} parent=47 // pred_fallthru
        _
      // Predicated region
      $region57: #{db_head_forward.1} parent=47 // pred_check
        %p396 = pneg %p119
      $region58: #{db_head_forward.1} parent=47 // pred_check_branch
        %398 = sbr.rel (%p396) target = $region60
      $region59: #{db_head_forward.1} parent=47 // pred_region
        %s399 = sadd.s32 %s25, 1
        %p400 = scmp.lt.s32.totalorder %s399, 1
        %s401 = scalar_select %p400, %s399, 1
        %s402 = smul.u32 17, %s401
        %p403 = scmp.lt.s32.totalorder %s24, 1
        %s404 = scalar_select %p403, %s24, 1
        %p405 = scmp.lt.s32.totalorder %s402, 33
        %s406 = scalar_select %p405, %s402, 33
        %s407 = smul.addr %s404, 34
        %s408 = sadd.s32 %s406, %s407
        %s409 = smul.addr %s408, 8
        %s410 = scalar_lea.vmem %s2, %s409
        %s411 = sadd.s32 %s25, 1
        %p412 = scmp.lt.s32.totalorder %s411, 1
        %s413 = scalar_select %p412, %s411, 1
        %s414 = smul.u32 17, %s413
      $region60: #{db_head_forward.1} parent=47 // pred_fallthru
        _
    $region48: #{db_head_forward.1} parent=5 // pred_fallthru
      _
    %p415 = scmp.le.s32.totalorder 1, %s17
    %p416 = scmp.lt.s32.totalorder %s17, 5
    %p417 = pnand %p415, %p416
    %p418 = pneg %p417
    // Predicated region
    $region61: #{db_head_forward.1} parent=5 // pred_check
      _
    $region62: #{db_head_forward.1} parent=5 // pred_check_branch
      %420 = sbr.rel (%p417) target = $region64
    $region63: #{db_head_forward.1} parent=5 // pred_region
      %s421 = ssub.s32 %s17, 1
      %s422 = ssub.s32 %s27, 1
      %p423 = scmp.gt.s32.totalorder %s422, 0
      %s424 = scalar_select %p423, %s422, 0
      %s425 = smul.u32 17, %s424
      %p426 = scmp.lt.s32.totalorder %s26, 1
      %s427 = scalar_select %p426, %s26, 1
      %p428 = scmp.lt.s32.totalorder %s425, 33
      %s429 = scalar_select %p428, %s425, 33
      %s430 = smul.addr %s427, 34
      %s431 = sadd.s32 %s429, %s430
      %s432 = smul.addr %s431, 8
      %s433 = scalar_lea.vmem %s0, %s432
      %p434 = pneg %p63
      %p435 = pneg %p60
      %s436 = smul.u32 17, %s27
      %p437 = scmp.lt.s32.totalorder %s26, 1
      %s438 = scalar_select %p437, %s26, 1
      %p439 = scmp.lt.s32.totalorder %s436, 33
      %s440 = scalar_select %p439, %s436, 33
      %s441 = smul.addr %s438, 34
      %s442 = sadd.s32 %s440, %s441
      %s443 = smul.addr %s442, 8
      %s444 = scalar_lea.vmem %s1, %s443
      %p445 = pneg %p91
      %p446 = pneg %p88
      %s447 = sadd.s32 %s27, 1
      %p448 = scmp.lt.s32.totalorder %s447, 1
      %s449 = scalar_select %p448, %s447, 1
      %s450 = smul.u32 17, %s449
      %p451 = scmp.lt.s32.totalorder %s26, 1
      %s452 = scalar_select %p451, %s26, 1
      %p453 = scmp.lt.s32.totalorder %s450, 33
      %s454 = scalar_select %p453, %s450, 33
      %s455 = smul.addr %s452, 34
      %s456 = sadd.s32 %s454, %s455
      %s457 = smul.addr %s456, 8
      %s458 = scalar_lea.vmem %s2, %s457
      %p459 = pneg %p125
      %p460 = pneg %p122
      %p461 = pneg %p146
      %p462 = pneg %p143
      %p463 = pneg %p167
      %p464 = pneg %p164
      %p465 = pneg %p188
      %p466 = pneg %p185
      %p467 = pneg %p209
      %p468 = pneg %p206
      %p469 = pneg %p230
      %p470 = pneg %p227
      %p471 = pneg %p251
      %p472 = pneg %p248
      %p473 = pneg %p272
      %p474 = pneg %p269
      %p475 = pneg %p293
      %p476 = pneg %p290
      %p477 = pneg %p321
      %p478 = pneg %p318
      %s479 = smul.u32 17, %s27
      %p480 = scmp.lt.s32.totalorder %s26, 1
      %s481 = scalar_select %p480, %s26, 1
      %p482 = scmp.lt.s32.totalorder %s479, 33
      %s483 = scalar_select %p482, %s479, 33
      %s484 = smul.addr %s481, 34
      %s485 = sadd.s32 %s483, %s484
      %s486 = smul.addr %s485, 8
      %s487 = scalar_lea.vmem %s11, %s486
      %s488 = ssub.s32 %s27, 1
      %p489 = scmp.gt.s32.totalorder %s488, 0
      %s490 = scalar_select %p489, %s488, 0
      %s491 = smul.u32 17, %s490
      %p492 = scmp.lt.s32.totalorder %s26, 1
      %s493 = scalar_select %p492, %s26, 1
      %p494 = scmp.lt.s32.totalorder %s491, 33
      %s495 = scalar_select %p494, %s491, 33
      %s496 = smul.addr %s493, 34
      %s497 = sadd.s32 %s495, %s496
      %s498 = smul.addr %s497, 8
      %s499 = scalar_lea.vmem %s0, %s498
      %s500 = ssub.s32 %s27, 1
      %p501 = scmp.gt.s32.totalorder %s500, 0
      %s502 = scalar_select %p501, %s500, 0
      %s503 = smul.u32 17, %s502
      %s504 = smul.u32 17, %s27
      %p505 = scmp.lt.s32.totalorder %s26, 1
      %s506 = scalar_select %p505, %s26, 1
      %p507 = scmp.lt.s32.totalorder %s504, 33
      %s508 = scalar_select %p507, %s504, 33
      %s509 = smul.addr %s506, 34
      %s510 = sadd.s32 %s508, %s509
      %s511 = smul.addr %s510, 8
      %s512 = scalar_lea.vmem %s1, %s511
      %s513 = smul.u32 17, %s27
      %s514 = sadd.s32 %s27, 1
      %p515 = scmp.lt.s32.totalorder %s514, 1
      %s516 = scalar_select %p515, %s514, 1
      %s517 = smul.u32 17, %s516
      %p518 = scmp.lt.s32.totalorder %s26, 1
      %s519 = scalar_select %p518, %s26, 1
      %p520 = scmp.lt.s32.totalorder %s517, 33
      %s521 = scalar_select %p520, %s517, 33
      %s522 = smul.addr %s519, 34
      %s523 = sadd.s32 %s521, %s522
      %s524 = smul.addr %s523, 8
      %s525 = scalar_lea.vmem %s2, %s524
      %s526 = sadd.s32 %s27, 1
      %p527 = scmp.lt.s32.totalorder %s526, 1
      %s528 = scalar_select %p527, %s526, 1
      %s529 = smul.u32 17, %s528
      %s530 = smul.u32 17, %s27
      %p531 = scmp.lt.s32.totalorder %s26, 1
      %s532 = scalar_select %p531, %s26, 1
      %p533 = scmp.lt.s32.totalorder %s530, 33
      %s534 = scalar_select %p533, %s530, 33
      %s535 = smul.addr %s532, 34
      %s536 = sadd.s32 %s534, %s535
      %s537 = smul.addr %s536, 8
      %s538 = scalar_lea.vmem %s11, %s537
      %s539 = smul.u32 17, %s27
      %v540 = vld [vmem:[%s499 + $0x70] sm:$0xff]
      %v541 = vld [vmem:[%s499 + $0x78] sm:$0xff]
      %v542 = vld [vmem:[%s499 + $0x80] sm:$0xff]
      %vm543 = vcmask 130048
      %544 = vst.msk [vmem:[#allocation2] sm:$0xff] %vm543, %v540
      %545 = vst.msk [vmem:[#allocation2 + $0x8] sm:$0xff] %vm543, %v541
      %546 = vst.msk [vmem:[#allocation2 + $0x10] sm:$0xff] %vm543, %v542
      %v547 = vld [vmem:[%s512] sm:$0xff]
      %v548 = vld [vmem:[%s512 + $0x8] sm:$0xff]
      %v549 = vld [vmem:[%s512 + $0x10] sm:$0xff]
      %v550 = vld [vmem:[%s512 + $0x18] sm:$0xff]
      %v551 = vld [vmem:[%s512 + $0x20] sm:$0xff]
      %v552 = vld [vmem:[%s512 + $0x28] sm:$0xff]
      %v553 = vld [vmem:[%s512 + $0x30] sm:$0xff]
      %v554 = vld [vmem:[%s512 + $0x38] sm:$0xff]
      %v555 = vld [vmem:[%s512 + $0x40] sm:$0xff]
      %v556 = vld [vmem:[%s512 + $0x48] sm:$0xff]
      %v557 = vld [vmem:[%s512 + $0x50] sm:$0xff]
      %v558 = vld [vmem:[%s512 + $0x58] sm:$0xff]
      %v559 = vld [vmem:[%s512 + $0x60] sm:$0xff]
      %v560 = vld [vmem:[%s512 + $0x68] sm:$0xff]
      %v561 = vld [vmem:[%s512 + $0x70] sm:$0xff]
      %v562 = vld [vmem:[%s512 + $0x78] sm:$0xff]
      %v563 = vld [vmem:[%s512 + $0x80] sm:$0xff]
      %564 = vst.msk [vmem:[#allocation2 + $0x18] sm:$0xff] %vm543, %v547
      %565 = vst.msk [vmem:[#allocation2 + $0x20] sm:$0xff] %vm543, %v548
      %566 = vst.msk [vmem:[#allocation2 + $0x28] sm:$0xff] %vm543, %v549
      %567 = vst.msk [vmem:[#allocation2 + $0x30] sm:$0xff] %vm543, %v550
      %568 = vst.msk [vmem:[#allocation2 + $0x38] sm:$0xff] %vm543, %v551
      %569 = vst.msk [vmem:[#allocation2 + $0x40] sm:$0xff] %vm543, %v552
      %570 = vst.msk [vmem:[#allocation2 + $0x48] sm:$0xff] %vm543, %v553
      %571 = vst.msk [vmem:[#allocation2 + $0x50] sm:$0xff] %vm543, %v554
      %572 = vst.msk [vmem:[#allocation2 + $0x58] sm:$0xff] %vm543, %v555
      %573 = vst.msk [vmem:[#allocation2 + $0x60] sm:$0xff] %vm543, %v556
      %574 = vst.msk [vmem:[#allocation2 + $0x68] sm:$0xff] %vm543, %v557
      %575 = vst.msk [vmem:[#allocation2 + $0x70] sm:$0xff] %vm543, %v558
      %576 = vst.msk [vmem:[#allocation2 + $0x78] sm:$0xff] %vm543, %v559
      %577 = vst.msk [vmem:[#allocation2 + $0x80] sm:$0xff] %vm543, %v560
      %578 = vst.msk [vmem:[#allocation2 + $0x88] sm:$0xff] %vm543, %v561
      %579 = vst.msk [vmem:[#allocation2 + $0x90] sm:$0xff] %vm543, %v562
      %580 = vst.msk [vmem:[#allocation2 + $0x98] sm:$0xff] %vm543, %v563
      %v581 = vld [vmem:[%s525] sm:$0xff]
      %v582 = vld [vmem:[%s525 + $0x8] sm:$0xff]
      %v583 = vld [vmem:[%s525 + $0x10] sm:$0xff]
      %584 = vst.msk [vmem:[#allocation2 + $0xa0] sm:$0xff] %vm543, %v581
      %585 = vst.msk [vmem:[#allocation2 + $0xa8] sm:$0xff] %vm543, %v582
      %586 = vst.msk [vmem:[#allocation2 + $0xb0] sm:$0xff] %vm543, %v583
      %s587 = smul.u32 %s27, 136
      %v588 = vlaneseq
      %v589 = vshrl.u32 %v588, 7
      %v590 = vadd.s32 %v589, 8
      %v591 = vadd.s32 %v589, 16
      %v592 = vadd.s32 %v589, 24
      %v593 = vadd.s32 %v589, 32
      %v594 = vadd.s32 %v589, 40
      %v595 = vadd.s32 %v589, 48
      %v596 = vadd.s32 %v589, 56
      %v597 = vadd.s32 %v589, 64
      %v598 = vadd.s32 %v589, 72
      %v599 = vadd.s32 %v589, 80
      %v600 = vadd.s32 %v589, 88
      %v601 = vadd.s32 %v589, 96
      %v602 = vadd.s32 %v589, 104
      %v603 = vadd.s32 %v589, 112
      %v604 = vadd.s32 %v589, 120
      %v605 = vadd.s32 %v589, 128
      %v606 = vstv %s587
      %v607 = vadd.s32 %v606, %v589
      %v608 = vadd.s32 %v606, %v590
      %v609 = vadd.s32 %v606, %v591
      %v610 = vadd.s32 %v606, %v592
      %v611 = vadd.s32 %v606, %v593
      %v612 = vadd.s32 %v606, %v594
      %v613 = vadd.s32 %v606, %v595
      %v614 = vadd.s32 %v606, %v596
      %v615 = vadd.s32 %v606, %v597
      %v616 = vadd.s32 %v606, %v598
      %v617 = vadd.s32 %v606, %v599
      %v618 = vadd.s32 %v606, %v600
      %v619 = vadd.s32 %v606, %v601
      %v620 = vadd.s32 %v606, %v602
      %v621 = vadd.s32 %v606, %v603
      %v622 = vadd.s32 %v606, %v604
      %v623 = vadd.s32 %v606, %v605
      %vm624 = vcmp.ge.s32.totalorder %v607, 17
      %vm625 = vcmp.ge.s32.totalorder %v608, 17
      %vm626 = vcmp.ge.s32.totalorder %v609, 17
      %vm627 = vcmp.ge.s32.totalorder %v610, 17
      %vm628 = vcmp.ge.s32.totalorder %v611, 17
      %vm629 = vcmp.ge.s32.totalorder %v612, 17
      %vm630 = vcmp.ge.s32.totalorder %v613, 17
      %vm631 = vcmp.ge.s32.totalorder %v614, 17
      %vm632 = vcmp.ge.s32.totalorder %v615, 17
      %vm633 = vcmp.ge.s32.totalorder %v616, 17
      %vm634 = vcmp.ge.s32.totalorder %v617, 17
      %vm635 = vcmp.ge.s32.totalorder %v618, 17
      %vm636 = vcmp.ge.s32.totalorder %v619, 17
      %vm637 = vcmp.ge.s32.totalorder %v620, 17
      %vm638 = vcmp.ge.s32.totalorder %v621, 17
      %vm639 = vcmp.ge.s32.totalorder %v622, 17
      %vm640 = vcmp.ge.s32.totalorder %v623, 17
      %v641 = vsel %vm624, 1, 0
      %v642 = vsel %vm625, 1, 0
      %v643 = vsel %vm626, 1, 0
      %v644 = vsel %vm627, 1, 0
      %v645 = vsel %vm628, 1, 0
      %v646 = vsel %vm629, 1, 0
      %v647 = vsel %vm630, 1, 0
      %v648 = vsel %vm631, 1, 0
      %v649 = vsel %vm632, 1, 0
      %v650 = vsel %vm633, 1, 0
      %v651 = vsel %vm634, 1, 0
      %v652 = vsel %vm635, 1, 0
      %v653 = vsel %vm636, 1, 0
      %v654 = vsel %vm637, 1, 0
      %v655 = vsel %vm638, 1, 0
      %v656 = vsel %vm639, 1, 0
      %v657 = vsel %vm640, 1, 0
      %v658 = vcvt.s32.f32 %v641
      %v659 = vcvt.s32.f32 %v642
      %v660 = vcvt.s32.f32 %v643
      %v661 = vcvt.s32.f32 %v644
      %v662 = vcvt.s32.f32 %v645
      %v663 = vcvt.s32.f32 %v646
      %v664 = vcvt.s32.f32 %v647
      %v665 = vcvt.s32.f32 %v648
      %v666 = vcvt.s32.f32 %v649
      %v667 = vcvt.s32.f32 %v650
      %v668 = vcvt.s32.f32 %v651
      %v669 = vcvt.s32.f32 %v652
      %v670 = vcvt.s32.f32 %v653
      %v671 = vcvt.s32.f32 %v654
      %v672 = vcvt.s32.f32 %v655
      %v673 = vcvt.s32.f32 %v656
      %v674 = vcvt.s32.f32 %v657
      %vm675 = vcmp.lt.s32.totalorder %v607, 255
      %vm676 = vcmp.lt.s32.totalorder %v608, 255
      %vm677 = vcmp.lt.s32.totalorder %v609, 255
      %vm678 = vcmp.lt.s32.totalorder %v610, 255
      %vm679 = vcmp.lt.s32.totalorder %v611, 255
      %vm680 = vcmp.lt.s32.totalorder %v612, 255
      %vm681 = vcmp.lt.s32.totalorder %v613, 255
      %vm682 = vcmp.lt.s32.totalorder %v614, 255
      %vm683 = vcmp.lt.s32.totalorder %v615, 255
      %vm684 = vcmp.lt.s32.totalorder %v616, 255
      %vm685 = vcmp.lt.s32.totalorder %v617, 255
      %vm686 = vcmp.lt.s32.totalorder %v618, 255
      %vm687 = vcmp.lt.s32.totalorder %v619, 255
      %vm688 = vcmp.lt.s32.totalorder %v620, 255
      %vm689 = vcmp.lt.s32.totalorder %v621, 255
      %vm690 = vcmp.lt.s32.totalorder %v622, 255
      %vm691 = vcmp.lt.s32.totalorder %v623, 255
      %v692 = vsel %vm675, 1, 0
      %v693 = vsel %vm676, 1, 0
      %v694 = vsel %vm677, 1, 0
      %v695 = vsel %vm678, 1, 0
      %v696 = vsel %vm679, 1, 0
      %v697 = vsel %vm680, 1, 0
      %v698 = vsel %vm681, 1, 0
      %v699 = vsel %vm682, 1, 0
      %v700 = vsel %vm683, 1, 0
      %v701 = vsel %vm684, 1, 0
      %v702 = vsel %vm685, 1, 0
      %v703 = vsel %vm686, 1, 0
      %v704 = vsel %vm687, 1, 0
      %v705 = vsel %vm688, 1, 0
      %v706 = vsel %vm689, 1, 0
      %v707 = vsel %vm690, 1, 0
      %v708 = vsel %vm691, 1, 0
      %v709 = vcvt.s32.f32 %v692
      %v710 = vcvt.s32.f32 %v693
      %v711 = vcvt.s32.f32 %v694
      %v712 = vcvt.s32.f32 %v695
      %v713 = vcvt.s32.f32 %v696
      %v714 = vcvt.s32.f32 %v697
      %v715 = vcvt.s32.f32 %v698
      %v716 = vcvt.s32.f32 %v699
      %v717 = vcvt.s32.f32 %v700
      %v718 = vcvt.s32.f32 %v701
      %v719 = vcvt.s32.f32 %v702
      %v720 = vcvt.s32.f32 %v703
      %v721 = vcvt.s32.f32 %v704
      %v722 = vcvt.s32.f32 %v705
      %v723 = vcvt.s32.f32 %v706
      %v724 = vcvt.s32.f32 %v707
      %v725 = vcvt.s32.f32 %v708
      %v726 = vld [vmem:[#allocation2 + $0x6] sm:$0xff]
      %v727 = vld [vmem:[#allocation2 + $0xe] sm:$0xff]
      %v728 = vld [vmem:[#allocation2 + $0x16] sm:$0xff]
      %v729 = vld [vmem:[#allocation2 + $0x1e] sm:$0xff]
      %v730 = vld [vmem:[#allocation2 + $0x26] sm:$0xff]
      %v731 = vld [vmem:[#allocation2 + $0x2e] sm:$0xff]
      %v732 = vld [vmem:[#allocation2 + $0x36] sm:$0xff]
      %v733 = vld [vmem:[#allocation2 + $0x3e] sm:$0xff]
      %v734 = vld [vmem:[#allocation2 + $0x46] sm:$0xff]
      %v735 = vld [vmem:[#allocation2 + $0x4e] sm:$0xff]
      %v736 = vld [vmem:[#allocation2 + $0x56] sm:$0xff]
      %v737 = vld [vmem:[#allocation2 + $0x5e] sm:$0xff]
      %v738 = vld [vmem:[#allocation2 + $0x66] sm:$0xff]
      %v739 = vld [vmem:[#allocation2 + $0x6e] sm:$0xff]
      %v740 = vld [vmem:[#allocation2 + $0x76] sm:$0xff]
      %v741 = vld [vmem:[#allocation2 + $0x7e] sm:$0xff]
      %v742 = vld [vmem:[#allocation2 + $0x86] sm:$0xff]
      %v743 = vld [vmem:[%s3] sm:$0xff]
      %v744 = vld [vmem:[%s3 + $0x8] sm:$0xff]
      %v745 = vld [vmem:[#allocation2 + $0x7] sm:$0xff]
      %v746 = vld [vmem:[#allocation2 + $0xf] sm:$0xff]
      %v747 = vld [vmem:[#allocation2 + $0x17] sm:$0xff]
      %v748 = vld [vmem:[#allocation2 + $0x1f] sm:$0xff]
      %v749 = vld [vmem:[#allocation2 + $0x27] sm:$0xff]
      %v750 = vld [vmem:[#allocation2 + $0x2f] sm:$0xff]
      %v751 = vld [vmem:[#allocation2 + $0x37] sm:$0xff]
      %v752 = vld [vmem:[#allocation2 + $0x3f] sm:$0xff]
      %v753 = vld [vmem:[#allocation2 + $0x47] sm:$0xff]
      %v754 = vld [vmem:[#allocation2 + $0x4f] sm:$0xff]
      %v755 = vld [vmem:[#allocation2 + $0x57] sm:$0xff]
      %v756 = vld [vmem:[#allocation2 + $0x5f] sm:$0xff]
      %v757 = vld [vmem:[#allocation2 + $0x67] sm:$0xff]
      %v758 = vld [vmem:[#allocation2 + $0x6f] sm:$0xff]
      %v759 = vld [vmem:[#allocation2 + $0x77] sm:$0xff]
      %v760 = vld [vmem:[#allocation2 + $0x7f] sm:$0xff]
      %v761 = vld [vmem:[#allocation2 + $0x87] sm:$0xff]
      %s762 = scalar_lea.vmem %s3, 16
      %v763 = vld [vmem:[%s762] sm:$0xff]
      %v764 = vld [vmem:[%s762 + $0x8] sm:$0xff]
      %v766 = vsel %vm543, %v745, 0
      %v769 = vsel %vm543, %v746, 0
      %v772 = vsel %vm543, %v747, 0
      %v775 = vsel %vm543, %v748, 0
      %v778 = vsel %vm543, %v749, 0
      %v781 = vsel %vm543, %v750, 0
      %v784 = vsel %vm543, %v751, 0
      %v787 = vsel %vm543, %v752, 0
      %v790 = vsel %vm543, %v753, 0
      %v793 = vsel %vm543, %v754, 0
      %v796 = vsel %vm543, %v755, 0
      %v799 = vsel %vm543, %v756, 0
      %v802 = vsel %vm543, %v757, 0
      %v805 = vsel %vm543, %v758, 0
      %v808 = vsel %vm543, %v759, 0
      %v811 = vsel %vm543, %v760, 0
      %v814 = vsel %vm543, %v761, 0
      %816 = vmatprep.subr.mxu0 0.0
      %817 = vmatpush1.msra.mxu0 %v763
      %818 = vmatprep.subr.mxu0 0.0
      %819 = vmatpush1.msra.mxu0 %v764
      %820 = vmatprep.subr.mxu0 0.0
      %821 = vmatpush1.msra.mxu0 0.0
      %822 = vmatprep.subr.mxu0 0.0
      %823 = vmatpush1.msra.mxu0 0.0
      %824 = vmatprep.subr.mxu0 0.0
      %825 = vmatpush1.msra.mxu0 0.0
      %826 = vmatprep.subr.mxu0 0.0
      %827 = vmatpush1.msra.mxu0 0.0
      %828 = vmatprep.subr.mxu0 0.0
      %829 = vmatpush1.msra.mxu0 0.0
      %830 = vmatprep.subr.mxu0 0.0
      %831 = vmatpush1.msra.mxu0 0.0
      %832 = vmatprep.subr.mxu0 0.0
      %833 = vmatpush1.msra.mxu0 0.0
      %834 = vmatprep.subr.mxu0 0.0
      %835 = vmatpush1.msra.mxu0 0.0
      %836 = vmatprep.subr.mxu0 0.0
      %837 = vmatpush1.msra.mxu0 0.0
      %838 = vmatprep.subr.mxu0 0.0
      %839 = vmatpush1.msra.mxu0 0.0
      %840 = vmatprep.subr.mxu0 0.0
      %841 = vmatpush1.msra.mxu0 0.0
      %842 = vmatprep.subr.mxu0 0.0
      %843 = vmatpush1.msra.mxu0 0.0
      %844 = vmatprep.subr.mxu0 0.0
      %845 = vmatpush1.msra.mxu0 0.0
      %846 = vmatprep.subr.mxu0 0.0
      %847 = vmatpush1.msra.mxu0 0.0
      %848 = vmatprep.subr.mxu0 0.0
      %849 = vmatpush1.msra.mxu0 0.0
      %850 = vmatprep.subr.mxu0 0.0
      %851 = vmatpush1.msra.mxu0 0.0
      %852 = vmatprep.subr.mxu0 0.0
      %853 = vmatpush1.msra.mxu0 0.0
      %854 = vmatprep.subr.mxu0 0.0
      %855 = vmatpush1.msra.mxu0 0.0
      %856 = vmatprep.subr.mxu0 0.0
      %857 = vmatpush1.msra.mxu0 0.0
      %858 = vmatprep.subr.mxu0 0.0
      %859 = vmatpush1.msra.mxu0 0.0
      %860 = vmatprep.subr.mxu0 0.0
      %861 = vmatpush1.msra.mxu0 0.0
      %862 = vmatprep.subr.mxu0 0.0
      %863 = vmatpush1.msra.mxu0 0.0
      %864 = vmatprep.subr.mxu0 0.0
      %865 = vmatpush1.msra.mxu0 0.0
      %866 = vmatprep.subr.mxu0 0.0
      %867 = vmatpush1.msra.mxu0 0.0
      %868 = vmatprep.subr.mxu0 0.0
      %869 = vmatpush1.msra.mxu0 0.0
      %870 = vmatprep.subr.mxu0 0.0
      %871 = vmatpush1.msra.mxu0 0.0
      %872 = vmatprep.subr.mxu0 0.0
      %873 = vmatpush1.msra.mxu0 0.0
      %874 = vmatprep.subr.mxu0 0.0
      %875 = vmatpush1.msra.mxu0 0.0
      %876 = vmatprep.subr.mxu0 0.0
      %877 = vmatpush1.msra.mxu0 0.0
      %878 = vmatprep.subr.mxu0 0.0
      %879 = vmatpush1.msra.mxu0 0.0
      %880 = vmatprep.mubr.f32.mxu0 0.0
      %881 = vmatmul.mubr.f32.gmra.mrb[0].mxu0 %v766
      %v882 = vpop.f32.mrb[0].mxu0
      %v883 = vadd.f32 0.0, %v882
      %v884 = vpop.f32.mrb[0].mxu0
      %885 = vmatprep.mubr.f32.mxu0 0.0
      %886 = vmatmul.mubr.f32.gmra.mrb[0].mxu0 %v769
      %v887 = vpop.f32.mrb[0].mxu0
      %v888 = vadd.f32 0.0, %v887
      %v889 = vpop.f32.mrb[0].mxu0
      %890 = vmatprep.mubr.f32.mxu0 0.0
      %891 = vmatmul.mubr.f32.gmra.mrb[0].mxu0 %v772
      %v892 = vpop.f32.mrb[0].mxu0
      %v893 = vadd.f32 0.0, %v892
      %v894 = vpop.f32.mrb[0].mxu0
      %895 = vmatprep.mubr.f32.mxu0 0.0
      %896 = vmatmul.mubr.f32.gmra.mrb[0].mxu0 %v775
      %v897 = vpop.f32.mrb[0].mxu0
      %v898 = vadd.f32 0.0, %v897
      %v899 = vpop.f32.mrb[0].mxu0
      %900 = vmatprep.mubr.f32.mxu0 0.0
      %901 = vmatmul.mubr.f32.gmra.mrb[0].mxu0 %v778
      %v902 = vpop.f32.mrb[0].mxu0
      %v903 = vadd.f32 0.0, %v902
      %v904 = vpop.f32.mrb[0].mxu0
      %905 = vmatprep.mubr.f32.mxu0 0.0
      %906 = vmatmul.mubr.f32.gmra.mrb[0].mxu0 %v781
      %v907 = vpop.f32.mrb[0].mxu0
      %v908 = vadd.f32 0.0, %v907
      %v909 = vpop.f32.mrb[0].mxu0
      %910 = vmatprep.mubr.f32.mxu0 0.0
      %911 = vmatmul.mubr.f32.gmra.mrb[0].mxu0 %v784
      %v912 = vpop.f32.mrb[0].mxu0
      %v913 = vadd.f32 0.0, %v912
      %v914 = vpop.f32.mrb[0].mxu0
      %915 = vmatprep.mubr.f32.mxu0 0.0
      %916 = vmatmul.mubr.f32.gmra.mrb[0].mxu0 %v787
      %v917 = vpop.f32.mrb[0].mxu0
      %v918 = vadd.f32 0.0, %v917
      %v919 = vpop.f32.mrb[0].mxu0
      %920 = vmatprep.mubr.f32.mxu0 0.0
      %921 = vmatmul.mubr.f32.gmra.mrb[0].mxu0 %v790
      %v922 = vpop.f32.mrb[0].mxu0
      %v923 = vadd.f32 0.0, %v922
      %v924 = vpop.f32.mrb[0].mxu0
      %925 = vmatprep.mubr.f32.mxu0 0.0
      %926 = vmatmul.mubr.f32.gmra.mrb[0].mxu0 %v793
      %v927 = vpop.f32.mrb[0].mxu0
      %v928 = vadd.f32 0.0, %v927
      %v929 = vpop.f32.mrb[0].mxu0
      %930 = vmatprep.mubr.f32.mxu0 0.0
      %931 = vmatmul.mubr.f32.gmra.mrb[0].mxu0 %v796
      %v932 = vpop.f32.mrb[0].mxu0
      %v933 = vadd.f32 0.0, %v932
      %v934 = vpop.f32.mrb[0].mxu0
      %935 = vmatprep.mubr.f32.mxu0 0.0
      %936 = vmatmul.mubr.f32.gmra.mrb[0].mxu0 %v799
      %v937 = vpop.f32.mrb[0].mxu0
      %v938 = vadd.f32 0.0, %v937
      %v939 = vpop.f32.mrb[0].mxu0
      %940 = vmatprep.mubr.f32.mxu0 0.0
      %941 = vmatmul.mubr.f32.gmra.mrb[0].mxu0 %v802
      %v942 = vpop.f32.mrb[0].mxu0
      %v943 = vadd.f32 0.0, %v942
      %v944 = vpop.f32.mrb[0].mxu0
      %945 = vmatprep.mubr.f32.mxu0 0.0
      %946 = vmatmul.mubr.f32.gmra.mrb[0].mxu0 %v805
      %v947 = vpop.f32.mrb[0].mxu0
      %v948 = vadd.f32 0.0, %v947
      %v949 = vpop.f32.mrb[0].mxu0
      %950 = vmatprep.mubr.f32.mxu0 0.0
      %951 = vmatmul.mubr.f32.gmra.mrb[0].mxu0 %v808
      %v952 = vpop.f32.mrb[0].mxu0
      %v953 = vadd.f32 0.0, %v952
      %v954 = vpop.f32.mrb[0].mxu0
      %955 = vmatprep.mubr.f32.mxu0 0.0
      %956 = vmatmul.mubr.f32.gmra.mrb[0].mxu0 %v811
      %v957 = vpop.f32.mrb[0].mxu0
      %v958 = vadd.f32 0.0, %v957
      %v959 = vpop.f32.mrb[0].mxu0
      %960 = vmatprep.mubr.f32.mxu0 0.0
      %961 = vmatmul.mubr.f32.gmra.mrb[0].mxu0 %v814
      %v962 = vpop.f32.mrb[0].mxu0
      %v963 = vadd.f32 0.0, %v962
      %v964 = vpop.f32.mrb[0].mxu0
      %965 = vdwg.mxu0
      %v967 = vsel %vm543, %v726, 0
      %v970 = vsel %vm543, %v727, 0
      %v973 = vsel %vm543, %v728, 0
      %v976 = vsel %vm543, %v729, 0
      %v979 = vsel %vm543, %v730, 0
      %v982 = vsel %vm543, %v731, 0
      %v985 = vsel %vm543, %v732, 0
      %v988 = vsel %vm543, %v733, 0
      %v991 = vsel %vm543, %v734, 0
      %v994 = vsel %vm543, %v735, 0
      %v997 = vsel %vm543, %v736, 0
      %v1000 = vsel %vm543, %v737, 0
      %v1003 = vsel %vm543, %v738, 0
      %v1006 = vsel %vm543, %v739, 0
      %v1009 = vsel %vm543, %v740, 0
      %v1012 = vsel %vm543, %v741, 0
      %v1015 = vsel %vm543, %v742, 0
      %1017 = vmatprep.subr.mxu0 0.0
      %1018 = vmatpush1.msra.mxu0 %v743
      %1019 = vmatprep.subr.mxu0 0.0
      %1020 = vmatpush1.msra.mxu0 %v744
      %1021 = vmatprep.subr.mxu0 0.0
      %1022 = vmatpush1.msra.mxu0 0.0
      %1023 = vmatprep.subr.mxu0 0.0
      %1024 = vmatpush1.msra.mxu0 0.0
      %1025 = vmatprep.subr.mxu0 0.0
      %1026 = vmatpush1.msra.mxu0 0.0
      %1027 = vmatprep.subr.mxu0 0.0
      %1028 = vmatpush1.msra.mxu0 0.0
      %1029 = vmatprep.subr.mxu0 0.0
      %1030 = vmatpush1.msra.mxu0 0.0
      %1031 = vmatprep.subr.mxu0 0.0
      %1032 = vmatpush1.msra.mxu0 0.0
      %1033 = vmatprep.subr.mxu0 0.0
      %1034 = vmatpush1.msra.mxu0 0.0
      %1035 = vmatprep.subr.mxu0 0.0
      %1036 = vmatpush1.msra.mxu0 0.0
      %1037 = vmatprep.subr.mxu0 0.0
      %1038 = vmatpush1.msra.mxu0 0.0
      %1039 = vmatprep.subr.mxu0 0.0
      %1040 = vmatpush1.msra.mxu0 0.0
      %1041 = vmatprep.subr.mxu0 0.0
      %1042 = vmatpush1.msra.mxu0 0.0
      %1043 = vmatprep.subr.mxu0 0.0
      %1044 = vmatpush1.msra.mxu0 0.0
      %1045 = vmatprep.subr.mxu0 0.0
      %1046 = vmatpush1.msra.mxu0 0.0
      %1047 = vmatprep.subr.mxu0 0.0
      %1048 = vmatpush1.msra.mxu0 0.0
      %1049 = vmatprep.subr.mxu0 0.0
      %1050 = vmatpush1.msra.mxu0 0.0
      %1051 = vmatprep.subr.mxu0 0.0
      %1052 = vmatpush1.msra.mxu0 0.0
      %1053 = vmatprep.subr.mxu0 0.0
      %1054 = vmatpush1.msra.mxu0 0.0
      %1055 = vmatprep.subr.mxu0 0.0
      %1056 = vmatpush1.msra.mxu0 0.0
      %1057 = vmatprep.subr.mxu0 0.0
      %1058 = vmatpush1.msra.mxu0 0.0
      %1059 = vmatprep.subr.mxu0 0.0
      %1060 = vmatpush1.msra.mxu0 0.0
      %1061 = vmatprep.subr.mxu0 0.0
      %1062 = vmatpush1.msra.mxu0 0.0
      %1063 = vmatprep.subr.mxu0 0.0
      %1064 = vmatpush1.msra.mxu0 0.0
      %1065 = vmatprep.subr.mxu0 0.0
      %1066 = vmatpush1.msra.mxu0 0.0
      %1067 = vmatprep.subr.mxu0 0.0
      %1068 = vmatpush1.msra.mxu0 0.0
      %1069 = vmatprep.subr.mxu0 0.0
      %1070 = vmatpush1.msra.mxu0 0.0
      %1071 = vmatprep.subr.mxu0 0.0
      %1072 = vmatpush1.msra.mxu0 0.0
      %1073 = vmatprep.subr.mxu0 0.0
      %1074 = vmatpush1.msra.mxu0 0.0
      %1075 = vmatprep.subr.mxu0 0.0
      %1076 = vmatpush1.msra.mxu0 0.0
      %1077 = vmatprep.subr.mxu0 0.0
      %1078 = vmatpush1.msra.mxu0 0.0
      %1079 = vmatprep.subr.mxu0 0.0
      %1080 = vmatpush1.msra.mxu0 0.0
      %1081 = vmatprep.mubr.f32.mxu0 0.0
      %1082 = vmatmul.mubr.f32.gmra.mrb[0].mxu0 %v967
      %v1083 = vpop.f32.mrb[0].mxu0
      %v1084 = vadd.f32 %v883, %v1083
      %v1085 = vpop.f32.mrb[0].mxu0
      %1086 = vmatprep.mubr.f32.mxu0 0.0
      %1087 = vmatmul.mubr.f32.gmra.mrb[0].mxu0 %v970
      %v1088 = vpop.f32.mrb[0].mxu0
      %v1089 = vadd.f32 %v888, %v1088
      %v1090 = vpop.f32.mrb[0].mxu0
      %1091 = vmatprep.mubr.f32.mxu0 0.0
      %1092 = vmatmul.mubr.f32.gmra.mrb[0].mxu0 %v973
      %v1093 = vpop.f32.mrb[0].mxu0
      %v1094 = vadd.f32 %v893, %v1093
      %v1095 = vpop.f32.mrb[0].mxu0
      %1096 = vmatprep.mubr.f32.mxu0 0.0
      %1097 = vmatmul.mubr.f32.gmra.mrb[0].mxu0 %v976
      %v1098 = vpop.f32.mrb[0].mxu0
      %v1099 = vadd.f32 %v898, %v1098
      %v1100 = vpop.f32.mrb[0].mxu0
      %1101 = vmatprep.mubr.f32.mxu0 0.0
      %1102 = vmatmul.mubr.f32.gmra.mrb[0].mxu0 %v979
      %v1103 = vpop.f32.mrb[0].mxu0
      %v1104 = vadd.f32 %v903, %v1103
      %v1105 = vpop.f32.mrb[0].mxu0
      %1106 = vmatprep.mubr.f32.mxu0 0.0
      %1107 = vmatmul.mubr.f32.gmra.mrb[0].mxu0 %v982
      %v1108 = vpop.f32.mrb[0].mxu0
      %v1109 = vadd.f32 %v908, %v1108
      %v1110 = vpop.f32.mrb[0].mxu0
      %1111 = vmatprep.mubr.f32.mxu0 0.0
      %1112 = vmatmul.mubr.f32.gmra.mrb[0].mxu0 %v985
      %v1113 = vpop.f32.mrb[0].mxu0
      %v1114 = vadd.f32 %v913, %v1113
      %v1115 = vpop.f32.mrb[0].mxu0
      %1116 = vmatprep.mubr.f32.mxu0 0.0
      %1117 = vmatmul.mubr.f32.gmra.mrb[0].mxu0 %v988
      %v1118 = vpop.f32.mrb[0].mxu0
      %v1119 = vadd.f32 %v918, %v1118
      %v1120 = vpop.f32.mrb[0].mxu0
      %1121 = vmatprep.mubr.f32.mxu0 0.0
      %1122 = vmatmul.mubr.f32.gmra.mrb[0].mxu0 %v991
      %v1123 = vpop.f32.mrb[0].mxu0
      %v1124 = vadd.f32 %v923, %v1123
      %v1125 = vpop.f32.mrb[0].mxu0
      %1126 = vmatprep.mubr.f32.mxu0 0.0
      %1127 = vmatmul.mubr.f32.gmra.mrb[0].mxu0 %v994
      %v1128 = vpop.f32.mrb[0].mxu0
      %v1129 = vadd.f32 %v928, %v1128
      %v1130 = vpop.f32.mrb[0].mxu0
      %1131 = vmatprep.mubr.f32.mxu0 0.0
      %1132 = vmatmul.mubr.f32.gmra.mrb[0].mxu0 %v997
      %v1133 = vpop.f32.mrb[0].mxu0
      %v1134 = vadd.f32 %v933, %v1133
      %v1135 = vpop.f32.mrb[0].mxu0
      %1136 = vmatprep.mubr.f32.mxu0 0.0
      %1137 = vmatmul.mubr.f32.gmra.mrb[0].mxu0 %v1000
      %v1138 = vpop.f32.mrb[0].mxu0
      %v1139 = vadd.f32 %v938, %v1138
      %v1140 = vpop.f32.mrb[0].mxu0
      %1141 = vmatprep.mubr.f32.mxu0 0.0
      %1142 = vmatmul.mubr.f32.gmra.mrb[0].mxu0 %v1003
      %v1143 = vpop.f32.mrb[0].mxu0
      %v1144 = vadd.f32 %v943, %v1143
      %v1145 = vpop.f32.mrb[0].mxu0
      %1146 = vmatprep.mubr.f32.mxu0 0.0
      %1147 = vmatmul.mubr.f32.gmra.mrb[0].mxu0 %v1006
      %v1148 = vpop.f32.mrb[0].mxu0
      %v1149 = vadd.f32 %v948, %v1148
      %v1150 = vpop.f32.mrb[0].mxu0
      %1151 = vmatprep.mubr.f32.mxu0 0.0
      %1152 = vmatmul.mubr.f32.gmra.mrb[0].mxu0 %v1009
      %v1153 = vpop.f32.mrb[0].mxu0
      %v1154 = vadd.f32 %v953, %v1153
      %v1155 = vpop.f32.mrb[0].mxu0
      %1156 = vmatprep.mubr.f32.mxu0 0.0
      %1157 = vmatmul.mubr.f32.gmra.mrb[0].mxu0 %v1012
      %v1158 = vpop.f32.mrb[0].mxu0
      %v1159 = vadd.f32 %v958, %v1158
      %v1160 = vpop.f32.mrb[0].mxu0
      %1161 = vmatprep.mubr.f32.mxu0 0.0
      %1162 = vmatmul.mubr.f32.gmra.mrb[0].mxu0 %v1015
      %v1163 = vpop.f32.mrb[0].mxu0
      %v1164 = vadd.f32 %v963, %v1163
      %v1165 = vpop.f32.mrb[0].mxu0
      %1166 = vdwg.mxu0
      %v1167 = vld [vmem:[#allocation2 + $0x8] sm:$0xff]
      %v1168 = vld [vmem:[#allocation2 + $0x10] sm:$0xff]
      %v1169 = vld [vmem:[#allocation2 + $0x18] sm:$0xff]
      %v1170 = vld [vmem:[#allocation2 + $0x20] sm:$0xff]
      %v1171 = vld [vmem:[#allocation2 + $0x28] sm:$0xff]
      %v1172 = vld [vmem:[#allocation2 + $0x30] sm:$0xff]
      %v1173 = vld [vmem:[#allocation2 + $0x38] sm:$0xff]
      %v1174 = vld [vmem:[#allocation2 + $0x40] sm:$0xff]
      %v1175 = vld [vmem:[#allocation2 + $0x48] sm:$0xff]
      %v1176 = vld [vmem:[#allocation2 + $0x50] sm:$0xff]
      %v1177 = vld [vmem:[#allocation2 + $0x58] sm:$0xff]
      %v1178 = vld [vmem:[#allocation2 + $0x60] sm:$0xff]
      %v1179 = vld [vmem:[#allocation2 + $0x68] sm:$0xff]
      %v1180 = vld [vmem:[#allocation2 + $0x70] sm:$0xff]
      %v1181 = vld [vmem:[#allocation2 + $0x78] sm:$0xff]
      %v1182 = vld [vmem:[#allocation2 + $0x80] sm:$0xff]
      %v1183 = vld [vmem:[#allocation2 + $0x88] sm:$0xff]
      %s1184 = scalar_lea.vmem %s3, 32
      %v1185 = vld [vmem:[%s1184] sm:$0xff]
      %v1186 = vld [vmem:[%s1184 + $0x8] sm:$0xff]
      %v1188 = vsel %vm543, %v1167, 0
      %v1191 = vsel %vm543, %v1168, 0
      %v1194 = vsel %vm543, %v1169, 0
      %v1197 = vsel %vm543, %v1170, 0
      %v1200 = vsel %vm543, %v1171, 0
      %v1203 = vsel %vm543, %v1172, 0
      %v1206 = vsel %vm543, %v1173, 0
      %v1209 = vsel %vm543, %v1174, 0
      %v1212 = vsel %vm543, %v1175, 0
      %v1215 = vsel %vm543, %v1176, 0
      %v1218 = vsel %vm543, %v1177, 0
      %v1221 = vsel %vm543, %v1178, 0
      %v1224 = vsel %vm543, %v1179, 0
      %v1227 = vsel %vm543, %v1180, 0
      %v1230 = vsel %vm543, %v1181, 0
      %v1233 = vsel %vm543, %v1182, 0
      %v1236 = vsel %vm543, %v1183, 0
      %1238 = vmatprep.subr.mxu0 0.0
      %1239 = vmatpush1.msra.mxu0 %v1185
      %1240 = vmatprep.subr.mxu0 0.0
      %1241 = vmatpush1.msra.mxu0 %v1186
      %1242 = vmatprep.subr.mxu0 0.0
      %1243 = vmatpush1.msra.mxu0 0.0
      %1244 = vmatprep.subr.mxu0 0.0
      %1245 = vmatpush1.msra.mxu0 0.0
      %1246 = vmatprep.subr.mxu0 0.0
      %1247 = vmatpush1.msra.mxu0 0.0
      %1248 = vmatprep.subr.mxu0 0.0
      %1249 = vmatpush1.msra.mxu0 0.0
      %1250 = vmatprep.subr.mxu0 0.0
      %1251 = vmatpush1.msra.mxu0 0.0
      %1252 = vmatprep.subr.mxu0 0.0
      %1253 = vmatpush1.msra.mxu0 0.0
      %1254 = vmatprep.subr.mxu0 0.0
      %1255 = vmatpush1.msra.mxu0 0.0
      %1256 = vmatprep.subr.mxu0 0.0
      %1257 = vmatpush1.msra.mxu0 0.0
      %1258 = vmatprep.subr.mxu0 0.0
      %1259 = vmatpush1.msra.mxu0 0.0
      %1260 = vmatprep.subr.mxu0 0.0
      %1261 = vmatpush1.msra.mxu0 0.0
      %1262 = vmatprep.subr.mxu0 0.0
      %1263 = vmatpush1.msra.mxu0 0.0
      %1264 = vmatprep.subr.mxu0 0.0
      %1265 = vmatpush1.msra.mxu0 0.0
      %1266 = vmatprep.subr.mxu0 0.0
      %1267 = vmatpush1.msra.mxu0 0.0
      %1268 = vmatprep.subr.mxu0 0.0
      %1269 = vmatpush1.msra.mxu0 0.0
      %1270 = vmatprep.subr.mxu0 0.0
      %1271 = vmatpush1.msra.mxu0 0.0
      %1272 = vmatprep.subr.mxu0 0.0
      %1273 = vmatpush1.msra.mxu0 0.0
      %1274 = vmatprep.subr.mxu0 0.0
      %1275 = vmatpush1.msra.mxu0 0.0
      %1276 = vmatprep.subr.mxu0 0.0
      %1277 = vmatpush1.msra.mxu0 0.0
      %1278 = vmatprep.subr.mxu0 0.0
      %1279 = vmatpush1.msra.mxu0 0.0
      %1280 = vmatprep.subr.mxu0 0.0
      %1281 = vmatpush1.msra.mxu0 0.0
      %1282 = vmatprep.subr.mxu0 0.0
      %1283 = vmatpush1.msra.mxu0 0.0
      %1284 = vmatprep.subr.mxu0 0.0
      %1285 = vmatpush1.msra.mxu0 0.0
      %1286 = vmatprep.subr.mxu0 0.0
      %1287 = vmatpush1.msra.mxu0 0.0
      %1288 = vmatprep.subr.mxu0 0.0
      %1289 = vmatpush1.msra.mxu0 0.0
      %1290 = vmatprep.subr.mxu0 0.0
      %1291 = vmatpush1.msra.mxu0 0.0
      %1292 = vmatprep.subr.mxu0 0.0
      %1293 = vmatpush1.msra.mxu0 0.0
      %1294 = vmatprep.subr.mxu0 0.0
      %1295 = vmatpush1.msra.mxu0 0.0
      %1296 = vmatprep.subr.mxu0 0.0
      %1297 = vmatpush1.msra.mxu0 0.0
      %1298 = vmatprep.subr.mxu0 0.0
      %1299 = vmatpush1.msra.mxu0 0.0
      %1300 = vmatprep.subr.mxu0 0.0
      %1301 = vmatpush1.msra.mxu0 0.0
      %1302 = vmatprep.mubr.f32.mxu0 0.0
      %1303 = vmatmul.mubr.f32.gmra.mrb[0].mxu0 %v1188
      %v1304 = vpop.f32.mrb[0].mxu0
      %v1305 = vadd.f32 0.0, %v1304
      %v1306 = vpop.f32.mrb[0].mxu0
      %1307 = vmatprep.mubr.f32.mxu0 0.0
      %1308 = vmatmul.mubr.f32.gmra.mrb[0].mxu0 %v1191
      %v1309 = vpop.f32.mrb[0].mxu0
      %v1310 = vadd.f32 0.0, %v1309
      %v1311 = vpop.f32.mrb[0].mxu0
      %1312 = vmatprep.mubr.f32.mxu0 0.0
      %1313 = vmatmul.mubr.f32.gmra.mrb[0].mxu0 %v1194
      %v1314 = vpop.f32.mrb[0].mxu0
      %v1315 = vadd.f32 0.0, %v1314
      %v1316 = vpop.f32.mrb[0].mxu0
      %1317 = vmatprep.mubr.f32.mxu0 0.0
      %1318 = vmatmul.mubr.f32.gmra.mrb[0].mxu0 %v1197
      %v1319 = vpop.f32.mrb[0].mxu0
      %v1320 = vadd.f32 0.0, %v1319
      %v1321 = vpop.f32.mrb[0].mxu0
      %1322 = vmatprep.mubr.f32.mxu0 0.0
      %1323 = vmatmul.mubr.f32.gmra.mrb[0].mxu0 %v1200
      %v1324 = vpop.f32.mrb[0].mxu0
      %v1325 = vadd.f32 0.0, %v1324
      %v1326 = vpop.f32.mrb[0].mxu0
      %1327 = vmatprep.mubr.f32.mxu0 0.0
      %1328 = vmatmul.mubr.f32.gmra.mrb[0].mxu0 %v1203
      %v1329 = vpop.f32.mrb[0].mxu0
      %v1330 = vadd.f32 0.0, %v1329
      %v1331 = vpop.f32.mrb[0].mxu0
      %1332 = vmatprep.mubr.f32.mxu0 0.0
      %1333 = vmatmul.mubr.f32.gmra.mrb[0].mxu0 %v1206
      %v1334 = vpop.f32.mrb[0].mxu0
      %v1335 = vadd.f32 0.0, %v1334
      %v1336 = vpop.f32.mrb[0].mxu0
      %1337 = vmatprep.mubr.f32.mxu0 0.0
      %1338 = vmatmul.mubr.f32.gmra.mrb[0].mxu0 %v1209
      %v1339 = vpop.f32.mrb[0].mxu0
      %v1340 = vadd.f32 0.0, %v1339
      %v1341 = vpop.f32.mrb[0].mxu0
      %1342 = vmatprep.mubr.f32.mxu0 0.0
      %1343 = vmatmul.mubr.f32.gmra.mrb[0].mxu0 %v1212
      %v1344 = vpop.f32.mrb[0].mxu0
      %v1345 = vadd.f32 0.0, %v1344
      %v1346 = vpop.f32.mrb[0].mxu0
      %1347 = vmatprep.mubr.f32.mxu0 0.0
      %1348 = vmatmul.mubr.f32.gmra.mrb[0].mxu0 %v1215
      %v1349 = vpop.f32.mrb[0].mxu0
      %v1350 = vadd.f32 0.0, %v1349
      %v1351 = vpop.f32.mrb[0].mxu0
      %1352 = vmatprep.mubr.f32.mxu0 0.0
      %1353 = vmatmul.mubr.f32.gmra.mrb[0].mxu0 %v1218
      %v1354 = vpop.f32.mrb[0].mxu0
      %v1355 = vadd.f32 0.0, %v1354
      %v1356 = vpop.f32.mrb[0].mxu0
      %1357 = vmatprep.mubr.f32.mxu0 0.0
      %1358 = vmatmul.mubr.f32.gmra.mrb[0].mxu0 %v1221
      %v1359 = vpop.f32.mrb[0].mxu0
      %v1360 = vadd.f32 0.0, %v1359
      %v1361 = vpop.f32.mrb[0].mxu0
      %1362 = vmatprep.mubr.f32.mxu0 0.0
      %1363 = vmatmul.mubr.f32.gmra.mrb[0].mxu0 %v1224
      %v1364 = vpop.f32.mrb[0].mxu0
      %v1365 = vadd.f32 0.0, %v1364
      %v1366 = vpop.f32.mrb[0].mxu0
      %1367 = vmatprep.mubr.f32.mxu0 0.0
      %1368 = vmatmul.mubr.f32.gmra.mrb[0].mxu0 %v1227
      %v1369 = vpop.f32.mrb[0].mxu0
      %v1370 = vadd.f32 0.0, %v1369
      %v1371 = vpop.f32.mrb[0].mxu0
      %1372 = vmatprep.mubr.f32.mxu0 0.0
      %1373 = vmatmul.mubr.f32.gmra.mrb[0].mxu0 %v1230
      %v1374 = vpop.f32.mrb[0].mxu0
      %v1375 = vadd.f32 0.0, %v1374
      %v1376 = vpop.f32.mrb[0].mxu0
      %1377 = vmatprep.mubr.f32.mxu0 0.0
      %1378 = vmatmul.mubr.f32.gmra.mrb[0].mxu0 %v1233
      %v1379 = vpop.f32.mrb[0].mxu0
      %v1380 = vadd.f32 0.0, %v1379
      %v1381 = vpop.f32.mrb[0].mxu0
      %1382 = vmatprep.mubr.f32.mxu0 0.0
      %1383 = vmatmul.mubr.f32.gmra.mrb[0].mxu0 %v1236
      %v1384 = vpop.f32.mrb[0].mxu0
      %v1385 = vadd.f32 0.0, %v1384
      %v1386 = vpop.f32.mrb[0].mxu0
      %1387 = vdwg.mxu0
      %v1388 = vadd.f32 %v1084, %v1305
      %v1389 = vadd.f32 %v1089, %v1310
      %v1390 = vadd.f32 %v1094, %v1315
      %v1391 = vadd.f32 %v1099, %v1320
      %v1392 = vadd.f32 %v1104, %v1325
      %v1393 = vadd.f32 %v1109, %v1330
      %v1394 = vadd.f32 %v1114, %v1335
      %v1395 = vadd.f32 %v1119, %v1340
      %v1396 = vadd.f32 %v1124, %v1345
      %v1397 = vadd.f32 %v1129, %v1350
      %v1398 = vadd.f32 %v1134, %v1355
      %v1399 = vadd.f32 %v1139, %v1360
      %v1400 = vadd.f32 %v1144, %v1365
      %v1401 = vadd.f32 %v1149, %v1370
      %v1402 = vadd.f32 %v1154, %v1375
      %v1403 = vadd.f32 %v1159, %v1380
      %v1404 = vadd.f32 %v1164, %v1385
      %v1405 = vld [vmem:[#allocation2 + $0x17] sm:$0xff]
      %v1406 = vld [vmem:[#allocation2 + $0x1f] sm:$0xff]
      %v1407 = vld [vmem:[#allocation2 + $0x27] sm:$0xff]
      %v1408 = vld [vmem:[#allocation2 + $0x2f] sm:$0xff]
      %v1409 = vld [vmem:[#allocation2 + $0x37] sm:$0xff]
      %v1410 = vld [vmem:[#allocation2 + $0x3f] sm:$0xff]
      %v1411 = vld [vmem:[#allocation2 + $0x47] sm:$0xff]
      %v1412 = vld [vmem:[#allocation2 + $0x4f] sm:$0xff]
      %v1413 = vld [vmem:[#allocation2 + $0x57] sm:$0xff]
      %v1414 = vld [vmem:[#allocation2 + $0x5f] sm:$0xff]
      %v1415 = vld [vmem:[#allocation2 + $0x67] sm:$0xff]
      %v1416 = vld [vmem:[#allocation2 + $0x6f] sm:$0xff]
      %v1417 = vld [vmem:[#allocation2 + $0x77] sm:$0xff]
      %v1418 = vld [vmem:[#allocation2 + $0x7f] sm:$0xff]
      %v1419 = vld [vmem:[#allocation2 + $0x87] sm:$0xff]
      %v1420 = vld [vmem:[#allocation2 + $0x8f] sm:$0xff]
      %v1421 = vld [vmem:[#allocation2 + $0x97] sm:$0xff]
      %s1422 = scalar_lea.vmem %s3, 48
      %v1423 = vld [vmem:[%s1422] sm:$0xff]
      %v1424 = vld [vmem:[%s1422 + $0x8] sm:$0xff]
      %v1425 = vld [vmem:[#allocation2 + $0x18] sm:$0xff]
      %v1426 = vld [vmem:[#allocation2 + $0x20] sm:$0xff]
      %v1427 = vld [vmem:[#allocation2 + $0x28] sm:$0xff]
      %v1428 = vld [vmem:[#allocation2 + $0x30] sm:$0xff]
      %v1429 = vld [vmem:[#allocation2 + $0x38] sm:$0xff]
      %v1430 = vld [vmem:[#allocation2 + $0x40] sm:$0xff]
      %v1431 = vld [vmem:[#allocation2 + $0x48] sm:$0xff]
      %v1432 = vld [vmem:[#allocation2 + $0x50] sm:$0xff]
      %v1433 = vld [vmem:[#allocation2 + $0x58] sm:$0xff]
      %v1434 = vld [vmem:[#allocation2 + $0x60] sm:$0xff]
      %v1435 = vld [vmem:[#allocation2 + $0x68] sm:$0xff]
      %v1436 = vld [vmem:[#allocation2 + $0x70] sm:$0xff]
      %v1437 = vld [vmem:[#allocation2 + $0x78] sm:$0xff]
      %v1438 = vld [vmem:[#allocation2 + $0x80] sm:$0xff]
      %v1439 = vld [vmem:[#allocation2 + $0x88] sm:$0xff]
      %v1440 = vld [vmem:[#allocation2 + $0x90] sm:$0xff]
      %v1441 = vld [vmem:[#allocation2 + $0x98] sm:$0xff]
      %s1442 = scalar_lea.vmem %s3, 64
      %v1443 = vld [vmem:[%s1442] sm:$0xff]
      %v1444 = vld [vmem:[%s1442 + $0x8] sm:$0xff]
      %v1446 = vsel %vm543, %v1425, 0
      %v1449 = vsel %vm543, %v1426, 0
      %v1452 = vsel %vm543, %v1427, 0
      %v1455 = vsel %vm543, %v1428, 0
      %v1458 = vsel %vm543, %v1429, 0
      %v1461 = vsel %vm543, %v1430, 0
      %v1464 = vsel %vm543, %v1431, 0
      %v1467 = vsel %vm543, %v1432, 0
      %v1470 = vsel %vm543, %v1433, 0
      %v1473 = vsel %vm543, %v1434, 0
      %v1476 = vsel %vm543, %v1435, 0
      %v1479 = vsel %vm543, %v1436, 0
      %v1482 = vsel %vm543, %v1437, 0
      %v1485 = vsel %vm543, %v1438, 0
      %v1488 = vsel %vm543, %v1439, 0
      %v1491 = vsel %vm543, %v1440, 0
      %v1494 = vsel %vm543, %v1441, 0
      %1496 = vmatprep.subr.mxu0 0.0
      %1497 = vmatpush1.msra.mxu0 %v1443
      %1498 = vmatprep.subr.mxu0 0.0
      %1499 = vmatpush1.msra.mxu0 %v1444
      %1500 = vmatprep.subr.mxu0 0.0
      %1501 = vmatpush1.msra.mxu0 0.0
      %1502 = vmatprep.subr.mxu0 0.0
      %1503 = vmatpush1.msra.mxu0 0.0
      %1504 = vmatprep.subr.mxu0 0.0
      %1505 = vmatpush1.msra.mxu0 0.0
      %1506 = vmatprep.subr.mxu0 0.0
      %1507 = vmatpush1.msra.mxu0 0.0
      %1508 = vmatprep.subr.mxu0 0.0
      %1509 = vmatpush1.msra.mxu0 0.0
      %1510 = vmatprep.subr.mxu0 0.0
      %1511 = vmatpush1.msra.mxu0 0.0
      %1512 = vmatprep.subr.mxu0 0.0
      %1513 = vmatpush1.msra.mxu0 0.0
      %1514 = vmatprep.subr.mxu0 0.0
      %1515 = vmatpush1.msra.mxu0 0.0
      %1516 = vmatprep.subr.mxu0 0.0
      %1517 = vmatpush1.msra.mxu0 0.0
      %1518 = vmatprep.subr.mxu0 0.0
      %1519 = vmatpush1.msra.mxu0 0.0
      %1520 = vmatprep.subr.mxu0 0.0
      %1521 = vmatpush1.msra.mxu0 0.0
      %1522 = vmatprep.subr.mxu0 0.0
      %1523 = vmatpush1.msra.mxu0 0.0
      %1524 = vmatprep.subr.mxu0 0.0
      %1525 = vmatpush1.msra.mxu0 0.0
      %1526 = vmatprep.subr.mxu0 0.0
      %1527 = vmatpush1.msra.mxu0 0.0
      %1528 = vmatprep.subr.mxu0 0.0
      %1529 = vmatpush1.msra.mxu0 0.0
      %1530 = vmatprep.subr.mxu0 0.0
      %1531 = vmatpush1.msra.mxu0 0.0
      %1532 = vmatprep.subr.mxu0 0.0
      %1533 = vmatpush1.msra.mxu0 0.0
      %1534 = vmatprep.subr.mxu0 0.0
      %1535 = vmatpush1.msra.mxu0 0.0
      %1536 = vmatprep.subr.mxu0 0.0
      %1537 = vmatpush1.msra.mxu0 0.0
      %1538 = vmatprep.subr.mxu0 0.0
      %1539 = vmatpush1.msra.mxu0 0.0
      %1540 = vmatprep.subr.mxu0 0.0
      %1541 = vmatpush1.msra.mxu0 0.0
      %1542 = vmatprep.subr.mxu0 0.0
      %1543 = vmatpush1.msra.mxu0 0.0
      %1544 = vmatprep.subr.mxu0 0.0
      %1545 = vmatpush1.msra.mxu0 0.0
      %1546 = vmatprep.subr.mxu0 0.0
      %1547 = vmatpush1.msra.mxu0 0.0
      %1548 = vmatprep.subr.mxu0 0.0
      %1549 = vmatpush1.msra.mxu0 0.0
      %1550 = vmatprep.subr.mxu0 0.0
      %1551 = vmatpush1.msra.mxu0 0.0
      %1552 = vmatprep.subr.mxu0 0.0
      %1553 = vmatpush1.msra.mxu0 0.0
      %1554 = vmatprep.subr.mxu0 0.0
      %1555 = vmatpush1.msra.mxu0 0.0
      %1556 = vmatprep.subr.mxu0 0.0
      %1557 = vmatpush1.msra.mxu0 0.0
      %1558 = vmatprep.subr.mxu0 0.0
      %1559 = vmatpush1.msra.mxu0 0.0
      %1560 = vmatprep.mubr.f32.mxu0 0.0
      %1561 = vmatmul.mubr.f32.gmra.mrb[0].mxu0 %v1446
      %v1562 = vpop.f32.mrb[0].mxu0
      %v1563 = vadd.f32 0.0, %v1562
      %v1564 = vpop.f32.mrb[0].mxu0
      %1565 = vmatprep.mubr.f32.mxu0 0.0
      %1566 = vmatmul.mubr.f32.gmra.mrb[0].mxu0 %v1449
      %v1567 = vpop.f32.mrb[0].mxu0
      %v1568 = vadd.f32 0.0, %v1567
      %v1569 = vpop.f32.mrb[0].mxu0
      %1570 = vmatprep.mubr.f32.mxu0 0.0
      %1571 = vmatmul.mubr.f32.gmra.mrb[0].mxu0 %v1452
      %v1572 = vpop.f32.mrb[0].mxu0
      %v1573 = vadd.f32 0.0, %v1572
      %v1574 = vpop.f32.mrb[0].mxu0
      %1575 = vmatprep.mubr.f32.mxu0 0.0
      %1576 = vmatmul.mubr.f32.gmra.mrb[0].mxu0 %v1455
      %v1577 = vpop.f32.mrb[0].mxu0
      %v1578 = vadd.f32 0.0, %v1577
      %v1579 = vpop.f32.mrb[0].mxu0
      %1580 = vmatprep.mubr.f32.mxu0 0.0
      %1581 = vmatmul.mubr.f32.gmra.mrb[0].mxu0 %v1458
      %v1582 = vpop.f32.mrb[0].mxu0
      %v1583 = vadd.f32 0.0, %v1582
      %v1584 = vpop.f32.mrb[0].mxu0
      %1585 = vmatprep.mubr.f32.mxu0 0.0
      %1586 = vmatmul.mubr.f32.gmra.mrb[0].mxu0 %v1461
      %v1587 = vpop.f32.mrb[0].mxu0
      %v1588 = vadd.f32 0.0, %v1587
      %v1589 = vpop.f32.mrb[0].mxu0
      %1590 = vmatprep.mubr.f32.mxu0 0.0
      %1591 = vmatmul.mubr.f32.gmra.mrb[0].mxu0 %v1464
      %v1592 = vpop.f32.mrb[0].mxu0
      %v1593 = vadd.f32 0.0, %v1592
      %v1594 = vpop.f32.mrb[0].mxu0
      %1595 = vmatprep.mubr.f32.mxu0 0.0
      %1596 = vmatmul.mubr.f32.gmra.mrb[0].mxu0 %v1467
      %v1597 = vpop.f32.mrb[0].mxu0
      %v1598 = vadd.f32 0.0, %v1597
      %v1599 = vpop.f32.mrb[0].mxu0
      %1600 = vmatprep.mubr.f32.mxu0 0.0
      %1601 = vmatmul.mubr.f32.gmra.mrb[0].mxu0 %v1470
      %v1602 = vpop.f32.mrb[0].mxu0
      %v1603 = vadd.f32 0.0, %v1602
      %v1604 = vpop.f32.mrb[0].mxu0
      %1605 = vmatprep.mubr.f32.mxu0 0.0
      %1606 = vmatmul.mubr.f32.gmra.mrb[0].mxu0 %v1473
      %v1607 = vpop.f32.mrb[0].mxu0
      %v1608 = vadd.f32 0.0, %v1607
      %v1609 = vpop.f32.mrb[0].mxu0
      %1610 = vmatprep.mubr.f32.mxu0 0.0
      %1611 = vmatmul.mubr.f32.gmra.mrb[0].mxu0 %v1476
      %v1612 = vpop.f32.mrb[0].mxu0
      %v1613 = vadd.f32 0.0, %v1612
      %v1614 = vpop.f32.mrb[0].mxu0
      %1615 = vmatprep.mubr.f32.mxu0 0.0
      %1616 = vmatmul.mubr.f32.gmra.mrb[0].mxu0 %v1479
      %v1617 = vpop.f32.mrb[0].mxu0
      %v1618 = vadd.f32 0.0, %v1617
      %v1619 = vpop.f32.mrb[0].mxu0
      %1620 = vmatprep.mubr.f32.mxu0 0.0
      %1621 = vmatmul.mubr.f32.gmra.mrb[0].mxu0 %v1482
      %v1622 = vpop.f32.mrb[0].mxu0
      %v1623 = vadd.f32 0.0, %v1622
      %v1624 = vpop.f32.mrb[0].mxu0
      %1625 = vmatprep.mubr.f32.mxu0 0.0
      %1626 = vmatmul.mubr.f32.gmra.mrb[0].mxu0 %v1485
      %v1627 = vpop.f32.mrb[0].mxu0
      %v1628 = vadd.f32 0.0, %v1627
      %v1629 = vpop.f32.mrb[0].mxu0
      %1630 = vmatprep.mubr.f32.mxu0 0.0
      %1631 = vmatmul.mubr.f32.gmra.mrb[0].mxu0 %v1488
      %v1632 = vpop.f32.mrb[0].mxu0
      %v1633 = vadd.f32 0.0, %v1632
      %v1634 = vpop.f32.mrb[0].mxu0
      %1635 = vmatprep.mubr.f32.mxu0 0.0
      %1636 = vmatmul.mubr.f32.gmra.mrb[0].mxu0 %v1491
      %v1637 = vpop.f32.mrb[0].mxu0
      %v1638 = vadd.f32 0.0, %v1637
      %v1639 = vpop.f32.mrb[0].mxu0
      %1640 = vmatprep.mubr.f32.mxu0 0.0
      %1641 = vmatmul.mubr.f32.gmra.mrb[0].mxu0 %v1494
      %v1642 = vpop.f32.mrb[0].mxu0
      %v1643 = vadd.f32 0.0, %v1642
      %v1644 = vpop.f32.mrb[0].mxu0
      %1645 = vdwg.mxu0
      %v1647 = vsel %vm543, %v1405, 0
      %v1650 = vsel %vm543, %v1406, 0
      %v1653 = vsel %vm543, %v1407, 0
      %v1656 = vsel %vm543, %v1408, 0
      %v1659 = vsel %vm543, %v1409, 0
      %v1662 = vsel %vm543, %v1410, 0
      %v1665 = vsel %vm543, %v1411, 0
      %v1668 = vsel %vm543, %v1412, 0
      %v1671 = vsel %vm543, %v1413, 0
      %v1674 = vsel %vm543, %v1414, 0
      %v1677 = vsel %vm543, %v1415, 0
      %v1680 = vsel %vm543, %v1416, 0
      %v1683 = vsel %vm543, %v1417, 0
      %v1686 = vsel %vm543, %v1418, 0
      %v1689 = vsel %vm543, %v1419, 0
      %v1692 = vsel %vm543, %v1420, 0
      %v1695 = vsel %vm543, %v1421, 0
      %1697 = vmatprep.subr.mxu0 0.0
      %1698 = vmatpush1.msra.mxu0 %v1423
      %1699 = vmatprep.subr.mxu0 0.0
      %1700 = vmatpush1.msra.mxu0 %v1424
      %1701 = vmatprep.subr.mxu0 0.0
      %1702 = vmatpush1.msra.mxu0 0.0
      %1703 = vmatprep.subr.mxu0 0.0
      %1704 = vmatpush1.msra.mxu0 0.0
      %1705 = vmatprep.subr.mxu0 0.0
      %1706 = vmatpush1.msra.mxu0 0.0
      %1707 = vmatprep.subr.mxu0 0.0
      %1708 = vmatpush1.msra.mxu0 0.0
      %1709 = vmatprep.subr.mxu0 0.0
      %1710 = vmatpush1.msra.mxu0 0.0
      %1711 = vmatprep.subr.mxu0 0.0
      %1712 = vmatpush1.msra.mxu0 0.0
      %1713 = vmatprep.subr.mxu0 0.0
      %1714 = vmatpush1.msra.mxu0 0.0
      %1715 = vmatprep.subr.mxu0 0.0
      %1716 = vmatpush1.msra.mxu0 0.0
      %1717 = vmatprep.subr.mxu0 0.0
      %1718 = vmatpush1.msra.mxu0 0.0
      %1719 = vmatprep.subr.mxu0 0.0
      %1720 = vmatpush1.msra.mxu0 0.0
      %1721 = vmatprep.subr.mxu0 0.0
      %1722 = vmatpush1.msra.mxu0 0.0
      %1723 = vmatprep.subr.mxu0 0.0
      %1724 = vmatpush1.msra.mxu0 0.0
      %1725 = vmatprep.subr.mxu0 0.0
      %1726 = vmatpush1.msra.mxu0 0.0
      %1727 = vmatprep.subr.mxu0 0.0
      %1728 = vmatpush1.msra.mxu0 0.0
      %1729 = vmatprep.subr.mxu0 0.0
      %1730 = vmatpush1.msra.mxu0 0.0
      %1731 = vmatprep.subr.mxu0 0.0
      %1732 = vmatpush1.msra.mxu0 0.0
      %1733 = vmatprep.subr.mxu0 0.0
      %1734 = vmatpush1.msra.mxu0 0.0
      %1735 = vmatprep.subr.mxu0 0.0
      %1736 = vmatpush1.msra.mxu0 0.0
      %1737 = vmatprep.subr.mxu0 0.0
      %1738 = vmatpush1.msra.mxu0 0.0
      %1739 = vmatprep.subr.mxu0 0.0
      %1740 = vmatpush1.msra.mxu0 0.0
      %1741 = vmatprep.subr.mxu0 0.0
      %1742 = vmatpush1.msra.mxu0 0.0
      %1743 = vmatprep.subr.mxu0 0.0
      %1744 = vmatpush1.msra.mxu0 0.0
      %1745 = vmatprep.subr.mxu0 0.0
      %1746 = vmatpush1.msra.mxu0 0.0
      %1747 = vmatprep.subr.mxu0 0.0
      %1748 = vmatpush1.msra.mxu0 0.0
      %1749 = vmatprep.subr.mxu0 0.0
      %1750 = vmatpush1.msra.mxu0 0.0
      %1751 = vmatprep.subr.mxu0 0.0
      %1752 = vmatpush1.msra.mxu0 0.0
      %1753 = vmatprep.subr.mxu0 0.0
      %1754 = vmatpush1.msra.mxu0 0.0
      %1755 = vmatprep.subr.mxu0 0.0
      %1756 = vmatpush1.msra.mxu0 0.0
      %1757 = vmatprep.subr.mxu0 0.0
      %1758 = vmatpush1.msra.mxu0 0.0
      %1759 = vmatprep.subr.mxu0 0.0
      %1760 = vmatpush1.msra.mxu0 0.0
      %1761 = vmatprep.mubr.f32.mxu0 0.0
      %1762 = vmatmul.mubr.f32.gmra.mrb[0].mxu0 %v1647
      %v1763 = vpop.f32.mrb[0].mxu0
      %v1764 = vadd.f32 %v1563, %v1763
      %v1765 = vpop.f32.mrb[0].mxu0
      %1766 = vmatprep.mubr.f32.mxu0 0.0
      %1767 = vmatmul.mubr.f32.gmra.mrb[0].mxu0 %v1650
      %v1768 = vpop.f32.mrb[0].mxu0
      %v1769 = vadd.f32 %v1568, %v1768
      %v1770 = vpop.f32.mrb[0].mxu0
      %1771 = vmatprep.mubr.f32.mxu0 0.0
      %1772 = vmatmul.mubr.f32.gmra.mrb[0].mxu0 %v1653
      %v1773 = vpop.f32.mrb[0].mxu0
      %v1774 = vadd.f32 %v1573, %v1773
      %v1775 = vpop.f32.mrb[0].mxu0
      %1776 = vmatprep.mubr.f32.mxu0 0.0
      %1777 = vmatmul.mubr.f32.gmra.mrb[0].mxu0 %v1656
      %v1778 = vpop.f32.mrb[0].mxu0
      %v1779 = vadd.f32 %v1578, %v1778
      %v1780 = vpop.f32.mrb[0].mxu0
      %1781 = vmatprep.mubr.f32.mxu0 0.0
      %1782 = vmatmul.mubr.f32.gmra.mrb[0].mxu0 %v1659
      %v1783 = vpop.f32.mrb[0].mxu0
      %v1784 = vadd.f32 %v1583, %v1783
      %v1785 = vpop.f32.mrb[0].mxu0
      %1786 = vmatprep.mubr.f32.mxu0 0.0
      %1787 = vmatmul.mubr.f32.gmra.mrb[0].mxu0 %v1662
      %v1788 = vpop.f32.mrb[0].mxu0
      %v1789 = vadd.f32 %v1588, %v1788
      %v1790 = vpop.f32.mrb[0].mxu0
      %1791 = vmatprep.mubr.f32.mxu0 0.0
      %1792 = vmatmul.mubr.f32.gmra.mrb[0].mxu0 %v1665
      %v1793 = vpop.f32.mrb[0].mxu0
      %v1794 = vadd.f32 %v1593, %v1793
      %v1795 = vpop.f32.mrb[0].mxu0
      %1796 = vmatprep.mubr.f32.mxu0 0.0
      %1797 = vmatmul.mubr.f32.gmra.mrb[0].mxu0 %v1668
      %v1798 = vpop.f32.mrb[0].mxu0
      %v1799 = vadd.f32 %v1598, %v1798
      %v1800 = vpop.f32.mrb[0].mxu0
      %1801 = vmatprep.mubr.f32.mxu0 0.0
      %1802 = vmatmul.mubr.f32.gmra.mrb[0].mxu0 %v1671
      %v1803 = vpop.f32.mrb[0].mxu0
      %v1804 = vadd.f32 %v1603, %v1803
      %v1805 = vpop.f32.mrb[0].mxu0
      %1806 = vmatprep.mubr.f32.mxu0 0.0
      %1807 = vmatmul.mubr.f32.gmra.mrb[0].mxu0 %v1674
      %v1808 = vpop.f32.mrb[0].mxu0
      %v1809 = vadd.f32 %v1608, %v1808
      %v1810 = vpop.f32.mrb[0].mxu0
      %1811 = vmatprep.mubr.f32.mxu0 0.0
      %1812 = vmatmul.mubr.f32.gmra.mrb[0].mxu0 %v1677
      %v1813 = vpop.f32.mrb[0].mxu0
      %v1814 = vadd.f32 %v1613, %v1813
      %v1815 = vpop.f32.mrb[0].mxu0
      %1816 = vmatprep.mubr.f32.mxu0 0.0
      %1817 = vmatmul.mubr.f32.gmra.mrb[0].mxu0 %v1680
      %v1818 = vpop.f32.mrb[0].mxu0
      %v1819 = vadd.f32 %v1618, %v1818
      %v1820 = vpop.f32.mrb[0].mxu0
      %1821 = vmatprep.mubr.f32.mxu0 0.0
      %1822 = vmatmul.mubr.f32.gmra.mrb[0].mxu0 %v1683
      %v1823 = vpop.f32.mrb[0].mxu0
      %v1824 = vadd.f32 %v1623, %v1823
      %v1825 = vpop.f32.mrb[0].mxu0
      %1826 = vmatprep.mubr.f32.mxu0 0.0
      %1827 = vmatmul.mubr.f32.gmra.mrb[0].mxu0 %v1686
      %v1828 = vpop.f32.mrb[0].mxu0
      %v1829 = vadd.f32 %v1628, %v1828
      %v1830 = vpop.f32.mrb[0].mxu0
      %1831 = vmatprep.mubr.f32.mxu0 0.0
      %1832 = vmatmul.mubr.f32.gmra.mrb[0].mxu0 %v1689
      %v1833 = vpop.f32.mrb[0].mxu0
      %v1834 = vadd.f32 %v1633, %v1833
      %v1835 = vpop.f32.mrb[0].mxu0
      %1836 = vmatprep.mubr.f32.mxu0 0.0
      %1837 = vmatmul.mubr.f32.gmra.mrb[0].mxu0 %v1692
      %v1838 = vpop.f32.mrb[0].mxu0
      %v1839 = vadd.f32 %v1638, %v1838
      %v1840 = vpop.f32.mrb[0].mxu0
      %1841 = vmatprep.mubr.f32.mxu0 0.0
      %1842 = vmatmul.mubr.f32.gmra.mrb[0].mxu0 %v1695
      %v1843 = vpop.f32.mrb[0].mxu0
      %v1844 = vadd.f32 %v1643, %v1843
      %v1845 = vpop.f32.mrb[0].mxu0
      %1846 = vdwg.mxu0
      %v1847 = vld [vmem:[#allocation2 + $0x19] sm:$0xff]
      %v1848 = vld [vmem:[#allocation2 + $0x21] sm:$0xff]
      %v1849 = vld [vmem:[#allocation2 + $0x29] sm:$0xff]
      %v1850 = vld [vmem:[#allocation2 + $0x31] sm:$0xff]
      %v1851 = vld [vmem:[#allocation2 + $0x39] sm:$0xff]
      %v1852 = vld [vmem:[#allocation2 + $0x41] sm:$0xff]
      %v1853 = vld [vmem:[#allocation2 + $0x49] sm:$0xff]
      %v1854 = vld [vmem:[#allocation2 + $0x51] sm:$0xff]
      %v1855 = vld [vmem:[#allocation2 + $0x59] sm:$0xff]
      %v1856 = vld [vmem:[#allocation2 + $0x61] sm:$0xff]
      %v1857 = vld [vmem:[#allocation2 + $0x69] sm:$0xff]
      %v1858 = vld [vmem:[#allocation2 + $0x71] sm:$0xff]
      %v1859 = vld [vmem:[#allocation2 + $0x79] sm:$0xff]
      %v1860 = vld [vmem:[#allocation2 + $0x81] sm:$0xff]
      %v1861 = vld [vmem:[#allocation2 + $0x89] sm:$0xff]
      %v1862 = vld [vmem:[#allocation2 + $0x91] sm:$0xff]
      %v1863 = vld [vmem:[#allocation2 + $0x99] sm:$0xff]
      %s1864 = scalar_lea.vmem %s3, 80
      %v1865 = vld [vmem:[%s1864] sm:$0xff]
      %v1866 = vld [vmem:[%s1864 + $0x8] sm:$0xff]
      %v1868 = vsel %vm543, %v1847, 0
      %v1871 = vsel %vm543, %v1848, 0
      %v1874 = vsel %vm543, %v1849, 0
      %v1877 = vsel %vm543, %v1850, 0
      %v1880 = vsel %vm543, %v1851, 0
      %v1883 = vsel %vm543, %v1852, 0
      %v1886 = vsel %vm543, %v1853, 0
      %v1889 = vsel %vm543, %v1854, 0
      %v1892 = vsel %vm543, %v1855, 0
      %v1895 = vsel %vm543, %v1856, 0
      %v1898 = vsel %vm543, %v1857, 0
      %v1901 = vsel %vm543, %v1858, 0
      %v1904 = vsel %vm543, %v1859, 0
      %v1907 = vsel %vm543, %v1860, 0
      %v1910 = vsel %vm543, %v1861, 0
      %v1913 = vsel %vm543, %v1862, 0
      %v1916 = vsel %vm543, %v1863, 0
      %1918 = vmatprep.subr.mxu0 0.0
      %1919 = vmatpush1.msra.mxu0 %v1865
      %1920 = vmatprep.subr.mxu0 0.0
      %1921 = vmatpush1.msra.mxu0 %v1866
      %1922 = vmatprep.subr.mxu0 0.0
      %1923 = vmatpush1.msra.mxu0 0.0
      %1924 = vmatprep.subr.mxu0 0.0
      %1925 = vmatpush1.msra.mxu0 0.0
      %1926 = vmatprep.subr.mxu0 0.0
      %1927 = vmatpush1.msra.mxu0 0.0
      %1928 = vmatprep.subr.mxu0 0.0
      %1929 = vmatpush1.msra.mxu0 0.0
      %1930 = vmatprep.subr.mxu0 0.0
      %1931 = vmatpush1.msra.mxu0 0.0
      %1932 = vmatprep.subr.mxu0 0.0
      %1933 = vmatpush1.msra.mxu0 0.0
      %1934 = vmatprep.subr.mxu0 0.0
      %1935 = vmatpush1.msra.mxu0 0.0
      %1936 = vmatprep.subr.mxu0 0.0
      %1937 = vmatpush1.msra.mxu0 0.0
      %1938 = vmatprep.subr.mxu0 0.0
      %1939 = vmatpush1.msra.mxu0 0.0
      %1940 = vmatprep.subr.mxu0 0.0
      %1941 = vmatpush1.msra.mxu0 0.0
      %1942 = vmatprep.subr.mxu0 0.0
      %1943 = vmatpush1.msra.mxu0 0.0
      %1944 = vmatprep.subr.mxu0 0.0
      %1945 = vmatpush1.msra.mxu0 0.0
      %1946 = vmatprep.subr.mxu0 0.0
      %1947 = vmatpush1.msra.mxu0 0.0
      %1948 = vmatprep.subr.mxu0 0.0
      %1949 = vmatpush1.msra.mxu0 0.0
      %1950 = vmatprep.subr.mxu0 0.0
      %1951 = vmatpush1.msra.mxu0 0.0
      %1952 = vmatprep.subr.mxu0 0.0
      %1953 = vmatpush1.msra.mxu0 0.0
      %1954 = vmatprep.subr.mxu0 0.0
      %1955 = vmatpush1.msra.mxu0 0.0
      %1956 = vmatprep.subr.mxu0 0.0
      %1957 = vmatpush1.msra.mxu0 0.0
      %1958 = vmatprep.subr.mxu0 0.0
      %1959 = vmatpush1.msra.mxu0 0.0
      %1960 = vmatprep.subr.mxu0 0.0
      %1961 = vmatpush1.msra.mxu0 0.0
      %1962 = vmatprep.subr.mxu0 0.0
      %1963 = vmatpush1.msra.mxu0 0.0
      %1964 = vmatprep.subr.mxu0 0.0
      %1965 = vmatpush1.msra.mxu0 0.0
      %1966 = vmatprep.subr.mxu0 0.0
      %1967 = vmatpush1.msra.mxu0 0.0
      %1968 = vmatprep.subr.mxu0 0.0
      %1969 = vmatpush1.msra.mxu0 0.0
      %1970 = vmatprep.subr.mxu0 0.0
      %1971 = vmatpush1.msra.mxu0 0.0
      %1972 = vmatprep.subr.mxu0 0.0
      %1973 = vmatpush1.msra.mxu0 0.0
      %1974 = vmatprep.subr.mxu0 0.0
      %1975 = vmatpush1.msra.mxu0 0.0
      %1976 = vmatprep.subr.mxu0 0.0
      %1977 = vmatpush1.msra.mxu0 0.0
      %1978 = vmatprep.subr.mxu0 0.0
      %1979 = vmatpush1.msra.mxu0 0.0
      %1980 = vmatprep.subr.mxu0 0.0
      %1981 = vmatpush1.msra.mxu0 0.0
      %1982 = vmatprep.mubr.f32.mxu0 0.0
      %1983 = vmatmul.mubr.f32.gmra.mrb[0].mxu0 %v1868
      %v1984 = vpop.f32.mrb[0].mxu0
      %v1985 = vadd.f32 0.0, %v1984
      %v1986 = vpop.f32.mrb[0].mxu0
      %1987 = vmatprep.mubr.f32.mxu0 0.0
      %1988 = vmatmul.mubr.f32.gmra.mrb[0].mxu0 %v1871
      %v1989 = vpop.f32.mrb[0].mxu0
      %v1990 = vadd.f32 0.0, %v1989
      %v1991 = vpop.f32.mrb[0].mxu0
      %1992 = vmatprep.mubr.f32.mxu0 0.0
      %1993 = vmatmul.mubr.f32.gmra.mrb[0].mxu0 %v1874
      %v1994 = vpop.f32.mrb[0].mxu0
      %v1995 = vadd.f32 0.0, %v1994
      %v1996 = vpop.f32.mrb[0].mxu0
      %1997 = vmatprep.mubr.f32.mxu0 0.0
      %1998 = vmatmul.mubr.f32.gmra.mrb[0].mxu0 %v1877
      %v1999 = vpop.f32.mrb[0].mxu0
      %v2000 = vadd.f32 0.0, %v1999
      %v2001 = vpop.f32.mrb[0].mxu0
      %2002 = vmatprep.mubr.f32.mxu0 0.0
      %2003 = vmatmul.mubr.f32.gmra.mrb[0].mxu0 %v1880
      %v2004 = vpop.f32.mrb[0].mxu0
      %v2005 = vadd.f32 0.0, %v2004
      %v2006 = vpop.f32.mrb[0].mxu0
      %2007 = vmatprep.mubr.f32.mxu0 0.0
      %2008 = vmatmul.mubr.f32.gmra.mrb[0].mxu0 %v1883
      %v2009 = vpop.f32.mrb[0].mxu0
      %v2010 = vadd.f32 0.0, %v2009
      %v2011 = vpop.f32.mrb[0].mxu0
      %2012 = vmatprep.mubr.f32.mxu0 0.0
      %2013 = vmatmul.mubr.f32.gmra.mrb[0].mxu0 %v1886
      %v2014 = vpop.f32.mrb[0].mxu0
      %v2015 = vadd.f32 0.0, %v2014
      %v2016 = vpop.f32.mrb[0].mxu0
      %2017 = vmatprep.mubr.f32.mxu0 0.0
      %2018 = vmatmul.mubr.f32.gmra.mrb[0].mxu0 %v1889
      %v2019 = vpop.f32.mrb[0].mxu0
      %v2020 = vadd.f32 0.0, %v2019
      %v2021 = vpop.f32.mrb[0].mxu0
      %2022 = vmatprep.mubr.f32.mxu0 0.0
      %2023 = vmatmul.mubr.f32.gmra.mrb[0].mxu0 %v1892
      %v2024 = vpop.f32.mrb[0].mxu0
      %v2025 = vadd.f32 0.0, %v2024
      %v2026 = vpop.f32.mrb[0].mxu0
      %2027 = vmatprep.mubr.f32.mxu0 0.0
      %2028 = vmatmul.mubr.f32.gmra.mrb[0].mxu0 %v1895
      %v2029 = vpop.f32.mrb[0].mxu0
      %v2030 = vadd.f32 0.0, %v2029
      %v2031 = vpop.f32.mrb[0].mxu0
      %2032 = vmatprep.mubr.f32.mxu0 0.0
      %2033 = vmatmul.mubr.f32.gmra.mrb[0].mxu0 %v1898
      %v2034 = vpop.f32.mrb[0].mxu0
      %v2035 = vadd.f32 0.0, %v2034
      %v2036 = vpop.f32.mrb[0].mxu0
      %2037 = vmatprep.mubr.f32.mxu0 0.0
      %2038 = vmatmul.mubr.f32.gmra.mrb[0].mxu0 %v1901
      %v2039 = vpop.f32.mrb[0].mxu0
      %v2040 = vadd.f32 0.0, %v2039
      %v2041 = vpop.f32.mrb[0].mxu0
      %2042 = vmatprep.mubr.f32.mxu0 0.0
      %2043 = vmatmul.mubr.f32.gmra.mrb[0].mxu0 %v1904
      %v2044 = vpop.f32.mrb[0].mxu0
      %v2045 = vadd.f32 0.0, %v2044
      %v2046 = vpop.f32.mrb[0].mxu0
      %2047 = vmatprep.mubr.f32.mxu0 0.0
      %2048 = vmatmul.mubr.f32.gmra.mrb[0].mxu0 %v1907
      %v2049 = vpop.f32.mrb[0].mxu0
      %v2050 = vadd.f32 0.0, %v2049
      %v2051 = vpop.f32.mrb[0].mxu0
      %2052 = vmatprep.mubr.f32.mxu0 0.0
      %2053 = vmatmul.mubr.f32.gmra.mrb[0].mxu0 %v1910
      %v2054 = vpop.f32.mrb[0].mxu0
      %v2055 = vadd.f32 0.0, %v2054
      %v2056 = vpop.f32.mrb[0].mxu0
      %2057 = vmatprep.mubr.f32.mxu0 0.0
      %2058 = vmatmul.mubr.f32.gmra.mrb[0].mxu0 %v1913
      %v2059 = vpop.f32.mrb[0].mxu0
      %v2060 = vadd.f32 0.0, %v2059
      %v2061 = vpop.f32.mrb[0].mxu0
      %2062 = vmatprep.mubr.f32.mxu0 0.0
      %2063 = vmatmul.mubr.f32.gmra.mrb[0].mxu0 %v1916
      %v2064 = vpop.f32.mrb[0].mxu0
      %v2065 = vadd.f32 0.0, %v2064
      %v2066 = vpop.f32.mrb[0].mxu0
      %2067 = vdwg.mxu0
      %v2068 = vadd.f32 %v1764, %v1985
      %v2069 = vadd.f32 %v1769, %v1990
      %v2070 = vadd.f32 %v1774, %v1995
      %v2071 = vadd.f32 %v1779, %v2000
      %v2072 = vadd.f32 %v1784, %v2005
      %v2073 = vadd.f32 %v1789, %v2010
      %v2074 = vadd.f32 %v1794, %v2015
      %v2075 = vadd.f32 %v1799, %v2020
      %v2076 = vadd.f32 %v1804, %v2025
      %v2077 = vadd.f32 %v1809, %v2030
      %v2078 = vadd.f32 %v1814, %v2035
      %v2079 = vadd.f32 %v1819, %v2040
      %v2080 = vadd.f32 %v1824, %v2045
      %v2081 = vadd.f32 %v1829, %v2050
      %v2082 = vadd.f32 %v1834, %v2055
      %v2083 = vadd.f32 %v1839, %v2060
      %v2084 = vadd.f32 %v1844, %v2065
      %v2085 = vld [vmem:[#allocation2 + $0x28] sm:$0xff]
      %v2086 = vld [vmem:[#allocation2 + $0x30] sm:$0xff]
      %v2087 = vld [vmem:[#allocation2 + $0x38] sm:$0xff]
      %v2088 = vld [vmem:[#allocation2 + $0x40] sm:$0xff]
      %v2089 = vld [vmem:[#allocation2 + $0x48] sm:$0xff]
      %v2090 = vld [vmem:[#allocation2 + $0x50] sm:$0xff]
      %v2091 = vld [vmem:[#allocation2 + $0x58] sm:$0xff]
      %v2092 = vld [vmem:[#allocation2 + $0x60] sm:$0xff]
      %v2093 = vld [vmem:[#allocation2 + $0x68] sm:$0xff]
      %v2094 = vld [vmem:[#allocation2 + $0x70] sm:$0xff]
      %v2095 = vld [vmem:[#allocation2 + $0x78] sm:$0xff]
      %v2096 = vld [vmem:[#allocation2 + $0x80] sm:$0xff]
      %v2097 = vld [vmem:[#allocation2 + $0x88] sm:$0xff]
      %v2098 = vld [vmem:[#allocation2 + $0x90] sm:$0xff]
      %v2099 = vld [vmem:[#allocation2 + $0x98] sm:$0xff]
      %v2100 = vld [vmem:[#allocation2 + $0xa0] sm:$0xff]
      %v2101 = vld [vmem:[#allocation2 + $0xa8] sm:$0xff]
      %s2102 = scalar_lea.vmem %s3, 96
      %v2103 = vld [vmem:[%s2102] sm:$0xff]
      %v2104 = vld [vmem:[%s2102 + $0x8] sm:$0xff]
      %v2105 = vld [vmem:[#allocation2 + $0x29] sm:$0xff]
      %v2106 = vld [vmem:[#allocation2 + $0x31] sm:$0xff]
      %v2107 = vld [vmem:[#allocation2 + $0x39] sm:$0xff]
      %v2108 = vld [vmem:[#allocation2 + $0x41] sm:$0xff]
      %v2109 = vld [vmem:[#allocation2 + $0x49] sm:$0xff]
      %v2110 = vld [vmem:[#allocation2 + $0x51] sm:$0xff]
      %v2111 = vld [vmem:[#allocation2 + $0x59] sm:$0xff]
      %v2112 = vld [vmem:[#allocation2 + $0x61] sm:$0xff]
      %v2113 = vld [vmem:[#allocation2 + $0x69] sm:$0xff]
      %v2114 = vld [vmem:[#allocation2 + $0x71] sm:$0xff]
      %v2115 = vld [vmem:[#allocation2 + $0x79] sm:$0xff]
      %v2116 = vld [vmem:[#allocation2 + $0x81] sm:$0xff]
      %v2117 = vld [vmem:[#allocation2 + $0x89] sm:$0xff]
      %v2118 = vld [vmem:[#allocation2 + $0x91] sm:$0xff]
      %v2119 = vld [vmem:[#allocation2 + $0x99] sm:$0xff]
      %v2120 = vld [vmem:[#allocation2 + $0xa1] sm:$0xff]
      %v2121 = vld [vmem:[#allocation2 + $0xa9] sm:$0xff]
      %s2122 = scalar_lea.vmem %s3, 112
      %v2123 = vld [vmem:[%s2122] sm:$0xff]
      %v2124 = vld [vmem:[%s2122 + $0x8] sm:$0xff]
      %v2126 = vsel %vm543, %v2105, 0
      %v2129 = vsel %vm543, %v2106, 0
      %v2132 = vsel %vm543, %v2107, 0
      %v2135 = vsel %vm543, %v2108, 0
      %v2138 = vsel %vm543, %v2109, 0
      %v2141 = vsel %vm543, %v2110, 0
      %v2144 = vsel %vm543, %v2111, 0
      %v2147 = vsel %vm543, %v2112, 0
      %v2150 = vsel %vm543, %v2113, 0
      %v2153 = vsel %vm543, %v2114, 0
      %v2156 = vsel %vm543, %v2115, 0
      %v2159 = vsel %vm543, %v2116, 0
      %v2162 = vsel %vm543, %v2117, 0
      %v2165 = vsel %vm543, %v2118, 0
      %v2168 = vsel %vm543, %v2119, 0
      %v2171 = vsel %vm543, %v2120, 0
      %v2174 = vsel %vm543, %v2121, 0
      %2176 = vmatprep.subr.mxu0 0.0
      %2177 = vmatpush1.msra.mxu0 %v2123
      %2178 = vmatprep.subr.mxu0 0.0
      %2179 = vmatpush1.msra.mxu0 %v2124
      %2180 = vmatprep.subr.mxu0 0.0
      %2181 = vmatpush1.msra.mxu0 0.0
      %2182 = vmatprep.subr.mxu0 0.0
      %2183 = vmatpush1.msra.mxu0 0.0
      %2184 = vmatprep.subr.mxu0 0.0
      %2185 = vmatpush1.msra.mxu0 0.0
      %2186 = vmatprep.subr.mxu0 0.0
      %2187 = vmatpush1.msra.mxu0 0.0
      %2188 = vmatprep.subr.mxu0 0.0
      %2189 = vmatpush1.msra.mxu0 0.0
      %2190 = vmatprep.subr.mxu0 0.0
      %2191 = vmatpush1.msra.mxu0 0.0
      %2192 = vmatprep.subr.mxu0 0.0
      %2193 = vmatpush1.msra.mxu0 0.0
      %2194 = vmatprep.subr.mxu0 0.0
      %2195 = vmatpush1.msra.mxu0 0.0
      %2196 = vmatprep.subr.mxu0 0.0
      %2197 = vmatpush1.msra.mxu0 0.0
      %2198 = vmatprep.subr.mxu0 0.0
      %2199 = vmatpush1.msra.mxu0 0.0
      %2200 = vmatprep.subr.mxu0 0.0
      %2201 = vmatpush1.msra.mxu0 0.0
      %2202 = vmatprep.subr.mxu0 0.0
      %2203 = vmatpush1.msra.mxu0 0.0
      %2204 = vmatprep.subr.mxu0 0.0
      %2205 = vmatpush1.msra.mxu0 0.0
      %2206 = vmatprep.subr.mxu0 0.0
      %2207 = vmatpush1.msra.mxu0 0.0
      %2208 = vmatprep.subr.mxu0 0.0
      %2209 = vmatpush1.msra.mxu0 0.0
      %2210 = vmatprep.subr.mxu0 0.0
      %2211 = vmatpush1.msra.mxu0 0.0
      %2212 = vmatprep.subr.mxu0 0.0
      %2213 = vmatpush1.msra.mxu0 0.0
      %2214 = vmatprep.subr.mxu0 0.0
      %2215 = vmatpush1.msra.mxu0 0.0
      %2216 = vmatprep.subr.mxu0 0.0
      %2217 = vmatpush1.msra.mxu0 0.0
      %2218 = vmatprep.subr.mxu0 0.0
      %2219 = vmatpush1.msra.mxu0 0.0
      %2220 = vmatprep.subr.mxu0 0.0
      %2221 = vmatpush1.msra.mxu0 0.0
      %2222 = vmatprep.subr.mxu0 0.0
      %2223 = vmatpush1.msra.mxu0 0.0
      %2224 = vmatprep.subr.mxu0 0.0
      %2225 = vmatpush1.msra.mxu0 0.0
      %2226 = vmatprep.subr.mxu0 0.0
      %2227 = vmatpush1.msra.mxu0 0.0
      %2228 = vmatprep.subr.mxu0 0.0
      %2229 = vmatpush1.msra.mxu0 0.0
      %2230 = vmatprep.subr.mxu0 0.0
      %2231 = vmatpush1.msra.mxu0 0.0
      %2232 = vmatprep.subr.mxu0 0.0
      %2233 = vmatpush1.msra.mxu0 0.0
      %2234 = vmatprep.subr.mxu0 0.0
      %2235 = vmatpush1.msra.mxu0 0.0
      %2236 = vmatprep.subr.mxu0 0.0
      %2237 = vmatpush1.msra.mxu0 0.0
      %2238 = vmatprep.subr.mxu0 0.0
      %2239 = vmatpush1.msra.mxu0 0.0
      %2240 = vmatprep.mubr.f32.mxu0 0.0
      %2241 = vmatmul.mubr.f32.gmra.mrb[0].mxu0 %v2126
      %v2242 = vpop.f32.mrb[0].mxu0
      %v2243 = vadd.f32 0.0, %v2242
      %v2244 = vpop.f32.mrb[0].mxu0
      %2245 = vmatprep.mubr.f32.mxu0 0.0
      %2246 = vmatmul.mubr.f32.gmra.mrb[0].mxu0 %v2129
      %v2247 = vpop.f32.mrb[0].mxu0
      %v2248 = vadd.f32 0.0, %v2247
      %v2249 = vpop.f32.mrb[0].mxu0
      %2250 = vmatprep.mubr.f32.mxu0 0.0
      %2251 = vmatmul.mubr.f32.gmra.mrb[0].mxu0 %v2132
      %v2252 = vpop.f32.mrb[0].mxu0
      %v2253 = vadd.f32 0.0, %v2252
      %v2254 = vpop.f32.mrb[0].mxu0
      %2255 = vmatprep.mubr.f32.mxu0 0.0
      %2256 = vmatmul.mubr.f32.gmra.mrb[0].mxu0 %v2135
      %v2257 = vpop.f32.mrb[0].mxu0
      %v2258 = vadd.f32 0.0, %v2257
      %v2259 = vpop.f32.mrb[0].mxu0
      %2260 = vmatprep.mubr.f32.mxu0 0.0
      %2261 = vmatmul.mubr.f32.gmra.mrb[0].mxu0 %v2138
      %v2262 = vpop.f32.mrb[0].mxu0
      %v2263 = vadd.f32 0.0, %v2262
      %v2264 = vpop.f32.mrb[0].mxu0
      %2265 = vmatprep.mubr.f32.mxu0 0.0
      %2266 = vmatmul.mubr.f32.gmra.mrb[0].mxu0 %v2141
      %v2267 = vpop.f32.mrb[0].mxu0
      %v2268 = vadd.f32 0.0, %v2267
      %v2269 = vpop.f32.mrb[0].mxu0
      %2270 = vmatprep.mubr.f32.mxu0 0.0
      %2271 = vmatmul.mubr.f32.gmra.mrb[0].mxu0 %v2144
      %v2272 = vpop.f32.mrb[0].mxu0
      %v2273 = vadd.f32 0.0, %v2272
      %v2274 = vpop.f32.mrb[0].mxu0
      %2275 = vmatprep.mubr.f32.mxu0 0.0
      %2276 = vmatmul.mubr.f32.gmra.mrb[0].mxu0 %v2147
      %v2277 = vpop.f32.mrb[0].mxu0
      %v2278 = vadd.f32 0.0, %v2277
      %v2279 = vpop.f32.mrb[0].mxu0
      %2280 = vmatprep.mubr.f32.mxu0 0.0
      %2281 = vmatmul.mubr.f32.gmra.mrb[0].mxu0 %v2150
      %v2282 = vpop.f32.mrb[0].mxu0
      %v2283 = vadd.f32 0.0, %v2282
      %v2284 = vpop.f32.mrb[0].mxu0
      %2285 = vmatprep.mubr.f32.mxu0 0.0
      %2286 = vmatmul.mubr.f32.gmra.mrb[0].mxu0 %v2153
      %v2287 = vpop.f32.mrb[0].mxu0
      %v2288 = vadd.f32 0.0, %v2287
      %v2289 = vpop.f32.mrb[0].mxu0
      %2290 = vmatprep.mubr.f32.mxu0 0.0
      %2291 = vmatmul.mubr.f32.gmra.mrb[0].mxu0 %v2156
      %v2292 = vpop.f32.mrb[0].mxu0
      %v2293 = vadd.f32 0.0, %v2292
      %v2294 = vpop.f32.mrb[0].mxu0
      %2295 = vmatprep.mubr.f32.mxu0 0.0
      %2296 = vmatmul.mubr.f32.gmra.mrb[0].mxu0 %v2159
      %v2297 = vpop.f32.mrb[0].mxu0
      %v2298 = vadd.f32 0.0, %v2297
      %v2299 = vpop.f32.mrb[0].mxu0
      %2300 = vmatprep.mubr.f32.mxu0 0.0
      %2301 = vmatmul.mubr.f32.gmra.mrb[0].mxu0 %v2162
      %v2302 = vpop.f32.mrb[0].mxu0
      %v2303 = vadd.f32 0.0, %v2302
      %v2304 = vpop.f32.mrb[0].mxu0
      %2305 = vmatprep.mubr.f32.mxu0 0.0
      %2306 = vmatmul.mubr.f32.gmra.mrb[0].mxu0 %v2165
      %v2307 = vpop.f32.mrb[0].mxu0
      %v2308 = vadd.f32 0.0, %v2307
      %v2309 = vpop.f32.mrb[0].mxu0
      %2310 = vmatprep.mubr.f32.mxu0 0.0
      %2311 = vmatmul.mubr.f32.gmra.mrb[0].mxu0 %v2168
      %v2312 = vpop.f32.mrb[0].mxu0
      %v2313 = vadd.f32 0.0, %v2312
      %v2314 = vpop.f32.mrb[0].mxu0
      %2315 = vmatprep.mubr.f32.mxu0 0.0
      %2316 = vmatmul.mubr.f32.gmra.mrb[0].mxu0 %v2171
      %v2317 = vpop.f32.mrb[0].mxu0
      %v2318 = vadd.f32 0.0, %v2317
      %v2319 = vpop.f32.mrb[0].mxu0
      %2320 = vmatprep.mubr.f32.mxu0 0.0
      %2321 = vmatmul.mubr.f32.gmra.mrb[0].mxu0 %v2174
      %v2322 = vpop.f32.mrb[0].mxu0
      %v2323 = vadd.f32 0.0, %v2322
      %v2324 = vpop.f32.mrb[0].mxu0
      %2325 = vdwg.mxu0
      %v2327 = vsel %vm543, %v2085, 0
      %v2330 = vsel %vm543, %v2086, 0
      %v2333 = vsel %vm543, %v2087, 0
      %v2336 = vsel %vm543, %v2088, 0
      %v2339 = vsel %vm543, %v2089, 0
      %v2342 = vsel %vm543, %v2090, 0
      %v2345 = vsel %vm543, %v2091, 0
      %v2348 = vsel %vm543, %v2092, 0
      %v2351 = vsel %vm543, %v2093, 0
      %v2354 = vsel %vm543, %v2094, 0
      %v2357 = vsel %vm543, %v2095, 0
      %v2360 = vsel %vm543, %v2096, 0
      %v2363 = vsel %vm543, %v2097, 0
      %v2366 = vsel %vm543, %v2098, 0
      %v2369 = vsel %vm543, %v2099, 0
      %v2372 = vsel %vm543, %v2100, 0
      %v2375 = vsel %vm543, %v2101, 0
      %2377 = vmatprep.subr.mxu0 0.0
      %2378 = vmatpush1.msra.mxu0 %v2103
      %2379 = vmatprep.subr.mxu0 0.0
      %2380 = vmatpush1.msra.mxu0 %v2104
      %2381 = vmatprep.subr.mxu0 0.0
      %2382 = vmatpush1.msra.mxu0 0.0
      %2383 = vmatprep.subr.mxu0 0.0
      %2384 = vmatpush1.msra.mxu0 0.0
      %2385 = vmatprep.subr.mxu0 0.0
      %2386 = vmatpush1.msra.mxu0 0.0
      %2387 = vmatprep.subr.mxu0 0.0
      %2388 = vmatpush1.msra.mxu0 0.0
      %2389 = vmatprep.subr.mxu0 0.0
      %2390 = vmatpush1.msra.mxu0 0.0
      %2391 = vmatprep.subr.mxu0 0.0
      %2392 = vmatpush1.msra.mxu0 0.0
      %2393 = vmatprep.subr.mxu0 0.0
      %2394 = vmatpush1.msra.mxu0 0.0
      %2395 = vmatprep.subr.mxu0 0.0
      %2396 = vmatpush1.msra.mxu0 0.0
      %2397 = vmatprep.subr.mxu0 0.0
      %2398 = vmatpush1.msra.mxu0 0.0
      %2399 = vmatprep.subr.mxu0 0.0
      %2400 = vmatpush1.msra.mxu0 0.0
      %2401 = vmatprep.subr.mxu0 0.0
      %2402 = vmatpush1.msra.mxu0 0.0
      %2403 = vmatprep.subr.mxu0 0.0
      %2404 = vmatpush1.msra.mxu0 0.0
      %2405 = vmatprep.subr.mxu0 0.0
      %2406 = vmatpush1.msra.mxu0 0.0
      %2407 = vmatprep.subr.mxu0 0.0
      %2408 = vmatpush1.msra.mxu0 0.0
      %2409 = vmatprep.subr.mxu0 0.0
      %2410 = vmatpush1.msra.mxu0 0.0
      %2411 = vmatprep.subr.mxu0 0.0
      %2412 = vmatpush1.msra.mxu0 0.0
      %2413 = vmatprep.subr.mxu0 0.0
      %2414 = vmatpush1.msra.mxu0 0.0
      %2415 = vmatprep.subr.mxu0 0.0
      %2416 = vmatpush1.msra.mxu0 0.0
      %2417 = vmatprep.subr.mxu0 0.0
      %2418 = vmatpush1.msra.mxu0 0.0
      %2419 = vmatprep.subr.mxu0 0.0
      %2420 = vmatpush1.msra.mxu0 0.0
      %2421 = vmatprep.subr.mxu0 0.0
      %2422 = vmatpush1.msra.mxu0 0.0
      %2423 = vmatprep.subr.mxu0 0.0
      %2424 = vmatpush1.msra.mxu0 0.0
      %2425 = vmatprep.subr.mxu0 0.0
      %2426 = vmatpush1.msra.mxu0 0.0
      %2427 = vmatprep.subr.mxu0 0.0
      %2428 = vmatpush1.msra.mxu0 0.0
      %2429 = vmatprep.subr.mxu0 0.0
      %2430 = vmatpush1.msra.mxu0 0.0
      %2431 = vmatprep.subr.mxu0 0.0
      %2432 = vmatpush1.msra.mxu0 0.0
      %2433 = vmatprep.subr.mxu0 0.0
      %2434 = vmatpush1.msra.mxu0 0.0
      %2435 = vmatprep.subr.mxu0 0.0
      %2436 = vmatpush1.msra.mxu0 0.0
      %2437 = vmatprep.subr.mxu0 0.0
      %2438 = vmatpush1.msra.mxu0 0.0
      %2439 = vmatprep.subr.mxu0 0.0
      %2440 = vmatpush1.msra.mxu0 0.0
      %2441 = vmatprep.mubr.f32.mxu0 0.0
      %2442 = vmatmul.mubr.f32.gmra.mrb[0].mxu0 %v2327
      %v2443 = vpop.f32.mrb[0].mxu0
      %v2444 = vadd.f32 %v2243, %v2443
      %v2445 = vpop.f32.mrb[0].mxu0
      %2446 = vmatprep.mubr.f32.mxu0 0.0
      %2447 = vmatmul.mubr.f32.gmra.mrb[0].mxu0 %v2330
      %v2448 = vpop.f32.mrb[0].mxu0
      %v2449 = vadd.f32 %v2248, %v2448
      %v2450 = vpop.f32.mrb[0].mxu0
      %2451 = vmatprep.mubr.f32.mxu0 0.0
      %2452 = vmatmul.mubr.f32.gmra.mrb[0].mxu0 %v2333
      %v2453 = vpop.f32.mrb[0].mxu0
      %v2454 = vadd.f32 %v2253, %v2453
      %v2455 = vpop.f32.mrb[0].mxu0
      %2456 = vmatprep.mubr.f32.mxu0 0.0
      %2457 = vmatmul.mubr.f32.gmra.mrb[0].mxu0 %v2336
      %v2458 = vpop.f32.mrb[0].mxu0
      %v2459 = vadd.f32 %v2258, %v2458
      %v2460 = vpop.f32.mrb[0].mxu0
      %2461 = vmatprep.mubr.f32.mxu0 0.0
      %2462 = vmatmul.mubr.f32.gmra.mrb[0].mxu0 %v2339
      %v2463 = vpop.f32.mrb[0].mxu0
      %v2464 = vadd.f32 %v2263, %v2463
      %v2465 = vpop.f32.mrb[0].mxu0
      %2466 = vmatprep.mubr.f32.mxu0 0.0
      %2467 = vmatmul.mubr.f32.gmra.mrb[0].mxu0 %v2342
      %v2468 = vpop.f32.mrb[0].mxu0
      %v2469 = vadd.f32 %v2268, %v2468
      %v2470 = vpop.f32.mrb[0].mxu0
      %2471 = vmatprep.mubr.f32.mxu0 0.0
      %2472 = vmatmul.mubr.f32.gmra.mrb[0].mxu0 %v2345
      %v2473 = vpop.f32.mrb[0].mxu0
      %v2474 = vadd.f32 %v2273, %v2473
      %v2475 = vpop.f32.mrb[0].mxu0
      %2476 = vmatprep.mubr.f32.mxu0 0.0
      %2477 = vmatmul.mubr.f32.gmra.mrb[0].mxu0 %v2348
      %v2478 = vpop.f32.mrb[0].mxu0
      %v2479 = vadd.f32 %v2278, %v2478
      %v2480 = vpop.f32.mrb[0].mxu0
      %2481 = vmatprep.mubr.f32.mxu0 0.0
      %2482 = vmatmul.mubr.f32.gmra.mrb[0].mxu0 %v2351
      %v2483 = vpop.f32.mrb[0].mxu0
      %v2484 = vadd.f32 %v2283, %v2483
      %v2485 = vpop.f32.mrb[0].mxu0
      %2486 = vmatprep.mubr.f32.mxu0 0.0
      %2487 = vmatmul.mubr.f32.gmra.mrb[0].mxu0 %v2354
      %v2488 = vpop.f32.mrb[0].mxu0
      %v2489 = vadd.f32 %v2288, %v2488
      %v2490 = vpop.f32.mrb[0].mxu0
      %2491 = vmatprep.mubr.f32.mxu0 0.0
      %2492 = vmatmul.mubr.f32.gmra.mrb[0].mxu0 %v2357
      %v2493 = vpop.f32.mrb[0].mxu0
      %v2494 = vadd.f32 %v2293, %v2493
      %v2495 = vpop.f32.mrb[0].mxu0
      %2496 = vmatprep.mubr.f32.mxu0 0.0
      %2497 = vmatmul.mubr.f32.gmra.mrb[0].mxu0 %v2360
      %v2498 = vpop.f32.mrb[0].mxu0
      %v2499 = vadd.f32 %v2298, %v2498
      %v2500 = vpop.f32.mrb[0].mxu0
      %2501 = vmatprep.mubr.f32.mxu0 0.0
      %2502 = vmatmul.mubr.f32.gmra.mrb[0].mxu0 %v2363
      %v2503 = vpop.f32.mrb[0].mxu0
      %v2504 = vadd.f32 %v2303, %v2503
      %v2505 = vpop.f32.mrb[0].mxu0
      %2506 = vmatprep.mubr.f32.mxu0 0.0
      %2507 = vmatmul.mubr.f32.gmra.mrb[0].mxu0 %v2366
      %v2508 = vpop.f32.mrb[0].mxu0
      %v2509 = vadd.f32 %v2308, %v2508
      %v2510 = vpop.f32.mrb[0].mxu0
      %2511 = vmatprep.mubr.f32.mxu0 0.0
      %2512 = vmatmul.mubr.f32.gmra.mrb[0].mxu0 %v2369
      %v2513 = vpop.f32.mrb[0].mxu0
      %v2514 = vadd.f32 %v2313, %v2513
      %v2515 = vpop.f32.mrb[0].mxu0
      %2516 = vmatprep.mubr.f32.mxu0 0.0
      %2517 = vmatmul.mubr.f32.gmra.mrb[0].mxu0 %v2372
      %v2518 = vpop.f32.mrb[0].mxu0
      %v2519 = vadd.f32 %v2318, %v2518
      %v2520 = vpop.f32.mrb[0].mxu0
      %2521 = vmatprep.mubr.f32.mxu0 0.0
      %2522 = vmatmul.mubr.f32.gmra.mrb[0].mxu0 %v2375
      %v2523 = vpop.f32.mrb[0].mxu0
      %v2524 = vadd.f32 %v2323, %v2523
      %v2525 = vpop.f32.mrb[0].mxu0
      %2526 = vdwg.mxu0
      %v2527 = vld [vmem:[#allocation2 + $0x2a] sm:$0xff]
      %v2528 = vld [vmem:[#allocation2 + $0x32] sm:$0xff]
      %v2529 = vld [vmem:[#allocation2 + $0x3a] sm:$0xff]
      %v2530 = vld [vmem:[#allocation2 + $0x42] sm:$0xff]
      %v2531 = vld [vmem:[#allocation2 + $0x4a] sm:$0xff]
      %v2532 = vld [vmem:[#allocation2 + $0x52] sm:$0xff]
      %v2533 = vld [vmem:[#allocation2 + $0x5a] sm:$0xff]
      %v2534 = vld [vmem:[#allocation2 + $0x62] sm:$0xff]
      %v2535 = vld [vmem:[#allocation2 + $0x6a] sm:$0xff]
      %v2536 = vld [vmem:[#allocation2 + $0x72] sm:$0xff]
      %v2537 = vld [vmem:[#allocation2 + $0x7a] sm:$0xff]
      %v2538 = vld [vmem:[#allocation2 + $0x82] sm:$0xff]
      %v2539 = vld [vmem:[#allocation2 + $0x8a] sm:$0xff]
      %v2540 = vld [vmem:[#allocation2 + $0x92] sm:$0xff]
      %v2541 = vld [vmem:[#allocation2 + $0x9a] sm:$0xff]
      %v2542 = vld [vmem:[#allocation2 + $0xa2] sm:$0xff]
      %v2543 = vld [vmem:[#allocation2 + $0xaa] sm:$0xff]
      %s2544 = scalar_lea.vmem %s3, 128
      %v2545 = vld [vmem:[%s2544] sm:$0xff]
      %v2546 = vld [vmem:[%s2544 + $0x8] sm:$0xff]
      %v2548 = vsel %vm543, %v2527, 0
      %v2551 = vsel %vm543, %v2528, 0
      %v2554 = vsel %vm543, %v2529, 0
      %v2557 = vsel %vm543, %v2530, 0
      %v2560 = vsel %vm543, %v2531, 0
      %v2563 = vsel %vm543, %v2532, 0
      %v2566 = vsel %vm543, %v2533, 0
      %v2569 = vsel %vm543, %v2534, 0
      %v2572 = vsel %vm543, %v2535, 0
      %v2575 = vsel %vm543, %v2536, 0
      %v2578 = vsel %vm543, %v2537, 0
      %v2581 = vsel %vm543, %v2538, 0
      %v2584 = vsel %vm543, %v2539, 0
      %v2587 = vsel %vm543, %v2540, 0
      %v2590 = vsel %vm543, %v2541, 0
      %v2593 = vsel %vm543, %v2542, 0
      %v2596 = vsel %vm543, %v2543, 0
      %2598 = vmatprep.subr.mxu0 0.0
      %2599 = vmatpush1.msra.mxu0 %v2545
      %2600 = vmatprep.subr.mxu0 0.0
      %2601 = vmatpush1.msra.mxu0 %v2546
      %2602 = vmatprep.subr.mxu0 0.0
      %2603 = vmatpush1.msra.mxu0 0.0
      %2604 = vmatprep.subr.mxu0 0.0
      %2605 = vmatpush1.msra.mxu0 0.0
      %2606 = vmatprep.subr.mxu0 0.0
      %2607 = vmatpush1.msra.mxu0 0.0
      %2608 = vmatprep.subr.mxu0 0.0
      %2609 = vmatpush1.msra.mxu0 0.0
      %2610 = vmatprep.subr.mxu0 0.0
      %2611 = vmatpush1.msra.mxu0 0.0
      %2612 = vmatprep.subr.mxu0 0.0
      %2613 = vmatpush1.msra.mxu0 0.0
      %2614 = vmatprep.subr.mxu0 0.0
      %2615 = vmatpush1.msra.mxu0 0.0
      %2616 = vmatprep.subr.mxu0 0.0
      %2617 = vmatpush1.msra.mxu0 0.0
      %2618 = vmatprep.subr.mxu0 0.0
      %2619 = vmatpush1.msra.mxu0 0.0
      %2620 = vmatprep.subr.mxu0 0.0
      %2621 = vmatpush1.msra.mxu0 0.0
      %2622 = vmatprep.subr.mxu0 0.0
      %2623 = vmatpush1.msra.mxu0 0.0
      %2624 = vmatprep.subr.mxu0 0.0
      %2625 = vmatpush1.msra.mxu0 0.0
      %2626 = vmatprep.subr.mxu0 0.0
      %2627 = vmatpush1.msra.mxu0 0.0
      %2628 = vmatprep.subr.mxu0 0.0
      %2629 = vmatpush1.msra.mxu0 0.0
      %2630 = vmatprep.subr.mxu0 0.0
      %2631 = vmatpush1.msra.mxu0 0.0
      %2632 = vmatprep.subr.mxu0 0.0
      %2633 = vmatpush1.msra.mxu0 0.0
      %2634 = vmatprep.subr.mxu0 0.0
      %2635 = vmatpush1.msra.mxu0 0.0
      %2636 = vmatprep.subr.mxu0 0.0
      %2637 = vmatpush1.msra.mxu0 0.0
      %2638 = vmatprep.subr.mxu0 0.0
      %2639 = vmatpush1.msra.mxu0 0.0
      %2640 = vmatprep.subr.mxu0 0.0
      %2641 = vmatpush1.msra.mxu0 0.0
      %2642 = vmatprep.subr.mxu0 0.0
      %2643 = vmatpush1.msra.mxu0 0.0
      %2644 = vmatprep.subr.mxu0 0.0
      %2645 = vmatpush1.msra.mxu0 0.0
      %2646 = vmatprep.subr.mxu0 0.0
      %2647 = vmatpush1.msra.mxu0 0.0
      %2648 = vmatprep.subr.mxu0 0.0
      %2649 = vmatpush1.msra.mxu0 0.0
      %2650 = vmatprep.subr.mxu0 0.0
      %2651 = vmatpush1.msra.mxu0 0.0
      %2652 = vmatprep.subr.mxu0 0.0
      %2653 = vmatpush1.msra.mxu0 0.0
      %2654 = vmatprep.subr.mxu0 0.0
      %2655 = vmatpush1.msra.mxu0 0.0
      %2656 = vmatprep.subr.mxu0 0.0
      %2657 = vmatpush1.msra.mxu0 0.0
      %2658 = vmatprep.subr.mxu0 0.0
      %2659 = vmatpush1.msra.mxu0 0.0
      %2660 = vmatprep.subr.mxu0 0.0
      %2661 = vmatpush1.msra.mxu0 0.0
      %2662 = vmatprep.mubr.f32.mxu0 0.0
      %2663 = vmatmul.mubr.f32.gmra.mrb[0].mxu0 %v2548
      %v2664 = vpop.f32.mrb[0].mxu0
      %v2665 = vadd.f32 0.0, %v2664
      %v2666 = vpop.f32.mrb[0].mxu0
      %2667 = vmatprep.mubr.f32.mxu0 0.0
      %2668 = vmatmul.mubr.f32.gmra.mrb[0].mxu0 %v2551
      %v2669 = vpop.f32.mrb[0].mxu0
      %v2670 = vadd.f32 0.0, %v2669
      %v2671 = vpop.f32.mrb[0].mxu0
      %2672 = vmatprep.mubr.f32.mxu0 0.0
      %2673 = vmatmul.mubr.f32.gmra.mrb[0].mxu0 %v2554
      %v2674 = vpop.f32.mrb[0].mxu0
      %v2675 = vadd.f32 0.0, %v2674
      %v2676 = vpop.f32.mrb[0].mxu0
      %2677 = vmatprep.mubr.f32.mxu0 0.0
      %2678 = vmatmul.mubr.f32.gmra.mrb[0].mxu0 %v2557
      %v2679 = vpop.f32.mrb[0].mxu0
      %v2680 = vadd.f32 0.0, %v2679
      %v2681 = vpop.f32.mrb[0].mxu0
      %2682 = vmatprep.mubr.f32.mxu0 0.0
      %2683 = vmatmul.mubr.f32.gmra.mrb[0].mxu0 %v2560
      %v2684 = vpop.f32.mrb[0].mxu0
      %v2685 = vadd.f32 0.0, %v2684
      %v2686 = vpop.f32.mrb[0].mxu0
      %2687 = vmatprep.mubr.f32.mxu0 0.0
      %2688 = vmatmul.mubr.f32.gmra.mrb[0].mxu0 %v2563
      %v2689 = vpop.f32.mrb[0].mxu0
      %v2690 = vadd.f32 0.0, %v2689
      %v2691 = vpop.f32.mrb[0].mxu0
      %2692 = vmatprep.mubr.f32.mxu0 0.0
      %2693 = vmatmul.mubr.f32.gmra.mrb[0].mxu0 %v2566
      %v2694 = vpop.f32.mrb[0].mxu0
      %v2695 = vadd.f32 0.0, %v2694
      %v2696 = vpop.f32.mrb[0].mxu0
      %2697 = vmatprep.mubr.f32.mxu0 0.0
      %2698 = vmatmul.mubr.f32.gmra.mrb[0].mxu0 %v2569
      %v2699 = vpop.f32.mrb[0].mxu0
      %v2700 = vadd.f32 0.0, %v2699
      %v2701 = vpop.f32.mrb[0].mxu0
      %2702 = vmatprep.mubr.f32.mxu0 0.0
      %2703 = vmatmul.mubr.f32.gmra.mrb[0].mxu0 %v2572
      %v2704 = vpop.f32.mrb[0].mxu0
      %v2705 = vadd.f32 0.0, %v2704
      %v2706 = vpop.f32.mrb[0].mxu0
      %2707 = vmatprep.mubr.f32.mxu0 0.0
      %2708 = vmatmul.mubr.f32.gmra.mrb[0].mxu0 %v2575
      %v2709 = vpop.f32.mrb[0].mxu0
      %v2710 = vadd.f32 0.0, %v2709
      %v2711 = vpop.f32.mrb[0].mxu0
      %2712 = vmatprep.mubr.f32.mxu0 0.0
      %2713 = vmatmul.mubr.f32.gmra.mrb[0].mxu0 %v2578
      %v2714 = vpop.f32.mrb[0].mxu0
      %v2715 = vadd.f32 0.0, %v2714
      %v2716 = vpop.f32.mrb[0].mxu0
      %2717 = vmatprep.mubr.f32.mxu0 0.0
      %2718 = vmatmul.mubr.f32.gmra.mrb[0].mxu0 %v2581
      %v2719 = vpop.f32.mrb[0].mxu0
      %v2720 = vadd.f32 0.0, %v2719
      %v2721 = vpop.f32.mrb[0].mxu0
      %2722 = vmatprep.mubr.f32.mxu0 0.0
      %2723 = vmatmul.mubr.f32.gmra.mrb[0].mxu0 %v2584
      %v2724 = vpop.f32.mrb[0].mxu0
      %v2725 = vadd.f32 0.0, %v2724
      %v2726 = vpop.f32.mrb[0].mxu0
      %2727 = vmatprep.mubr.f32.mxu0 0.0
      %2728 = vmatmul.mubr.f32.gmra.mrb[0].mxu0 %v2587
      %v2729 = vpop.f32.mrb[0].mxu0
      %v2730 = vadd.f32 0.0, %v2729
      %v2731 = vpop.f32.mrb[0].mxu0
      %2732 = vmatprep.mubr.f32.mxu0 0.0
      %2733 = vmatmul.mubr.f32.gmra.mrb[0].mxu0 %v2590
      %v2734 = vpop.f32.mrb[0].mxu0
      %v2735 = vadd.f32 0.0, %v2734
      %v2736 = vpop.f32.mrb[0].mxu0
      %2737 = vmatprep.mubr.f32.mxu0 0.0
      %2738 = vmatmul.mubr.f32.gmra.mrb[0].mxu0 %v2593
      %v2739 = vpop.f32.mrb[0].mxu0
      %v2740 = vadd.f32 0.0, %v2739
      %v2741 = vpop.f32.mrb[0].mxu0
      %2742 = vmatprep.mubr.f32.mxu0 0.0
      %2743 = vmatmul.mubr.f32.gmra.mrb[0].mxu0 %v2596
      %v2744 = vpop.f32.mrb[0].mxu0
      %v2745 = vadd.f32 0.0, %v2744
      %v2746 = vpop.f32.mrb[0].mxu0
      %2747 = vdwg.mxu0
      %v2748 = vadd.f32 %v2444, %v2665
      %v2749 = vadd.f32 %v2449, %v2670
      %v2750 = vadd.f32 %v2454, %v2675
      %v2751 = vadd.f32 %v2459, %v2680
      %v2752 = vadd.f32 %v2464, %v2685
      %v2753 = vadd.f32 %v2469, %v2690
      %v2754 = vadd.f32 %v2474, %v2695
      %v2755 = vadd.f32 %v2479, %v2700
      %v2756 = vadd.f32 %v2484, %v2705
      %v2757 = vadd.f32 %v2489, %v2710
      %v2758 = vadd.f32 %v2494, %v2715
      %v2759 = vadd.f32 %v2499, %v2720
      %v2760 = vadd.f32 %v2504, %v2725
      %v2761 = vadd.f32 %v2509, %v2730
      %v2762 = vadd.f32 %v2514, %v2735
      %v2763 = vadd.f32 %v2519, %v2740
      %v2764 = vadd.f32 %v2524, %v2745
      %v2765 = vmul.f32 %v658, %v1388
      %v2766 = vmul.f32 %v659, %v1389
      %v2767 = vmul.f32 %v660, %v1390
      %v2768 = vmul.f32 %v661, %v1391
      %v2769 = vmul.f32 %v662, %v1392
      %v2770 = vmul.f32 %v663, %v1393
      %v2771 = vmul.f32 %v664, %v1394
      %v2772 = vmul.f32 %v665, %v1395
      %v2773 = vmul.f32 %v666, %v1396
      %v2774 = vmul.f32 %v667, %v1397
      %v2775 = vmul.f32 %v668, %v1398
      %v2776 = vmul.f32 %v669, %v1399
      %v2777 = vmul.f32 %v670, %v1400
      %v2778 = vmul.f32 %v671, %v1401
      %v2779 = vmul.f32 %v672, %v1402
      %v2780 = vmul.f32 %v673, %v1403
      %v2781 = vmul.f32 %v674, %v1404
      %v2782 = vadd.f32 %v2068, %v2765
      %v2783 = vadd.f32 %v2069, %v2766
      %v2784 = vadd.f32 %v2070, %v2767
      %v2785 = vadd.f32 %v2071, %v2768
      %v2786 = vadd.f32 %v2072, %v2769
      %v2787 = vadd.f32 %v2073, %v2770
      %v2788 = vadd.f32 %v2074, %v2771
      %v2789 = vadd.f32 %v2075, %v2772
      %v2790 = vadd.f32 %v2076, %v2773
      %v2791 = vadd.f32 %v2077, %v2774
      %v2792 = vadd.f32 %v2078, %v2775
      %v2793 = vadd.f32 %v2079, %v2776
      %v2794 = vadd.f32 %v2080, %v2777
      %v2795 = vadd.f32 %v2081, %v2778
      %v2796 = vadd.f32 %v2082, %v2779
      %v2797 = vadd.f32 %v2083, %v2780
      %v2798 = vadd.f32 %v2084, %v2781
      %v2799 = vmul.f32 %v709, %v2748
      %v2800 = vmul.f32 %v710, %v2749
      %v2801 = vmul.f32 %v711, %v2750
      %v2802 = vmul.f32 %v712, %v2751
      %v2803 = vmul.f32 %v713, %v2752
      %v2804 = vmul.f32 %v714, %v2753
      %v2805 = vmul.f32 %v715, %v2754
      %v2806 = vmul.f32 %v716, %v2755
      %v2807 = vmul.f32 %v717, %v2756
      %v2808 = vmul.f32 %v718, %v2757
      %v2809 = vmul.f32 %v719, %v2758
      %v2810 = vmul.f32 %v720, %v2759
      %v2811 = vmul.f32 %v721, %v2760
      %v2812 = vmul.f32 %v722, %v2761
      %v2813 = vmul.f32 %v723, %v2762
      %v2814 = vmul.f32 %v724, %v2763
      %v2815 = vmul.f32 %v725, %v2764
      %v2816 = vadd.f32 %v2782, %v2799
      %v2817 = vadd.f32 %v2783, %v2800
      %v2818 = vadd.f32 %v2784, %v2801
      %v2819 = vadd.f32 %v2785, %v2802
      %v2820 = vadd.f32 %v2786, %v2803
      %v2821 = vadd.f32 %v2787, %v2804
      %v2822 = vadd.f32 %v2788, %v2805
      %v2823 = vadd.f32 %v2789, %v2806
      %v2824 = vadd.f32 %v2790, %v2807
      %v2825 = vadd.f32 %v2791, %v2808
      %v2826 = vadd.f32 %v2792, %v2809
      %v2827 = vadd.f32 %v2793, %v2810
      %v2828 = vadd.f32 %v2794, %v2811
      %v2829 = vadd.f32 %v2795, %v2812
      %v2830 = vadd.f32 %v2796, %v2813
      %v2831 = vadd.f32 %v2797, %v2814
      %v2832 = vadd.f32 %v2798, %v2815
      %v2833 = vld [vmem:[%s4] sm:$0x1]
      %v2835 = vlaneseq
      %v2836 = vshrl.u32 %v2835, 7
      %v2837 = vsub.s32 0, %v2836
      %v2838 = vrot.slane %v2833, %v2837
      %v2840 = vmul.f32 %v2816, %v2838
      %v2841 = vmul.f32 %v2817, %v2838
      %v2842 = vmul.f32 %v2818, %v2838
      %v2843 = vmul.f32 %v2819, %v2838
      %v2844 = vmul.f32 %v2820, %v2838
      %v2845 = vmul.f32 %v2821, %v2838
      %v2846 = vmul.f32 %v2822, %v2838
      %v2847 = vmul.f32 %v2823, %v2838
      %v2848 = vmul.f32 %v2824, %v2838
      %v2849 = vmul.f32 %v2825, %v2838
      %v2850 = vmul.f32 %v2826, %v2838
      %v2851 = vmul.f32 %v2827, %v2838
      %v2852 = vmul.f32 %v2828, %v2838
      %v2853 = vmul.f32 %v2829, %v2838
      %v2854 = vmul.f32 %v2830, %v2838
      %v2855 = vmul.f32 %v2831, %v2838
      %v2856 = vmul.f32 %v2832, %v2838
      %v2857 = vld [vmem:[%s5] sm:$0x1]
      %v2859 = vlaneseq
      %v2860 = vshrl.u32 %v2859, 7
      %v2861 = vsub.s32 0, %v2860
      %v2862 = vrot.slane %v2857, %v2861
      %v2864 = vadd.f32 %v2840, %v2862
      %v2865 = vadd.f32 %v2841, %v2862
      %v2866 = vadd.f32 %v2842, %v2862
      %v2867 = vadd.f32 %v2843, %v2862
      %v2868 = vadd.f32 %v2844, %v2862
      %v2869 = vadd.f32 %v2845, %v2862
      %v2870 = vadd.f32 %v2846, %v2862
      %v2871 = vadd.f32 %v2847, %v2862
      %v2872 = vadd.f32 %v2848, %v2862
      %v2873 = vadd.f32 %v2849, %v2862
      %v2874 = vadd.f32 %v2850, %v2862
      %v2875 = vadd.f32 %v2851, %v2862
      %v2876 = vadd.f32 %v2852, %v2862
      %v2877 = vadd.f32 %v2853, %v2862
      %v2878 = vadd.f32 %v2854, %v2862
      %v2879 = vadd.f32 %v2855, %v2862
      %v2880 = vadd.f32 %v2856, %v2862
      %v2881 = vmax.f32 %v2864, 0.0
      %v2882 = vmax.f32 %v2865, 0.0
      %v2883 = vmax.f32 %v2866, 0.0
      %v2884 = vmax.f32 %v2867, 0.0
      %v2885 = vmax.f32 %v2868, 0.0
      %v2886 = vmax.f32 %v2869, 0.0
      %v2887 = vmax.f32 %v2870, 0.0
      %v2888 = vmax.f32 %v2871, 0.0
      %v2889 = vmax.f32 %v2872, 0.0
      %v2890 = vmax.f32 %v2873, 0.0
      %v2891 = vmax.f32 %v2874, 0.0
      %v2892 = vmax.f32 %v2875, 0.0
      %v2893 = vmax.f32 %v2876, 0.0
      %v2894 = vmax.f32 %v2877, 0.0
      %v2895 = vmax.f32 %v2878, 0.0
      %v2896 = vmax.f32 %v2879, 0.0
      %v2897 = vmax.f32 %v2880, 0.0
      %v2898 = vld [vmem:[%s6] sm:$0xf]
      %vm2899 = vcmask 31744
      %v2901 = vsel %vm2899, %v2881, 0
      %v2904 = vsel %vm2899, %v2882, 0
      %v2907 = vsel %vm2899, %v2883, 0
      %v2910 = vsel %vm2899, %v2884, 0
      %v2913 = vsel %vm2899, %v2885, 0
      %v2916 = vsel %vm2899, %v2886, 0
      %v2919 = vsel %vm2899, %v2887, 0
      %v2922 = vsel %vm2899, %v2888, 0
      %v2925 = vsel %vm2899, %v2889, 0
      %v2928 = vsel %vm2899, %v2890, 0
      %v2931 = vsel %vm2899, %v2891, 0
      %v2934 = vsel %vm2899, %v2892, 0
      %v2937 = vsel %vm2899, %v2893, 0
      %v2940 = vsel %vm2899, %v2894, 0
      %v2943 = vsel %vm2899, %v2895, 0
      %v2946 = vsel %vm2899, %v2896, 0
      %v2949 = vsel %vm2899, %v2897, 0
      %vm2951 = vcmask 1043456
      %v2953 = vsel %vm2951, %v2898, 0
      %2955 = vmatprep.subr.mxu0 0.0
      %2956 = vmatpush1.msra.mxu0 %v2953
      %2957 = vmatprep.subr.mxu0 0.0
      %2958 = vmatpush1.msra.mxu0 0.0
      %2959 = vmatprep.subr.mxu0 0.0
      %2960 = vmatpush1.msra.mxu0 0.0
      %2961 = vmatprep.subr.mxu0 0.0
      %2962 = vmatpush1.msra.mxu0 0.0
      %2963 = vmatprep.subr.mxu0 0.0
      %2964 = vmatpush1.msra.mxu0 0.0
      %2965 = vmatprep.subr.mxu0 0.0
      %2966 = vmatpush1.msra.mxu0 0.0
      %2967 = vmatprep.subr.mxu0 0.0
      %2968 = vmatpush1.msra.mxu0 0.0
      %2969 = vmatprep.subr.mxu0 0.0
      %2970 = vmatpush1.msra.mxu0 0.0
      %2971 = vmatprep.subr.mxu0 0.0
      %2972 = vmatpush1.msra.mxu0 0.0
      %2973 = vmatprep.subr.mxu0 0.0
      %2974 = vmatpush1.msra.mxu0 0.0
      %2975 = vmatprep.subr.mxu0 0.0
      %2976 = vmatpush1.msra.mxu0 0.0
      %2977 = vmatprep.subr.mxu0 0.0
      %2978 = vmatpush1.msra.mxu0 0.0
      %2979 = vmatprep.subr.mxu0 0.0
      %2980 = vmatpush1.msra.mxu0 0.0
      %2981 = vmatprep.subr.mxu0 0.0
      %2982 = vmatpush1.msra.mxu0 0.0
      %2983 = vmatprep.subr.mxu0 0.0
      %2984 = vmatpush1.msra.mxu0 0.0
      %2985 = vmatprep.subr.mxu0 0.0
      %2986 = vmatpush1.msra.mxu0 0.0
      %2987 = vmatprep.subr.mxu0 0.0
      %2988 = vmatpush1.msra.mxu0 0.0
      %2989 = vmatprep.subr.mxu0 0.0
      %2990 = vmatpush1.msra.mxu0 0.0
      %2991 = vmatprep.subr.mxu0 0.0
      %2992 = vmatpush1.msra.mxu0 0.0
      %2993 = vmatprep.subr.mxu0 0.0
      %2994 = vmatpush1.msra.mxu0 0.0
      %2995 = vmatprep.subr.mxu0 0.0
      %2996 = vmatpush1.msra.mxu0 0.0
      %2997 = vmatprep.subr.mxu0 0.0
      %2998 = vmatpush1.msra.mxu0 0.0
      %2999 = vmatprep.subr.mxu0 0.0
      %3000 = vmatpush1.msra.mxu0 0.0
      %3001 = vmatprep.subr.mxu0 0.0
      %3002 = vmatpush1.msra.mxu0 0.0
      %3003 = vmatprep.subr.mxu0 0.0
      %3004 = vmatpush1.msra.mxu0 0.0
      %3005 = vmatprep.subr.mxu0 0.0
      %3006 = vmatpush1.msra.mxu0 0.0
      %3007 = vmatprep.subr.mxu0 0.0
      %3008 = vmatpush1.msra.mxu0 0.0
      %3009 = vmatprep.subr.mxu0 0.0
      %3010 = vmatpush1.msra.mxu0 0.0
      %3011 = vmatprep.subr.mxu0 0.0
      %3012 = vmatpush1.msra.mxu0 0.0
      %3013 = vmatprep.subr.mxu0 0.0
      %3014 = vmatpush1.msra.mxu0 0.0
      %3015 = vmatprep.subr.mxu0 0.0
      %3016 = vmatpush1.msra.mxu0 0.0
      %3017 = vmatprep.subr.mxu0 0.0
      %3018 = vmatpush1.msra.mxu0 0.0
      %3019 = vmatprep.mubr.f32.mxu0 0.0
      %3020 = vmatmul.mubr.f32.gmra.mrb[0].mxu0 %v2901
      %v3021 = vpop.f32.mrb[0].mxu0
      %v3022 = vadd.f32 0.0, %v3021
      %v3023 = vpop.f32.mrb[0].mxu0
      %3024 = vmatprep.mubr.f32.mxu0 0.0
      %3025 = vmatmul.mubr.f32.gmra.mrb[0].mxu0 %v2904
      %v3026 = vpop.f32.mrb[0].mxu0
      %v3027 = vadd.f32 0.0, %v3026
      %v3028 = vpop.f32.mrb[0].mxu0
      %3029 = vmatprep.mubr.f32.mxu0 0.0
      %3030 = vmatmul.mubr.f32.gmra.mrb[0].mxu0 %v2907
      %v3031 = vpop.f32.mrb[0].mxu0
      %v3032 = vadd.f32 0.0, %v3031
      %v3033 = vpop.f32.mrb[0].mxu0
      %3034 = vmatprep.mubr.f32.mxu0 0.0
      %3035 = vmatmul.mubr.f32.gmra.mrb[0].mxu0 %v2910
      %v3036 = vpop.f32.mrb[0].mxu0
      %v3037 = vadd.f32 0.0, %v3036
      %v3038 = vpop.f32.mrb[0].mxu0
      %3039 = vmatprep.mubr.f32.mxu0 0.0
      %3040 = vmatmul.mubr.f32.gmra.mrb[0].mxu0 %v2913
      %v3041 = vpop.f32.mrb[0].mxu0
      %v3042 = vadd.f32 0.0, %v3041
      %v3043 = vpop.f32.mrb[0].mxu0
      %3044 = vmatprep.mubr.f32.mxu0 0.0
      %3045 = vmatmul.mubr.f32.gmra.mrb[0].mxu0 %v2916
      %v3046 = vpop.f32.mrb[0].mxu0
      %v3047 = vadd.f32 0.0, %v3046
      %v3048 = vpop.f32.mrb[0].mxu0
      %3049 = vmatprep.mubr.f32.mxu0 0.0
      %3050 = vmatmul.mubr.f32.gmra.mrb[0].mxu0 %v2919
      %v3051 = vpop.f32.mrb[0].mxu0
      %v3052 = vadd.f32 0.0, %v3051
      %v3053 = vpop.f32.mrb[0].mxu0
      %3054 = vmatprep.mubr.f32.mxu0 0.0
      %3055 = vmatmul.mubr.f32.gmra.mrb[0].mxu0 %v2922
      %v3056 = vpop.f32.mrb[0].mxu0
      %v3057 = vadd.f32 0.0, %v3056
      %v3058 = vpop.f32.mrb[0].mxu0
      %3059 = vmatprep.mubr.f32.mxu0 0.0
      %3060 = vmatmul.mubr.f32.gmra.mrb[0].mxu0 %v2925
      %v3061 = vpop.f32.mrb[0].mxu0
      %v3062 = vadd.f32 0.0, %v3061
      %v3063 = vpop.f32.mrb[0].mxu0
      %3064 = vmatprep.mubr.f32.mxu0 0.0
      %3065 = vmatmul.mubr.f32.gmra.mrb[0].mxu0 %v2928
      %v3066 = vpop.f32.mrb[0].mxu0
      %v3067 = vadd.f32 0.0, %v3066
      %v3068 = vpop.f32.mrb[0].mxu0
      %3069 = vmatprep.mubr.f32.mxu0 0.0
      %3070 = vmatmul.mubr.f32.gmra.mrb[0].mxu0 %v2931
      %v3071 = vpop.f32.mrb[0].mxu0
      %v3072 = vadd.f32 0.0, %v3071
      %v3073 = vpop.f32.mrb[0].mxu0
      %3074 = vmatprep.mubr.f32.mxu0 0.0
      %3075 = vmatmul.mubr.f32.gmra.mrb[0].mxu0 %v2934
      %v3076 = vpop.f32.mrb[0].mxu0
      %v3077 = vadd.f32 0.0, %v3076
      %v3078 = vpop.f32.mrb[0].mxu0
      %3079 = vmatprep.mubr.f32.mxu0 0.0
      %3080 = vmatmul.mubr.f32.gmra.mrb[0].mxu0 %v2937
      %v3081 = vpop.f32.mrb[0].mxu0
      %v3082 = vadd.f32 0.0, %v3081
      %v3083 = vpop.f32.mrb[0].mxu0
      %3084 = vmatprep.mubr.f32.mxu0 0.0
      %3085 = vmatmul.mubr.f32.gmra.mrb[0].mxu0 %v2940
      %v3086 = vpop.f32.mrb[0].mxu0
      %v3087 = vadd.f32 0.0, %v3086
      %v3088 = vpop.f32.mrb[0].mxu0
      %3089 = vmatprep.mubr.f32.mxu0 0.0
      %3090 = vmatmul.mubr.f32.gmra.mrb[0].mxu0 %v2943
      %v3091 = vpop.f32.mrb[0].mxu0
      %v3092 = vadd.f32 0.0, %v3091
      %v3093 = vpop.f32.mrb[0].mxu0
      %3094 = vmatprep.mubr.f32.mxu0 0.0
      %3095 = vmatmul.mubr.f32.gmra.mrb[0].mxu0 %v2946
      %v3096 = vpop.f32.mrb[0].mxu0
      %v3097 = vadd.f32 0.0, %v3096
      %v3098 = vpop.f32.mrb[0].mxu0
      %3099 = vmatprep.mubr.f32.mxu0 0.0
      %3100 = vmatmul.mubr.f32.gmra.mrb[0].mxu0 %v2949
      %v3101 = vpop.f32.mrb[0].mxu0
      %v3102 = vadd.f32 0.0, %v3101
      %v3103 = vpop.f32.mrb[0].mxu0
      %3104 = vdwg.mxu0
      %v3105 = vld [vmem:[%s7] sm:$0x1]
      %v3107 = vlaneseq
      %v3108 = vshrl.u32 %v3107, 7
      %v3109 = vsub.s32 0, %v3108
      %v3110 = vrot.slane %v3105, %v3109
      %v3112 = vmul.f32 %v3022, %v3110
      %v3113 = vmul.f32 %v3027, %v3110
      %v3114 = vmul.f32 %v3032, %v3110
      %v3115 = vmul.f32 %v3037, %v3110
      %v3116 = vmul.f32 %v3042, %v3110
      %v3117 = vmul.f32 %v3047, %v3110
      %v3118 = vmul.f32 %v3052, %v3110
      %v3119 = vmul.f32 %v3057, %v3110
      %v3120 = vmul.f32 %v3062, %v3110
      %v3121 = vmul.f32 %v3067, %v3110
      %v3122 = vmul.f32 %v3072, %v3110
      %v3123 = vmul.f32 %v3077, %v3110
      %v3124 = vmul.f32 %v3082, %v3110
      %v3125 = vmul.f32 %v3087, %v3110
      %v3126 = vmul.f32 %v3092, %v3110
      %v3127 = vmul.f32 %v3097, %v3110
      %v3128 = vmul.f32 %v3102, %v3110
      %v3129 = vld [vmem:[%s8] sm:$0x1]
      %v3131 = vlaneseq
      %v3132 = vshrl.u32 %v3131, 7
      %v3133 = vsub.s32 0, %v3132
      %v3134 = vrot.slane %v3129, %v3133
      %v3136 = vadd.f32 %v3112, %v3134
      %v3137 = vadd.f32 %v3113, %v3134
      %v3138 = vadd.f32 %v3114, %v3134
      %v3139 = vadd.f32 %v3115, %v3134
      %v3140 = vadd.f32 %v3116, %v3134
      %v3141 = vadd.f32 %v3117, %v3134
      %v3142 = vadd.f32 %v3118, %v3134
      %v3143 = vadd.f32 %v3119, %v3134
      %v3144 = vadd.f32 %v3120, %v3134
      %v3145 = vadd.f32 %v3121, %v3134
      %v3146 = vadd.f32 %v3122, %v3134
      %v3147 = vadd.f32 %v3123, %v3134
      %v3148 = vadd.f32 %v3124, %v3134
      %v3149 = vadd.f32 %v3125, %v3134
      %v3150 = vadd.f32 %v3126, %v3134
      %v3151 = vadd.f32 %v3127, %v3134
      %v3152 = vadd.f32 %v3128, %v3134
      %v3153 = vmax.f32 %v3136, 0.0
      %v3154 = vmax.f32 %v3137, 0.0
      %v3155 = vmax.f32 %v3138, 0.0
      %v3156 = vmax.f32 %v3139, 0.0
      %v3157 = vmax.f32 %v3140, 0.0
      %v3158 = vmax.f32 %v3141, 0.0
      %v3159 = vmax.f32 %v3142, 0.0
      %v3160 = vmax.f32 %v3143, 0.0
      %v3161 = vmax.f32 %v3144, 0.0
      %v3162 = vmax.f32 %v3145, 0.0
      %v3163 = vmax.f32 %v3146, 0.0
      %v3164 = vmax.f32 %v3147, 0.0
      %v3165 = vmax.f32 %v3148, 0.0
      %v3166 = vmax.f32 %v3149, 0.0
      %v3167 = vmax.f32 %v3150, 0.0
      %v3168 = vmax.f32 %v3151, 0.0
      %v3169 = vmax.f32 %v3152, 0.0
      %v3170 = vld [vmem:[%s9] sm:$0xff]
      %v3171 = vld [vmem:[%s9 + $0x8] sm:$0xff]
      %v3172 = vld [vmem:[%s10] sm:$0x1]
      %v3174 = vlaneseq
      %v3175 = vshrl.u32 %v3174, 7
      %v3176 = vsub.s32 0, %v3175
      %v3177 = vrot.slane %v3172, %v3176
      %v3180 = vsel %vm543, %v3153, 0
      %v3183 = vsel %vm543, %v3154, 0
      %v3186 = vsel %vm543, %v3155, 0
      %v3189 = vsel %vm543, %v3156, 0
      %v3192 = vsel %vm543, %v3157, 0
      %v3195 = vsel %vm543, %v3158, 0
      %v3198 = vsel %vm543, %v3159, 0
      %v3201 = vsel %vm543, %v3160, 0
      %v3204 = vsel %vm543, %v3161, 0
      %v3207 = vsel %vm543, %v3162, 0
      %v3210 = vsel %vm543, %v3163, 0
      %v3213 = vsel %vm543, %v3164, 0
      %v3216 = vsel %vm543, %v3165, 0
      %v3219 = vsel %vm543, %v3166, 0
      %v3222 = vsel %vm543, %v3167, 0
      %v3225 = vsel %vm543, %v3168, 0
      %v3228 = vsel %vm543, %v3169, 0
      %3230 = vmatprep.subr.mxu0 0.0
      %3231 = vmatpush1.msra.mxu0 %v3170
      %3232 = vmatprep.subr.mxu0 0.0
      %3233 = vmatpush1.msra.mxu0 %v3171
      %3234 = vmatprep.subr.mxu0 0.0
      %3235 = vmatpush1.msra.mxu0 0.0
      %3236 = vmatprep.subr.mxu0 0.0
      %3237 = vmatpush1.msra.mxu0 0.0
      %3238 = vmatprep.subr.mxu0 0.0
      %3239 = vmatpush1.msra.mxu0 0.0
      %3240 = vmatprep.subr.mxu0 0.0
      %3241 = vmatpush1.msra.mxu0 0.0
      %3242 = vmatprep.subr.mxu0 0.0
      %3243 = vmatpush1.msra.mxu0 0.0
      %3244 = vmatprep.subr.mxu0 0.0
      %3245 = vmatpush1.msra.mxu0 0.0
      %3246 = vmatprep.subr.mxu0 0.0
      %3247 = vmatpush1.msra.mxu0 0.0
      %3248 = vmatprep.subr.mxu0 0.0
      %3249 = vmatpush1.msra.mxu0 0.0
      %3250 = vmatprep.subr.mxu0 0.0
      %3251 = vmatpush1.msra.mxu0 0.0
      %3252 = vmatprep.subr.mxu0 0.0
      %3253 = vmatpush1.msra.mxu0 0.0
      %3254 = vmatprep.subr.mxu0 0.0
      %3255 = vmatpush1.msra.mxu0 0.0
      %3256 = vmatprep.subr.mxu0 0.0
      %3257 = vmatpush1.msra.mxu0 0.0
      %3258 = vmatprep.subr.mxu0 0.0
      %3259 = vmatpush1.msra.mxu0 0.0
      %3260 = vmatprep.subr.mxu0 0.0
      %3261 = vmatpush1.msra.mxu0 0.0
      %3262 = vmatprep.subr.mxu0 0.0
      %3263 = vmatpush1.msra.mxu0 0.0
      %3264 = vmatprep.subr.mxu0 0.0
      %3265 = vmatpush1.msra.mxu0 0.0
      %3266 = vmatprep.subr.mxu0 0.0
      %3267 = vmatpush1.msra.mxu0 0.0
      %3268 = vmatprep.subr.mxu0 0.0
      %3269 = vmatpush1.msra.mxu0 0.0
      %3270 = vmatprep.subr.mxu0 0.0
      %3271 = vmatpush1.msra.mxu0 0.0
      %3272 = vmatprep.subr.mxu0 0.0
      %3273 = vmatpush1.msra.mxu0 0.0
      %3274 = vmatprep.subr.mxu0 0.0
      %3275 = vmatpush1.msra.mxu0 0.0
      %3276 = vmatprep.subr.mxu0 0.0
      %3277 = vmatpush1.msra.mxu0 0.0
      %3278 = vmatprep.subr.mxu0 0.0
      %3279 = vmatpush1.msra.mxu0 0.0
      %3280 = vmatprep.subr.mxu0 0.0
      %3281 = vmatpush1.msra.mxu0 0.0
      %3282 = vmatprep.subr.mxu0 0.0
      %3283 = vmatpush1.msra.mxu0 0.0
      %3284 = vmatprep.subr.mxu0 0.0
      %3285 = vmatpush1.msra.mxu0 0.0
      %3286 = vmatprep.subr.mxu0 0.0
      %3287 = vmatpush1.msra.mxu0 0.0
      %3288 = vmatprep.subr.mxu0 0.0
      %3289 = vmatpush1.msra.mxu0 0.0
      %3290 = vmatprep.subr.mxu0 0.0
      %3291 = vmatpush1.msra.mxu0 0.0
      %3292 = vmatprep.subr.mxu0 0.0
      %3293 = vmatpush1.msra.mxu0 0.0
      %3294 = vmatprep.mubr.f32.mxu0 0.0
      %3295 = vmatmul.mubr.f32.gmra.mrb[0].mxu0 %v3180
      %v3296 = vpop.f32.mrb[0].mxu0
      %v3297 = vadd.f32 %v3177, %v3296
      %v3298 = vpop.f32.mrb[0].mxu0
      %3299 = vmatprep.mubr.f32.mxu0 0.0
      %3300 = vmatmul.mubr.f32.gmra.mrb[0].mxu0 %v3183
      %v3301 = vpop.f32.mrb[0].mxu0
      %v3302 = vadd.f32 %v3177, %v3301
      %v3303 = vpop.f32.mrb[0].mxu0
      %3304 = vmatprep.mubr.f32.mxu0 0.0
      %3305 = vmatmul.mubr.f32.gmra.mrb[0].mxu0 %v3186
      %v3306 = vpop.f32.mrb[0].mxu0
      %v3307 = vadd.f32 %v3177, %v3306
      %v3308 = vpop.f32.mrb[0].mxu0
      %3309 = vmatprep.mubr.f32.mxu0 0.0
      %3310 = vmatmul.mubr.f32.gmra.mrb[0].mxu0 %v3189
      %v3311 = vpop.f32.mrb[0].mxu0
      %v3312 = vadd.f32 %v3177, %v3311
      %v3313 = vpop.f32.mrb[0].mxu0
      %3314 = vmatprep.mubr.f32.mxu0 0.0
      %3315 = vmatmul.mubr.f32.gmra.mrb[0].mxu0 %v3192
      %v3316 = vpop.f32.mrb[0].mxu0
      %v3317 = vadd.f32 %v3177, %v3316
      %v3318 = vpop.f32.mrb[0].mxu0
      %3319 = vmatprep.mubr.f32.mxu0 0.0
      %3320 = vmatmul.mubr.f32.gmra.mrb[0].mxu0 %v3195
      %v3321 = vpop.f32.mrb[0].mxu0
      %v3322 = vadd.f32 %v3177, %v3321
      %v3323 = vpop.f32.mrb[0].mxu0
      %3324 = vmatprep.mubr.f32.mxu0 0.0
      %3325 = vmatmul.mubr.f32.gmra.mrb[0].mxu0 %v3198
      %v3326 = vpop.f32.mrb[0].mxu0
      %v3327 = vadd.f32 %v3177, %v3326
      %v3328 = vpop.f32.mrb[0].mxu0
      %3329 = vmatprep.mubr.f32.mxu0 0.0
      %3330 = vmatmul.mubr.f32.gmra.mrb[0].mxu0 %v3201
      %v3331 = vpop.f32.mrb[0].mxu0
      %v3332 = vadd.f32 %v3177, %v3331
      %v3333 = vpop.f32.mrb[0].mxu0
      %3334 = vmatprep.mubr.f32.mxu0 0.0
      %3335 = vmatmul.mubr.f32.gmra.mrb[0].mxu0 %v3204
      %v3336 = vpop.f32.mrb[0].mxu0
      %v3337 = vadd.f32 %v3177, %v3336
      %v3338 = vpop.f32.mrb[0].mxu0
      %3339 = vmatprep.mubr.f32.mxu0 0.0
      %3340 = vmatmul.mubr.f32.gmra.mrb[0].mxu0 %v3207
      %v3341 = vpop.f32.mrb[0].mxu0
      %v3342 = vadd.f32 %v3177, %v3341
      %v3343 = vpop.f32.mrb[0].mxu0
      %3344 = vmatprep.mubr.f32.mxu0 0.0
      %3345 = vmatmul.mubr.f32.gmra.mrb[0].mxu0 %v3210
      %v3346 = vpop.f32.mrb[0].mxu0
      %v3347 = vadd.f32 %v3177, %v3346
      %v3348 = vpop.f32.mrb[0].mxu0
      %3349 = vmatprep.mubr.f32.mxu0 0.0
      %3350 = vmatmul.mubr.f32.gmra.mrb[0].mxu0 %v3213
      %v3351 = vpop.f32.mrb[0].mxu0
      %v3352 = vadd.f32 %v3177, %v3351
      %v3353 = vpop.f32.mrb[0].mxu0
      %3354 = vmatprep.mubr.f32.mxu0 0.0
      %3355 = vmatmul.mubr.f32.gmra.mrb[0].mxu0 %v3216
      %v3356 = vpop.f32.mrb[0].mxu0
      %v3357 = vadd.f32 %v3177, %v3356
      %v3358 = vpop.f32.mrb[0].mxu0
      %3359 = vmatprep.mubr.f32.mxu0 0.0
      %3360 = vmatmul.mubr.f32.gmra.mrb[0].mxu0 %v3219
      %v3361 = vpop.f32.mrb[0].mxu0
      %v3362 = vadd.f32 %v3177, %v3361
      %v3363 = vpop.f32.mrb[0].mxu0
      %3364 = vmatprep.mubr.f32.mxu0 0.0
      %3365 = vmatmul.mubr.f32.gmra.mrb[0].mxu0 %v3222
      %v3366 = vpop.f32.mrb[0].mxu0
      %v3367 = vadd.f32 %v3177, %v3366
      %v3368 = vpop.f32.mrb[0].mxu0
      %3369 = vmatprep.mubr.f32.mxu0 0.0
      %3370 = vmatmul.mubr.f32.gmra.mrb[0].mxu0 %v3225
      %v3371 = vpop.f32.mrb[0].mxu0
      %v3372 = vadd.f32 %v3177, %v3371
      %v3373 = vpop.f32.mrb[0].mxu0
      %3374 = vmatprep.mubr.f32.mxu0 0.0
      %3375 = vmatmul.mubr.f32.gmra.mrb[0].mxu0 %v3228
      %v3376 = vpop.f32.mrb[0].mxu0
      %v3377 = vadd.f32 %v3177, %v3376
      %v3378 = vpop.f32.mrb[0].mxu0
      %3379 = vdwg.mxu0
      %v3380 = vsub.f32 0.0, %v3297
      %v3381 = vsub.f32 0.0, %v3302
      %v3382 = vsub.f32 0.0, %v3307
      %v3383 = vsub.f32 0.0, %v3312
      %v3384 = vsub.f32 0.0, %v3317
      %v3385 = vsub.f32 0.0, %v3322
      %v3386 = vsub.f32 0.0, %v3327
      %v3387 = vsub.f32 0.0, %v3332
      %v3388 = vsub.f32 0.0, %v3337
      %v3389 = vsub.f32 0.0, %v3342
      %v3390 = vsub.f32 0.0, %v3347
      %v3391 = vsub.f32 0.0, %v3352
      %v3392 = vsub.f32 0.0, %v3357
      %v3393 = vsub.f32 0.0, %v3362
      %v3394 = vsub.f32 0.0, %v3367
      %v3395 = vsub.f32 0.0, %v3372
      %v3396 = vsub.f32 0.0, %v3377
      %v3397 = vmul.f32 %v3380, 1.442695
      %v3398 = vpow.pop %v3397
      %v3399 = vmul.f32 %v3381, 1.442695
      %v3400 = vpow.pop %v3399
      %v3401 = vmul.f32 %v3382, 1.442695
      %v3402 = vpow.pop %v3401
      %v3403 = vmul.f32 %v3383, 1.442695
      %v3404 = vpow.pop %v3403
      %v3405 = vmul.f32 %v3384, 1.442695
      %v3406 = vpow.pop %v3405
      %v3407 = vmul.f32 %v3385, 1.442695
      %v3408 = vpow.pop %v3407
      %v3409 = vmul.f32 %v3386, 1.442695
      %v3410 = vpow.pop %v3409
      %v3411 = vmul.f32 %v3387, 1.442695
      %v3412 = vpow.pop %v3411
      %v3413 = vmul.f32 %v3388, 1.442695
      %v3414 = vpow.pop %v3413
      %v3415 = vmul.f32 %v3389, 1.442695
      %v3416 = vpow.pop %v3415
      %v3417 = vmul.f32 %v3390, 1.442695
      %v3418 = vpow.pop %v3417
      %v3419 = vmul.f32 %v3391, 1.442695
      %v3420 = vpow.pop %v3419
      %v3421 = vmul.f32 %v3392, 1.442695
      %v3422 = vpow.pop %v3421
      %v3423 = vmul.f32 %v3393, 1.442695
      %v3424 = vpow.pop %v3423
      %v3425 = vmul.f32 %v3394, 1.442695
      %v3426 = vpow.pop %v3425
      %v3427 = vmul.f32 %v3395, 1.442695
      %v3428 = vpow.pop %v3427
      %v3429 = vmul.f32 %v3396, 1.442695
      %v3430 = vpow.pop %v3429
      %v3431 = vadd.f32 %v3398, 1.0
      %v3432 = vadd.f32 %v3400, 1.0
      %v3433 = vadd.f32 %v3402, 1.0
      %v3434 = vadd.f32 %v3404, 1.0
      %v3435 = vadd.f32 %v3406, 1.0
      %v3436 = vadd.f32 %v3408, 1.0
      %v3437 = vadd.f32 %v3410, 1.0
      %v3438 = vadd.f32 %v3412, 1.0
      %v3439 = vadd.f32 %v3414, 1.0
      %v3440 = vadd.f32 %v3416, 1.0
      %v3441 = vadd.f32 %v3418, 1.0
      %v3442 = vadd.f32 %v3420, 1.0
      %v3443 = vadd.f32 %v3422, 1.0
      %v3444 = vadd.f32 %v3424, 1.0
      %v3445 = vadd.f32 %v3426, 1.0
      %v3446 = vadd.f32 %v3428, 1.0
      %v3447 = vadd.f32 %v3430, 1.0
      %v3448 = vrcp.pop %v3431
      %v3449 = vmul.f32 1.0, %v3448
      %v3450 = vrcp.pop %v3432
      %v3451 = vmul.f32 1.0, %v3450
      %v3452 = vrcp.pop %v3433
      %v3453 = vmul.f32 1.0, %v3452
      %v3454 = vrcp.pop %v3434
      %v3455 = vmul.f32 1.0, %v3454
      %v3456 = vrcp.pop %v3435
      %v3457 = vmul.f32 1.0, %v3456
      %v3458 = vrcp.pop %v3436
      %v3459 = vmul.f32 1.0, %v3458
      %v3460 = vrcp.pop %v3437
      %v3461 = vmul.f32 1.0, %v3460
      %v3462 = vrcp.pop %v3438
      %v3463 = vmul.f32 1.0, %v3462
      %v3464 = vrcp.pop %v3439
      %v3465 = vmul.f32 1.0, %v3464
      %v3466 = vrcp.pop %v3440
      %v3467 = vmul.f32 1.0, %v3466
      %v3468 = vrcp.pop %v3441
      %v3469 = vmul.f32 1.0, %v3468
      %v3470 = vrcp.pop %v3442
      %v3471 = vmul.f32 1.0, %v3470
      %v3472 = vrcp.pop %v3443
      %v3473 = vmul.f32 1.0, %v3472
      %v3474 = vrcp.pop %v3444
      %v3475 = vmul.f32 1.0, %v3474
      %v3476 = vrcp.pop %v3445
      %v3477 = vmul.f32 1.0, %v3476
      %v3478 = vrcp.pop %v3446
      %v3479 = vmul.f32 1.0, %v3478
      %v3480 = vrcp.pop %v3447
      %v3481 = vmul.f32 1.0, %v3480
      %3482 = vst.msk [vmem:[%s538] sm:$0xff] %vm543, %v3449
      %3483 = vst.msk [vmem:[%s538 + $0x8] sm:$0xff] %vm543, %v3451
      %3484 = vst.msk [vmem:[%s538 + $0x10] sm:$0xff] %vm543, %v3453
      %3485 = vst.msk [vmem:[%s538 + $0x18] sm:$0xff] %vm543, %v3455
      %3486 = vst.msk [vmem:[%s538 + $0x20] sm:$0xff] %vm543, %v3457
      %3487 = vst.msk [vmem:[%s538 + $0x28] sm:$0xff] %vm543, %v3459
      %3488 = vst.msk [vmem:[%s538 + $0x30] sm:$0xff] %vm543, %v3461
      %3489 = vst.msk [vmem:[%s538 + $0x38] sm:$0xff] %vm543, %v3463
      %3490 = vst.msk [vmem:[%s538 + $0x40] sm:$0xff] %vm543, %v3465
      %3491 = vst.msk [vmem:[%s538 + $0x48] sm:$0xff] %vm543, %v3467
      %3492 = vst.msk [vmem:[%s538 + $0x50] sm:$0xff] %vm543, %v3469
      %3493 = vst.msk [vmem:[%s538 + $0x58] sm:$0xff] %vm543, %v3471
      %3494 = vst.msk [vmem:[%s538 + $0x60] sm:$0xff] %vm543, %v3473
      %3495 = vst.msk [vmem:[%s538 + $0x68] sm:$0xff] %vm543, %v3475
      %3496 = vst.msk [vmem:[%s538 + $0x70] sm:$0xff] %vm543, %v3477
      %3497 = vst.msk [vmem:[%s538 + $0x78] sm:$0xff] %vm543, %v3479
      %3498 = vst.msk [vmem:[%s538 + $0x80] sm:$0xff] %vm543, %v3481
      %s3499 = smul.u32 17, %s27
      %p3500 = scmp.lt.s32.totalorder %s26, 1
      %s3501 = scalar_select %p3500, %s26, 1
      %p3502 = scmp.lt.s32.totalorder %s3499, 33
      %s3503 = scalar_select %p3502, %s3499, 33
      %s3504 = smul.addr %s3501, 34
      %s3505 = sadd.s32 %s3503, %s3504
      %s3506 = smul.addr %s3505, 8
      %s3507 = scalar_lea.vmem %s11, %s3506
      // Predicated region
      $region65: #{db_head_forward.1} parent=63 // pred_check
        %p3508 = pneg %p318
      $region66: #{db_head_forward.1} parent=63 // pred_check_branch
        %3510 = sbr.rel (%p3508) target = $region68
      $region67: #{db_head_forward.1} parent=63 // pred_region
        %s3511 = smul.u32 17, %s27
      $region68: #{db_head_forward.1} parent=63 // pred_fallthru
        _
    $region64: #{db_head_forward.1} parent=5 // pred_fallthru
      _
    %p3512 = scmp.le.s32.totalorder 2, %s17
    // Predicated region
    $region69: #{db_head_forward.1} parent=5 // pred_check
      %p3513 = pneg %p3512
    $region70: #{db_head_forward.1} parent=5 // pred_check_branch
      %3515 = sbr.rel (%p3513) target = $region72
    $region71: #{db_head_forward.1} parent=5 // pred_region
      %s3516 = ssub.s32 %s17, 2
      // Predicated region
      $region73: #{db_head_forward.1} parent=71 // pred_check
        %p3517 = pneg %p324
      $region74: #{db_head_forward.1} parent=71 // pred_check_branch
        %3519 = sbr.rel (%p3517) target = $region76
      $region75: #{db_head_forward.1} parent=71 // pred_region
        %s3520 = smul.u32 17, %s29
        %p3521 = scmp.lt.s32.totalorder %s28, 1
        %s3522 = scalar_select %p3521, %s28, 1
        %p3523 = scmp.lt.s32.totalorder %s3520, 33
        %s3524 = scalar_select %p3523, %s3520, 33
        %s3525 = smul.addr %s3522, 34
        %s3526 = sadd.s32 %s3524, %s3525
        %s3527 = smul.addr %s3526, 8
        %s3528 = scalar_lea.vmem %s11, %s3527
      $region76: #{db_head_forward.1} parent=71 // pred_fallthru
        _
    $region72: #{db_head_forward.1} parent=5 // pred_fallthru
      _
  $region6: #{db_head_forward.1} parent=0 // loop_footer
    %s21 = sadd.s32 1, %s17
  $region7: #{db_head_forward.1} parent=0 // loop_footer_branch
    %16 = sbr.rel target = $region3
  $region8: #{db_head_forward.1} parent=0 // loop_exit
    _

</llo_original>
